<compile_context>
chip_gen: v7x
topology: tpu7x:2x2x1
jax: 0.10.0
libtpu: 0.0.40
codegen_flags: <defaults>
</compile_context>

<pallas_src>
import functools

import jax
import jax.numpy as jnp
import numpy as np
from jax import lax
from jax.experimental import pallas as pl
from jax.experimental.pallas import tpu as pltpu

BN_EPS = 1e-5


# ----------------------------------------------------------------------------
# Fused Block kernel (one batch element per grid step)
# ----------------------------------------------------------------------------
def _block_kernel(*refs, H, W, steps, has_skip, stride):
    """refs layout (matching the wrapper):
         x_ref,
         per step: (dw(9,Cin), pw(Cin,Cout), scale(1,Cout), shift(1,Cout)),
         [skip: w(C0,planes), scale(1,planes), shift(1,planes)],
         [sel:  (Hs*Ws, H*W) one-hot stride-subsample matrix],
         o_ref,
         per step: padded VMEM scratch (H+2d, W+2d, Cin).
    """
    n_steps = len(steps)
    it = iter(refs)
    x_ref = next(it)
    step_refs = [tuple(next(it) for _ in range(4)) for _ in range(n_steps)]
    skip_refs = tuple(next(it) for _ in range(3)) if has_skip else None
    sel_ref = next(it) if stride != 1 else None
    o_ref = next(it)
    pad_refs = [next(it) for _ in range(n_steps)]

    x = x_ref[...].astype(jnp.float32)              # (H, W, C0) NHWC
    cur = x

    for i, st in enumerate(steps):
        dw_ref, pw_ref, sc_ref, sh_ref = step_refs[i]
        d, s, cin, cout = st['dil'], st['stride'], st['cin'], st['cout']
        pad_ref = pad_refs[i]

        v = jnp.maximum(cur, 0.0) if st['relu'] else cur

        # 3x3 halo lives in a zero-padded VMEM scratch (no HBM-side jnp.pad).
        pad_ref[...] = jnp.zeros(pad_ref.shape, jnp.float32)
        pad_ref[d:d + H, d:d + W, :] = v

        # Depthwise 3x3: 9 shifted taps, per-channel weights on the lane dim.
        dwv = dw_ref[...].astype(jnp.float32)        # (9, cin), hoisted once
        acc = None
        for kh in range(3):
            for kw in range(3):
                tap = pad_ref[kh * d:kh * d + H, kw * d:kw * d + W, :]
                w_k = dwv[3 * kh + kw:3 * kh + kw + 1, :].reshape(1, 1, cin)
                term = tap * w_k
                acc = term if acc is None else acc + term

        acc2d = acc.reshape(H * W, cin)              # W % 8 == 0 -> free reshape

        if s != 1:
            # Depthwise stride: subsample BEFORE the pointwise (they commute),
            # so both the matmul and the HBM store are at the strided size.
            acc2d = jnp.dot(sel_ref[...], acc2d,
                            preferred_element_type=jnp.float32)

        # Pointwise 1x1 on the MXU, f32 accumulation.
        y2d = jnp.dot(acc2d, pw_ref[...].astype(jnp.float32),
                      preferred_element_type=jnp.float32)
        if st['bn']:
            # BatchNorm (eval) folded to per-channel scale/shift.
            y2d = y2d * sc_ref[...] + sh_ref[...]

        Ho = (H - 1) // s + 1
        Wo = (W - 1) // s + 1
        cur = y2d.reshape(Ho, Wo, cout)

    # Skip / residual path fused into the same kernel (single HBM store).
    if has_skip:
        w_ref, ssc_ref, ssh_ref = skip_refs
        x2d = x.reshape(H * W, x.shape[-1])
        if stride != 1:
            x2d = jnp.dot(sel_ref[...], x2d, preferred_element_type=jnp.float32)
        sk2d = jnp.dot(x2d, w_ref[...].astype(jnp.float32),
                       preferred_element_type=jnp.float32)
        sk2d = sk2d * ssc_ref[...] + ssh_ref[...]
        out = cur + sk2d.reshape(cur.shape)
    else:
        out = cur + x

    o_ref[...] = out.astype(o_ref.dtype)


def _stride_select_matrix(H, W, s):
    """One-hot (Hs*Ws, H*W) matrix selecting rows (s*i, s*j) of the flattened
    full-resolution map.  Exact stride-s subsampling via a tiny MXU matmul."""
    Hs, Ws = (H - 1) // s + 1, (W - 1) // s + 1
    o = np.arange(Hs * Ws)
    rows = s * (o // Ws) * W + s * (o % Ws)
    sel = np.zeros((Hs * Ws, H * W), np.float32)
    sel[o, rows] = 1.0
    return jnp.asarray(sel)


# ----------------------------------------------------------------------------
# Wrapper: one pallas_call for the whole Block
# ----------------------------------------------------------------------------
def block_forward(x_nchw, steps, params, stride):
    N, C0, H, W = x_nchw.shape
    assert all(st['stride'] == 1 for st in steps[:-1]), \
        "only the final step may be strided"
    x = jnp.transpose(x_nchw, (0, 2, 3, 1))          # NCHW -> NHWC (C on lanes)

    planes = steps[-1]['cout']
    s_last = steps[-1]['stride']
    Hs = (H - 1) // s_last + 1
    Ws = (W - 1) // s_last + 1
    has_skip = params['skip'] is not None
    has_stride = s_last != 1

    inputs = [x]
    in_specs = [pl.BlockSpec((None, H, W, C0), lambda n: (n, 0, 0, 0))]
    for st, p in zip(steps, params['steps']):
        cin, cout = st['cin'], st['cout']
        inputs += [p['dw'].reshape(9, cin), p['pw'], p['scale'], p['shift']]
        in_specs += [pl.BlockSpec((9, cin), lambda n: (0, 0)),
                     pl.BlockSpec((cin, cout), lambda n: (0, 0)),
                     pl.BlockSpec((1, cout), lambda n: (0, 0)),
                     pl.BlockSpec((1, cout), lambda n: (0, 0))]
    if has_skip:
        sk = params['skip']
        inputs += [sk['w'], sk['scale'], sk['shift']]
        in_specs += [pl.BlockSpec((C0, planes), lambda n: (0, 0)),
                     pl.BlockSpec((1, planes), lambda n: (0, 0)),
                     pl.BlockSpec((1, planes), lambda n: (0, 0))]
    if has_stride:
        inputs.append(_stride_select_matrix(H, W, s_last))
        in_specs.append(pl.BlockSpec((Hs * Ws, H * W), lambda n: (0, 0)))

    scratch_shapes = [
        pltpu.VMEM((H + 2 * st['dil'], W + 2 * st['dil'], st['cin']), jnp.float32)
        for st in steps
    ]

    kern = functools.partial(_block_kernel, H=H, W=W, steps=tuple(steps),
                             has_skip=has_skip, stride=s_last)

    out = pl.pallas_call(
        kern,
        out_shape=jax.ShapeDtypeStruct((N, Hs, Ws, planes), x.dtype),
        grid=(N,),
        in_specs=in_specs,
        out_specs=pl.BlockSpec((None, Hs, Ws, planes), lambda n: (n, 0, 0, 0)),
        scratch_shapes=scratch_shapes,
        compiler_params=pltpu.CompilerParams(
            dimension_semantics=("parallel",),
            # headroom-safe on v7x's 64 MiB VMEM, plenty for these tiles.
            vmem_limit_bytes=48 * 1024 * 1024),
    )(*inputs)
    return jnp.transpose(out, (0, 3, 1, 2))          # back to NCHW


# ----------------------------------------------------------------------------
# Block structure & params (mirrors the PyTorch module)
# ----------------------------------------------------------------------------
def build_block_steps(inplanes, planes, reps, stride=1, dilation=1,
                      start_with_relu=True, grow_first=True, is_last=False):
    steps = []
    filters = inplanes
    if grow_first:
        steps.append(dict(relu=True, cin=inplanes, cout=planes, dil=dilation,
                          stride=1, bn=True))
        filters = planes
    for _ in range(reps - 1):
        steps.append(dict(relu=True, cin=filters, cout=filters, dil=dilation,
                          stride=1, bn=True))
    if not grow_first:
        steps.append(dict(relu=True, cin=inplanes, cout=planes, dil=dilation,
                          stride=1, bn=True))
    if not start_with_relu and steps:
        steps[0] = dict(steps[0], relu=False)
    if stride != 1:
        steps.append(dict(relu=False, cin=planes, cout=planes, dil=1,
                          stride=2, bn=False))
    if stride == 1 and is_last:
        steps.append(dict(relu=False, cin=planes, cout=planes, dil=1,
                          stride=1, bn=False))
    return steps


def init_block_params(key, inplanes, planes, steps, stride):
    step_params = []
    for st in steps:
        key, kdw, kpw, kg, kb, km, kv = jax.random.split(key, 7)
        cin, cout = st['cin'], st['cout']
        p = dict(
            dw=0.3 * jax.random.normal(kdw, (3, 3, cin), jnp.float32),
            pw=jax.random.normal(kpw, (cin, cout), jnp.float32) / np.sqrt(cin),
        )
        if st['bn']:
            gamma = jax.random.uniform(kg, (cout,), jnp.float32, minval=0.5, maxval=1.5)
            beta = 0.1 * jax.random.normal(kb, (cout,), jnp.float32)
            mean = 0.1 * jax.random.normal(km, (cout,), jnp.float32)
            var = jax.random.uniform(kv, (cout,), jnp.float32, minval=0.5, maxval=1.5)
            scale = gamma / jnp.sqrt(var + BN_EPS)
            shift = beta - mean * scale
            p.update(gamma=gamma, beta=beta, mean=mean, var=var,
                     scale=scale.reshape(1, cout), shift=shift.reshape(1, cout))
        else:
            p.update(scale=jnp.ones((1, cout), jnp.float32),
                     shift=jnp.zeros((1, cout), jnp.float32))
        step_params.append(p)

    params = dict(steps=step_params, skip=None)
    if planes != inplanes or stride != 1:
        key, kw, kg, kb, km, kv = jax.random.split(key, 6)
        gamma = jax.random.uniform(kg, (planes,), jnp.float32, minval=0.5, maxval=1.5)
        beta = 0.1 * jax.random.normal(kb, (planes,), jnp.float32)
        mean = 0.1 * jax.random.normal(km, (planes,), jnp.float32)
        var = jax.random.uniform(kv, (planes,), jnp.float32, minval=0.5, maxval=1.5)
        scale = gamma / jnp.sqrt(var + BN_EPS)
        shift = beta - mean * scale
        params['skip'] = dict(
            w=jax.random.normal(kw, (inplanes, planes), jnp.float32) / np.sqrt(inplanes),
            gamma=gamma, beta=beta, mean=mean, var=var,
            scale=scale.reshape(1, planes), shift=shift.reshape(1, planes))
    return params


# ----------------------------------------------------------------------------
# Pure-JAX (lax) reference for correctness checking
# ----------------------------------------------------------------------------
def _bn_eval_nchw(x, gamma, beta, mean, var):
    inv = gamma / jnp.sqrt(var + BN_EPS)
    return x * inv[None, :, None, None] + (beta - mean * inv)[None, :, None, None]


def ref_block_forward(x_nchw, steps, params, stride):
    prec = lax.Precision.HIGHEST
    x = x_nchw
    for st, p in zip(steps, params['steps']):
        if st['relu']:
            x = jnp.maximum(x, 0.0)
        dw = jnp.transpose(p['dw'], (2, 0, 1))[:, None, :, :]          # (Cin,1,3,3)
        pad = st['dil']
        x = lax.conv_general_dilated(
            x, dw, (st['stride'], st['stride']), ((pad, pad), (pad, pad)),
            rhs_dilation=(st['dil'], st['dil']),
            dimension_numbers=('NCHW', 'OIHW', 'NCHW'),
            feature_group_count=st['cin'], precision=prec)
        pw = jnp.transpose(p['pw'], (1, 0))[:, :, None, None]          # (Cout,Cin,1,1)
        x = lax.conv_general_dilated(
            x, pw, (1, 1), ((0, 0), (0, 0)),
            dimension_numbers=('NCHW', 'OIHW', 'NCHW'), precision=prec)
        if st['bn']:
            x = _bn_eval_nchw(x, p['gamma'], p['beta'], p['mean'], p['var'])
    if params['skip'] is not None:
        sk = params['skip']
        w = jnp.transpose(sk['w'], (1, 0))[:, :, None, None]
        s = lax.conv_general_dilated(
            x_nchw, w, (stride, stride), ((0, 0), (0, 0)),
            dimension_numbers=('NCHW', 'OIHW', 'NCHW'), precision=prec)
        s = _bn_eval_nchw(s, sk['gamma'], sk['beta'], sk['mean'], sk['var'])
    else:
        s = x_nchw
    return x + s


# ----------------------------------------------------------------------------
if __name__ == "__main__":
    N, H, W = 2, 16, 16
    configs = [
        # Block(4, 8, reps=2, stride=2): projection skip + stride-2 tail step.
        dict(inplanes=4, planes=8, reps=2, stride=2, dilation=1,
             start_with_relu=True, grow_first=True, is_last=False),
        # Block(4, 4, reps=2, stride=1, dilation=2, is_last=True): identity skip.
        dict(inplanes=4, planes=4, reps=2, stride=1, dilation=2,
             start_with_relu=False, grow_first=True, is_last=True),
    ]

    key = jax.random.PRNGKey(0)
    for cfg in configs:
        key, xkey, pkey = jax.random.split(key, 3)
        x = jax.random.normal(xkey, (N, cfg['inplanes'], H, W), jnp.float32)
        steps = build_block_steps(cfg['inplanes'], cfg['planes'], cfg['reps'],
                                  stride=cfg['stride'], dilation=cfg['dilation'],
                                  start_with_relu=cfg['start_with_relu'],
                                  grow_first=cfg['grow_first'],
                                  is_last=cfg['is_last'])
        params = init_block_params(pkey, cfg['inplanes'], cfg['planes'], steps,
                                   cfg['stride'])

        out = jax.block_until_ready(block_forward(x, steps, params, cfg['stride']))
        ref = ref_block_forward(x, steps, params, cfg['stride'])

        s_last = steps[-1]['stride']
        Hs, Ws = (H - 1) // s_last + 1, (W - 1) // s_last + 1
        assert out.shape == (N, cfg['planes'], Hs, Ws), out.shape
        # Typical error is ~1e-5; the loose bound only guards MXU f32
        # multi-pass rounding vs. the HIGHEST-precision XLA reference.
        np.testing.assert_allclose(np.asarray(out), np.asarray(ref),
                                   rtol=2e-2, atol=2e-2)

    print("KERNEL_OK")
</pallas_src>

<mosaic_0001>
module attributes {stable_mosaic.version = 11 : i64} {
  func.func @_block_kernel(%arg0: i32, %arg1: memref<1x16x16x4xf32, #tpu.memory_space<vmem>>, %arg2: memref<9x4xf32, #tpu.memory_space<vmem>>, %arg3: memref<4x8xf32, #tpu.memory_space<vmem>>, %arg4: memref<1x8xf32, #tpu.memory_space<vmem>>, %arg5: memref<1x8xf32, #tpu.memory_space<vmem>>, %arg6: memref<9x8xf32, #tpu.memory_space<vmem>>, %arg7: memref<8x8xf32, #tpu.memory_space<vmem>>, %arg8: memref<1x8xf32, #tpu.memory_space<vmem>>, %arg9: memref<1x8xf32, #tpu.memory_space<vmem>>, %arg10: memref<9x8xf32, #tpu.memory_space<vmem>>, %arg11: memref<8x8xf32, #tpu.memory_space<vmem>>, %arg12: memref<1x8xf32, #tpu.memory_space<vmem>>, %arg13: memref<1x8xf32, #tpu.memory_space<vmem>>, %arg14: memref<4x8xf32, #tpu.memory_space<vmem>>, %arg15: memref<1x8xf32, #tpu.memory_space<vmem>>, %arg16: memref<1x8xf32, #tpu.memory_space<vmem>>, %arg17: memref<64x256xf32, #tpu.memory_space<vmem>>, %arg18: memref<1x8x8x8xf32, #tpu.memory_space<vmem>>, %arg19: memref<18x18x4xf32, #tpu.memory_space<vmem>>, %arg20: memref<18x18x8xf32, #tpu.memory_space<vmem>>, %arg21: memref<18x18x8xf32, #tpu.memory_space<vmem>>) attributes {dimension_semantics = [#tpu.dimension_semantics<parallel>], iteration_bounds = array<i64: 2>, scalar_prefetch = 0 : i64, scratch_operands = 3 : i64, tpu.core_type = #tpu.core_type<tc>, window_params = [{transform_indices = @transform_0, window_bounds = array<i64: 1, 16, 16, 4>}, {pipeline_mode = #tpu.pipeline_mode<synchronous>, transform_indices = @transform_1, window_bounds = array<i64: 9, 4>}, {pipeline_mode = #tpu.pipeline_mode<synchronous>, transform_indices = @transform_2, window_bounds = array<i64: 4, 8>}, {pipeline_mode = #tpu.pipeline_mode<synchronous>, transform_indices = @transform_3, window_bounds = array<i64: 1, 8>}, {pipeline_mode = #tpu.pipeline_mode<synchronous>, transform_indices = @transform_4, window_bounds = array<i64: 1, 8>}, {pipeline_mode = #tpu.pipeline_mode<synchronous>, transform_indices = @transform_5, window_bounds = array<i64: 9, 8>}, {pipeline_mode = #tpu.pipeline_mode<synchronous>, transform_indices = @transform_6, window_bounds = array<i64: 8, 8>}, {pipeline_mode = #tpu.pipeline_mode<synchronous>, transform_indices = @transform_7, window_bounds = array<i64: 1, 8>}, {pipeline_mode = #tpu.pipeline_mode<synchronous>, transform_indices = @transform_8, window_bounds = array<i64: 1, 8>}, {pipeline_mode = #tpu.pipeline_mode<synchronous>, transform_indices = @transform_9, window_bounds = array<i64: 9, 8>}, {pipeline_mode = #tpu.pipeline_mode<synchronous>, transform_indices = @transform_10, window_bounds = array<i64: 8, 8>}, {pipeline_mode = #tpu.pipeline_mode<synchronous>, transform_indices = @transform_11, window_bounds = array<i64: 1, 8>}, {pipeline_mode = #tpu.pipeline_mode<synchronous>, transform_indices = @transform_12, window_bounds = array<i64: 1, 8>}, {pipeline_mode = #tpu.pipeline_mode<synchronous>, transform_indices = @transform_13, window_bounds = array<i64: 4, 8>}, {pipeline_mode = #tpu.pipeline_mode<synchronous>, transform_indices = @transform_14, window_bounds = array<i64: 1, 8>}, {pipeline_mode = #tpu.pipeline_mode<synchronous>, transform_indices = @transform_15, window_bounds = array<i64: 1, 8>}, {pipeline_mode = #tpu.pipeline_mode<synchronous>, transform_indices = @transform_16, window_bounds = array<i64: 64, 256>}, {transform_indices = @transform_17, window_bounds = array<i64: 1, 8, 8, 8>}]} {
    %c0 = arith.constant 0 : index
    %c0_0 = arith.constant 0 : index
    %c0_1 = arith.constant 0 : index
    %c0_2 = arith.constant 0 : index
    %0 = vector.load %arg1[%c0, %c0_0, %c0_1, %c0_2] : memref<1x16x16x4xf32, #tpu.memory_space<vmem>>, vector<1x16x16x4xf32>
    %1 = vector.shape_cast %0 : vector<1x16x16x4xf32> to vector<16x16x4xf32>
    %cst = arith.constant 0.000000e+00 : f32
    %2 = vector.broadcast %cst : f32 to vector<16x16x4xf32>
    %3 = arith.maximumf %1, %2 : vector<16x16x4xf32>
    %cst_3 = arith.constant 0.000000e+00 : f32
    %4 = vector.broadcast %cst_3 : f32 to vector<18x18x4xf32>
    %c0_4 = arith.constant 0 : index
    %c0_5 = arith.constant 0 : index
    %c0_6 = arith.constant 0 : index
    %5 = vector.load %arg19[%c0_4, %c0_5, %c0_6] : memref<18x18x4xf32, #tpu.memory_space<vmem>>, vector<18x18x4xf32>
    tpu.vector_store %arg19[%c0_4, %c0_5, %c0_6], %4 {strides = array<i32>} : memref<18x18x4xf32, #tpu.memory_space<vmem>>, vector<18x18x4xf32>,
    %c1 = arith.constant 1 : index
    %c1_7 = arith.constant 1 : index
    %c0_8 = arith.constant 0 : index
    %6 = vector.load %arg19[%c1, %c1_7, %c0_8] : memref<18x18x4xf32, #tpu.memory_space<vmem>>, vector<16x16x4xf32>
    tpu.vector_store %arg19[%c1, %c1_7, %c0_8], %3 {strides = array<i32>} : memref<18x18x4xf32, #tpu.memory_space<vmem>>, vector<16x16x4xf32>,
    %c0_9 = arith.constant 0 : index
    %c0_10 = arith.constant 0 : index
    %7 = vector.load %arg2[%c0_9, %c0_10] : memref<9x4xf32, #tpu.memory_space<vmem>>, vector<9x4xf32>
    %c0_11 = arith.constant 0 : index
    %c0_12 = arith.constant 0 : index
    %c0_13 = arith.constant 0 : index
    %8 = vector.load %arg19[%c0_11, %c0_12, %c0_13] : memref<18x18x4xf32, #tpu.memory_space<vmem>>, vector<16x16x4xf32>
    %9 = vector.extract_strided_slice %7 {offsets = [0, 0], sizes = [1, 4], strides = [1, 1]} : vector<9x4xf32> to vector<1x4xf32>
    %10 = vector.shape_cast %9 : vector<1x4xf32> to vector<1x1x4xf32>
    %11 = vector.broadcast %10 : vector<1x1x4xf32> to vector<16x16x4xf32>
    %12 = arith.mulf %8, %11 : vector<16x16x4xf32>
    %c0_14 = arith.constant 0 : index
    %c1_15 = arith.constant 1 : index
    %c0_16 = arith.constant 0 : index
    %13 = vector.load %arg19[%c0_14, %c1_15, %c0_16] : memref<18x18x4xf32, #tpu.memory_space<vmem>>, vector<16x16x4xf32>
    %14 = vector.extract_strided_slice %7 {offsets = [1, 0], sizes = [1, 4], strides = [1, 1]} : vector<9x4xf32> to vector<1x4xf32>
    %15 = vector.shape_cast %14 : vector<1x4xf32> to vector<1x1x4xf32>
    %16 = vector.broadcast %15 : vector<1x1x4xf32> to vector<16x16x4xf32>
    %17 = arith.mulf %13, %16 : vector<16x16x4xf32>
    %18 = arith.addf %12, %17 : vector<16x16x4xf32>
    %c0_17 = arith.constant 0 : index
    %c2 = arith.constant 2 : index
    %c0_18 = arith.constant 0 : index
    %19 = vector.load %arg19[%c0_17, %c2, %c0_18] : memref<18x18x4xf32, #tpu.memory_space<vmem>>, vector<16x16x4xf32>
    %20 = vector.extract_strided_slice %7 {offsets = [2, 0], sizes = [1, 4], strides = [1, 1]} : vector<9x4xf32> to vector<1x4xf32>
    %21 = vector.shape_cast %20 : vector<1x4xf32> to vector<1x1x4xf32>
    %22 = vector.broadcast %21 : vector<1x1x4xf32> to vector<16x16x4xf32>
    %23 = arith.mulf %19, %22 : vector<16x16x4xf32>
    %24 = arith.addf %18, %23 : vector<16x16x4xf32>
    %c1_19 = arith.constant 1 : index
    %c0_20 = arith.constant 0 : index
    %c0_21 = arith.constant 0 : index
    %25 = vector.load %arg19[%c1_19, %c0_20, %c0_21] : memref<18x18x4xf32, #tpu.memory_space<vmem>>, vector<16x16x4xf32>
    %26 = vector.extract_strided_slice %7 {offsets = [3, 0], sizes = [1, 4], strides = [1, 1]} : vector<9x4xf32> to vector<1x4xf32>
    %27 = vector.shape_cast %26 : vector<1x4xf32> to vector<1x1x4xf32>
    %28 = vector.broadcast %27 : vector<1x1x4xf32> to vector<16x16x4xf32>
    %29 = arith.mulf %25, %28 : vector<16x16x4xf32>
    %30 = arith.addf %24, %29 : vector<16x16x4xf32>
    %c1_22 = arith.constant 1 : index
    %c1_23 = arith.constant 1 : index
    %c0_24 = arith.constant 0 : index
    %31 = vector.load %arg19[%c1_22, %c1_23, %c0_24] : memref<18x18x4xf32, #tpu.memory_space<vmem>>, vector<16x16x4xf32>
    %32 = vector.extract_strided_slice %7 {offsets = [4, 0], sizes = [1, 4], strides = [1, 1]} : vector<9x4xf32> to vector<1x4xf32>
    %33 = vector.shape_cast %32 : vector<1x4xf32> to vector<1x1x4xf32>
    %34 = vector.broadcast %33 : vector<1x1x4xf32> to vector<16x16x4xf32>
    %35 = arith.mulf %31, %34 : vector<16x16x4xf32>
    %36 = arith.addf %30, %35 : vector<16x16x4xf32>
    %c1_25 = arith.constant 1 : index
    %c2_26 = arith.constant 2 : index
    %c0_27 = arith.constant 0 : index
    %37 = vector.load %arg19[%c1_25, %c2_26, %c0_27] : memref<18x18x4xf32, #tpu.memory_space<vmem>>, vector<16x16x4xf32>
    %38 = vector.extract_strided_slice %7 {offsets = [5, 0], sizes = [1, 4], strides = [1, 1]} : vector<9x4xf32> to vector<1x4xf32>
    %39 = vector.shape_cast %38 : vector<1x4xf32> to vector<1x1x4xf32>
    %40 = vector.broadcast %39 : vector<1x1x4xf32> to vector<16x16x4xf32>
    %41 = arith.mulf %37, %40 : vector<16x16x4xf32>
    %42 = arith.addf %36, %41 : vector<16x16x4xf32>
    %c2_28 = arith.constant 2 : index
    %c0_29 = arith.constant 0 : index
    %c0_30 = arith.constant 0 : index
    %43 = vector.load %arg19[%c2_28, %c0_29, %c0_30] : memref<18x18x4xf32, #tpu.memory_space<vmem>>, vector<16x16x4xf32>
    %44 = vector.extract_strided_slice %7 {offsets = [6, 0], sizes = [1, 4], strides = [1, 1]} : vector<9x4xf32> to vector<1x4xf32>
    %45 = vector.shape_cast %44 : vector<1x4xf32> to vector<1x1x4xf32>
    %46 = vector.broadcast %45 : vector<1x1x4xf32> to vector<16x16x4xf32>
    %47 = arith.mulf %43, %46 : vector<16x16x4xf32>
    %48 = arith.addf %42, %47 : vector<16x16x4xf32>
    %c2_31 = arith.constant 2 : index
    %c1_32 = arith.constant 1 : index
    %c0_33 = arith.constant 0 : index
    %49 = vector.load %arg19[%c2_31, %c1_32, %c0_33] : memref<18x18x4xf32, #tpu.memory_space<vmem>>, vector<16x16x4xf32>
    %50 = vector.extract_strided_slice %7 {offsets = [7, 0], sizes = [1, 4], strides = [1, 1]} : vector<9x4xf32> to vector<1x4xf32>
    %51 = vector.shape_cast %50 : vector<1x4xf32> to vector<1x1x4xf32>
    %52 = vector.broadcast %51 : vector<1x1x4xf32> to vector<16x16x4xf32>
    %53 = arith.mulf %49, %52 : vector<16x16x4xf32>
    %54 = arith.addf %48, %53 : vector<16x16x4xf32>
    %c2_34 = arith.constant 2 : index
    %c2_35 = arith.constant 2 : index
    %c0_36 = arith.constant 0 : index
    %55 = vector.load %arg19[%c2_34, %c2_35, %c0_36] : memref<18x18x4xf32, #tpu.memory_space<vmem>>, vector<16x16x4xf32>
    %56 = vector.extract_strided_slice %7 {offsets = [8, 0], sizes = [1, 4], strides = [1, 1]} : vector<9x4xf32> to vector<1x4xf32>
    %57 = vector.shape_cast %56 : vector<1x4xf32> to vector<1x1x4xf32>
    %58 = vector.broadcast %57 : vector<1x1x4xf32> to vector<16x16x4xf32>
    %59 = arith.mulf %55, %58 : vector<16x16x4xf32>
    %60 = arith.addf %54, %59 : vector<16x16x4xf32>
    %61 = vector.shape_cast %60 : vector<16x16x4xf32> to vector<256x4xf32>
    %c0_37 = arith.constant 0 : index
    %c0_38 = arith.constant 0 : index
    %62 = vector.load %arg3[%c0_37, %c0_38] : memref<4x8xf32, #tpu.memory_space<vmem>>, vector<4x8xf32>
    %cst_39 = arith.constant dense<0.000000e+00> : vector<256x8xf32>
    %63 = tpu.matmul %61, %62, %cst_39 {dimension_numbers = #tpu.dot_dimension_numbers<[1], [0], [0], [1], [0, 0, 1, 1], [], []>} : vector<256x4xf32>, vector<4x8xf32>, vector<256x8xf32> -> vector<256x8xf32>
    %c0_40 = arith.constant 0 : index
    %c0_41 = arith.constant 0 : index
    %64 = vector.load %arg4[%c0_40, %c0_41] : memref<1x8xf32, #tpu.memory_space<vmem>>, vector<1x8xf32>
    %65 = vector.broadcast %64 : vector<1x8xf32> to vector<256x8xf32>
    %66 = arith.mulf %63, %65 : vector<256x8xf32>
    %c0_42 = arith.constant 0 : index
    %c0_43 = arith.constant 0 : index
    %67 = vector.load %arg5[%c0_42, %c0_43] : memref<1x8xf32, #tpu.memory_space<vmem>>, vector<1x8xf32>
    %68 = vector.broadcast %67 : vector<1x8xf32> to vector<256x8xf32>
    %69 = arith.addf %66, %68 : vector<256x8xf32>
    %70 = vector.shape_cast %69 : vector<256x8xf32> to vector<16x16x8xf32>
    %cst_44 = arith.constant 0.000000e+00 : f32
    %71 = vector.broadcast %cst_44 : f32 to vector<16x16x8xf32>
    %72 = arith.maximumf %70, %71 : vector<16x16x8xf32>
    %cst_45 = arith.constant 0.000000e+00 : f32
    %73 = vector.broadcast %cst_45 : f32 to vector<18x18x8xf32>
    %c0_46 = arith.constant 0 : index
    %c0_47 = arith.constant 0 : index
    %c0_48 = arith.constant 0 : index
    %74 = vector.load %arg20[%c0_46, %c0_47, %c0_48] : memref<18x18x8xf32, #tpu.memory_space<vmem>>, vector<18x18x8xf32>
    tpu.vector_store %arg20[%c0_46, %c0_47, %c0_48], %73 {strides = array<i32>} : memref<18x18x8xf32, #tpu.memory_space<vmem>>, vector<18x18x8xf32>,
    %c1_49 = arith.constant 1 : index
    %c1_50 = arith.constant 1 : index
    %c0_51 = arith.constant 0 : index
    %75 = vector.load %arg20[%c1_49, %c1_50, %c0_51] : memref<18x18x8xf32, #tpu.memory_space<vmem>>, vector<16x16x8xf32>
    tpu.vector_store %arg20[%c1_49, %c1_50, %c0_51], %72 {strides = array<i32>} : memref<18x18x8xf32, #tpu.memory_space<vmem>>, vector<16x16x8xf32>,
    %c0_52 = arith.constant 0 : index
    %c0_53 = arith.constant 0 : index
    %76 = vector.load %arg6[%c0_52, %c0_53] : memref<9x8xf32, #tpu.memory_space<vmem>>, vector<9x8xf32>
    %c0_54 = arith.constant 0 : index
    %c0_55 = arith.constant 0 : index
    %c0_56 = arith.constant 0 : index
    %77 = vector.load %arg20[%c0_54, %c0_55, %c0_56] : memref<18x18x8xf32, #tpu.memory_space<vmem>>, vector<16x16x8xf32>
    %78 = vector.extract_strided_slice %76 {offsets = [0, 0], sizes = [1, 8], strides = [1, 1]} : vector<9x8xf32> to vector<1x8xf32>
    %79 = vector.shape_cast %78 : vector<1x8xf32> to vector<1x1x8xf32>
    %80 = vector.broadcast %79 : vector<1x1x8xf32> to vector<16x16x8xf32>
    %81 = arith.mulf %77, %80 : vector<16x16x8xf32>
    %c0_57 = arith.constant 0 : index
    %c1_58 = arith.constant 1 : index
    %c0_59 = arith.constant 0 : index
    %82 = vector.load %arg20[%c0_57, %c1_58, %c0_59] : memref<18x18x8xf32, #tpu.memory_space<vmem>>, vector<16x16x8xf32>
    %83 = vector.extract_strided_slice %76 {offsets = [1, 0], sizes = [1, 8], strides = [1, 1]} : vector<9x8xf32> to vector<1x8xf32>
    %84 = vector.shape_cast %83 : vector<1x8xf32> to vector<1x1x8xf32>
    %85 = vector.broadcast %84 : vector<1x1x8xf32> to vector<16x16x8xf32>
    %86 = arith.mulf %82, %85 : vector<16x16x8xf32>
    %87 = arith.addf %81, %86 : vector<16x16x8xf32>
    %c0_60 = arith.constant 0 : index
    %c2_61 = arith.constant 2 : index
    %c0_62 = arith.constant 0 : index
    %88 = vector.load %arg20[%c0_60, %c2_61, %c0_62] : memref<18x18x8xf32, #tpu.memory_space<vmem>>, vector<16x16x8xf32>
    %89 = vector.extract_strided_slice %76 {offsets = [2, 0], sizes = [1, 8], strides = [1, 1]} : vector<9x8xf32> to vector<1x8xf32>
    %90 = vector.shape_cast %89 : vector<1x8xf32> to vector<1x1x8xf32>
    %91 = vector.broadcast %90 : vector<1x1x8xf32> to vector<16x16x8xf32>
    %92 = arith.mulf %88, %91 : vector<16x16x8xf32>
    %93 = arith.addf %87, %92 : vector<16x16x8xf32>
    %c1_63 = arith.constant 1 : index
    %c0_64 = arith.constant 0 : index
    %c0_65 = arith.constant 0 : index
    %94 = vector.load %arg20[%c1_63, %c0_64, %c0_65] : memref<18x18x8xf32, #tpu.memory_space<vmem>>, vector<16x16x8xf32>
    %95 = vector.extract_strided_slice %76 {offsets = [3, 0], sizes = [1, 8], strides = [1, 1]} : vector<9x8xf32> to vector<1x8xf32>
    %96 = vector.shape_cast %95 : vector<1x8xf32> to vector<1x1x8xf32>
    %97 = vector.broadcast %96 : vector<1x1x8xf32> to vector<16x16x8xf32>
    %98 = arith.mulf %94, %97 : vector<16x16x8xf32>
    %99 = arith.addf %93, %98 : vector<16x16x8xf32>
    %c1_66 = arith.constant 1 : index
    %c1_67 = arith.constant 1 : index
    %c0_68 = arith.constant 0 : index
    %100 = vector.load %arg20[%c1_66, %c1_67, %c0_68] : memref<18x18x8xf32, #tpu.memory_space<vmem>>, vector<16x16x8xf32>
    %101 = vector.extract_strided_slice %76 {offsets = [4, 0], sizes = [1, 8], strides = [1, 1]} : vector<9x8xf32> to vector<1x8xf32>
    %102 = vector.shape_cast %101 : vector<1x8xf32> to vector<1x1x8xf32>
    %103 = vector.broadcast %102 : vector<1x1x8xf32> to vector<16x16x8xf32>
    %104 = arith.mulf %100, %103 : vector<16x16x8xf32>
    %105 = arith.addf %99, %104 : vector<16x16x8xf32>
    %c1_69 = arith.constant 1 : index
    %c2_70 = arith.constant 2 : index
    %c0_71 = arith.constant 0 : index
    %106 = vector.load %arg20[%c1_69, %c2_70, %c0_71] : memref<18x18x8xf32, #tpu.memory_space<vmem>>, vector<16x16x8xf32>
    %107 = vector.extract_strided_slice %76 {offsets = [5, 0], sizes = [1, 8], strides = [1, 1]} : vector<9x8xf32> to vector<1x8xf32>
    %108 = vector.shape_cast %107 : vector<1x8xf32> to vector<1x1x8xf32>
    %109 = vector.broadcast %108 : vector<1x1x8xf32> to vector<16x16x8xf32>
    %110 = arith.mulf %106, %109 : vector<16x16x8xf32>
    %111 = arith.addf %105, %110 : vector<16x16x8xf32>
    %c2_72 = arith.constant 2 : index
    %c0_73 = arith.constant 0 : index
    %c0_74 = arith.constant 0 : index
    %112 = vector.load %arg20[%c2_72, %c0_73, %c0_74] : memref<18x18x8xf32, #tpu.memory_space<vmem>>, vector<16x16x8xf32>
    %113 = vector.extract_strided_slice %76 {offsets = [6, 0], sizes = [1, 8], strides = [1, 1]} : vector<9x8xf32> to vector<1x8xf32>
    %114 = vector.shape_cast %113 : vector<1x8xf32> to vector<1x1x8xf32>
    %115 = vector.broadcast %114 : vector<1x1x8xf32> to vector<16x16x8xf32>
    %116 = arith.mulf %112, %115 : vector<16x16x8xf32>
    %117 = arith.addf %111, %116 : vector<16x16x8xf32>
    %c2_75 = arith.constant 2 : index
    %c1_76 = arith.constant 1 : index
    %c0_77 = arith.constant 0 : index
    %118 = vector.load %arg20[%c2_75, %c1_76, %c0_77] : memref<18x18x8xf32, #tpu.memory_space<vmem>>, vector<16x16x8xf32>
    %119 = vector.extract_strided_slice %76 {offsets = [7, 0], sizes = [1, 8], strides = [1, 1]} : vector<9x8xf32> to vector<1x8xf32>
    %120 = vector.shape_cast %119 : vector<1x8xf32> to vector<1x1x8xf32>
    %121 = vector.broadcast %120 : vector<1x1x8xf32> to vector<16x16x8xf32>
    %122 = arith.mulf %118, %121 : vector<16x16x8xf32>
    %123 = arith.addf %117, %122 : vector<16x16x8xf32>
    %c2_78 = arith.constant 2 : index
    %c2_79 = arith.constant 2 : index
    %c0_80 = arith.constant 0 : index
    %124 = vector.load %arg20[%c2_78, %c2_79, %c0_80] : memref<18x18x8xf32, #tpu.memory_space<vmem>>, vector<16x16x8xf32>
    %125 = vector.extract_strided_slice %76 {offsets = [8, 0], sizes = [1, 8], strides = [1, 1]} : vector<9x8xf32> to vector<1x8xf32>
    %126 = vector.shape_cast %125 : vector<1x8xf32> to vector<1x1x8xf32>
    %127 = vector.broadcast %126 : vector<1x1x8xf32> to vector<16x16x8xf32>
    %128 = arith.mulf %124, %127 : vector<16x16x8xf32>
    %129 = arith.addf %123, %128 : vector<16x16x8xf32>
    %130 = vector.shape_cast %129 : vector<16x16x8xf32> to vector<256x8xf32>
    %c0_81 = arith.constant 0 : index
    %c0_82 = arith.constant 0 : index
    %131 = vector.load %arg7[%c0_81, %c0_82] : memref<8x8xf32, #tpu.memory_space<vmem>>, vector<8x8xf32>
    %cst_83 = arith.constant dense<0.000000e+00> : vector<256x8xf32>
    %132 = tpu.matmul %130, %131, %cst_83 {dimension_numbers = #tpu.dot_dimension_numbers<[1], [0], [0], [1], [0, 0, 1, 1], [], []>} : vector<256x8xf32>, vector<8x8xf32>, vector<256x8xf32> -> vector<256x8xf32>
    %c0_84 = arith.constant 0 : index
    %c0_85 = arith.constant 0 : index
    %133 = vector.load %arg8[%c0_84, %c0_85] : memref<1x8xf32, #tpu.memory_space<vmem>>, vector<1x8xf32>
    %134 = vector.broadcast %133 : vector<1x8xf32> to vector<256x8xf32>
    %135 = arith.mulf %132, %134 : vector<256x8xf32>
    %c0_86 = arith.constant 0 : index
    %c0_87 = arith.constant 0 : index
    %136 = vector.load %arg9[%c0_86, %c0_87] : memref<1x8xf32, #tpu.memory_space<vmem>>, vector<1x8xf32>
    %137 = vector.broadcast %136 : vector<1x8xf32> to vector<256x8xf32>
    %138 = arith.addf %135, %137 : vector<256x8xf32>
    %139 = vector.shape_cast %138 : vector<256x8xf32> to vector<16x16x8xf32>
    %cst_88 = arith.constant 0.000000e+00 : f32
    %140 = vector.broadcast %cst_88 : f32 to vector<18x18x8xf32>
    %c0_89 = arith.constant 0 : index
    %c0_90 = arith.constant 0 : index
    %c0_91 = arith.constant 0 : index
    %141 = vector.load %arg21[%c0_89, %c0_90, %c0_91] : memref<18x18x8xf32, #tpu.memory_space<vmem>>, vector<18x18x8xf32>
    tpu.vector_store %arg21[%c0_89, %c0_90, %c0_91], %140 {strides = array<i32>} : memref<18x18x8xf32, #tpu.memory_space<vmem>>, vector<18x18x8xf32>,
    %c1_92 = arith.constant 1 : index
    %c1_93 = arith.constant 1 : index
    %c0_94 = arith.constant 0 : index
    %142 = vector.load %arg21[%c1_92, %c1_93, %c0_94] : memref<18x18x8xf32, #tpu.memory_space<vmem>>, vector<16x16x8xf32>
    tpu.vector_store %arg21[%c1_92, %c1_93, %c0_94], %139 {strides = array<i32>} : memref<18x18x8xf32, #tpu.memory_space<vmem>>, vector<16x16x8xf32>,
    %c0_95 = arith.constant 0 : index
    %c0_96 = arith.constant 0 : index
    %143 = vector.load %arg10[%c0_95, %c0_96] : memref<9x8xf32, #tpu.memory_space<vmem>>, vector<9x8xf32>
    %c0_97 = arith.constant 0 : index
    %c0_98 = arith.constant 0 : index
    %c0_99 = arith.constant 0 : index
    %144 = vector.load %arg21[%c0_97, %c0_98, %c0_99] : memref<18x18x8xf32, #tpu.memory_space<vmem>>, vector<16x16x8xf32>
    %145 = vector.extract_strided_slice %143 {offsets = [0, 0], sizes = [1, 8], strides = [1, 1]} : vector<9x8xf32> to vector<1x8xf32>
    %146 = vector.shape_cast %145 : vector<1x8xf32> to vector<1x1x8xf32>
    %147 = vector.broadcast %146 : vector<1x1x8xf32> to vector<16x16x8xf32>
    %148 = arith.mulf %144, %147 : vector<16x16x8xf32>
    %c0_100 = arith.constant 0 : index
    %c1_101 = arith.constant 1 : index
    %c0_102 = arith.constant 0 : index
    %149 = vector.load %arg21[%c0_100, %c1_101, %c0_102] : memref<18x18x8xf32, #tpu.memory_space<vmem>>, vector<16x16x8xf32>
    %150 = vector.extract_strided_slice %143 {offsets = [1, 0], sizes = [1, 8], strides = [1, 1]} : vector<9x8xf32> to vector<1x8xf32>
    %151 = vector.shape_cast %150 : vector<1x8xf32> to vector<1x1x8xf32>
    %152 = vector.broadcast %151 : vector<1x1x8xf32> to vector<16x16x8xf32>
    %153 = arith.mulf %149, %152 : vector<16x16x8xf32>
    %154 = arith.addf %148, %153 : vector<16x16x8xf32>
    %c0_103 = arith.constant 0 : index
    %c2_104 = arith.constant 2 : index
    %c0_105 = arith.constant 0 : index
    %155 = vector.load %arg21[%c0_103, %c2_104, %c0_105] : memref<18x18x8xf32, #tpu.memory_space<vmem>>, vector<16x16x8xf32>
    %156 = vector.extract_strided_slice %143 {offsets = [2, 0], sizes = [1, 8], strides = [1, 1]} : vector<9x8xf32> to vector<1x8xf32>
    %157 = vector.shape_cast %156 : vector<1x8xf32> to vector<1x1x8xf32>
    %158 = vector.broadcast %157 : vector<1x1x8xf32> to vector<16x16x8xf32>
    %159 = arith.mulf %155, %158 : vector<16x16x8xf32>
    %160 = arith.addf %154, %159 : vector<16x16x8xf32>
    %c1_106 = arith.constant 1 : index
    %c0_107 = arith.constant 0 : index
    %c0_108 = arith.constant 0 : index
    %161 = vector.load %arg21[%c1_106, %c0_107, %c0_108] : memref<18x18x8xf32, #tpu.memory_space<vmem>>, vector<16x16x8xf32>
    %162 = vector.extract_strided_slice %143 {offsets = [3, 0], sizes = [1, 8], strides = [1, 1]} : vector<9x8xf32> to vector<1x8xf32>
    %163 = vector.shape_cast %162 : vector<1x8xf32> to vector<1x1x8xf32>
    %164 = vector.broadcast %163 : vector<1x1x8xf32> to vector<16x16x8xf32>
    %165 = arith.mulf %161, %164 : vector<16x16x8xf32>
    %166 = arith.addf %160, %165 : vector<16x16x8xf32>
    %c1_109 = arith.constant 1 : index
    %c1_110 = arith.constant 1 : index
    %c0_111 = arith.constant 0 : index
    %167 = vector.load %arg21[%c1_109, %c1_110, %c0_111] : memref<18x18x8xf32, #tpu.memory_space<vmem>>, vector<16x16x8xf32>
    %168 = vector.extract_strided_slice %143 {offsets = [4, 0], sizes = [1, 8], strides = [1, 1]} : vector<9x8xf32> to vector<1x8xf32>
    %169 = vector.shape_cast %168 : vector<1x8xf32> to vector<1x1x8xf32>
    %170 = vector.broadcast %169 : vector<1x1x8xf32> to vector<16x16x8xf32>
    %171 = arith.mulf %167, %170 : vector<16x16x8xf32>
    %172 = arith.addf %166, %171 : vector<16x16x8xf32>
    %c1_112 = arith.constant 1 : index
    %c2_113 = arith.constant 2 : index
    %c0_114 = arith.constant 0 : index
    %173 = vector.load %arg21[%c1_112, %c2_113, %c0_114] : memref<18x18x8xf32, #tpu.memory_space<vmem>>, vector<16x16x8xf32>
    %174 = vector.extract_strided_slice %143 {offsets = [5, 0], sizes = [1, 8], strides = [1, 1]} : vector<9x8xf32> to vector<1x8xf32>
    %175 = vector.shape_cast %174 : vector<1x8xf32> to vector<1x1x8xf32>
    %176 = vector.broadcast %175 : vector<1x1x8xf32> to vector<16x16x8xf32>
    %177 = arith.mulf %173, %176 : vector<16x16x8xf32>
    %178 = arith.addf %172, %177 : vector<16x16x8xf32>
    %c2_115 = arith.constant 2 : index
    %c0_116 = arith.constant 0 : index
    %c0_117 = arith.constant 0 : index
    %179 = vector.load %arg21[%c2_115, %c0_116, %c0_117] : memref<18x18x8xf32, #tpu.memory_space<vmem>>, vector<16x16x8xf32>
    %180 = vector.extract_strided_slice %143 {offsets = [6, 0], sizes = [1, 8], strides = [1, 1]} : vector<9x8xf32> to vector<1x8xf32>
    %181 = vector.shape_cast %180 : vector<1x8xf32> to vector<1x1x8xf32>
    %182 = vector.broadcast %181 : vector<1x1x8xf32> to vector<16x16x8xf32>
    %183 = arith.mulf %179, %182 : vector<16x16x8xf32>
    %184 = arith.addf %178, %183 : vector<16x16x8xf32>
    %c2_118 = arith.constant 2 : index
    %c1_119 = arith.constant 1 : index
    %c0_120 = arith.constant 0 : index
    %185 = vector.load %arg21[%c2_118, %c1_119, %c0_120] : memref<18x18x8xf32, #tpu.memory_space<vmem>>, vector<16x16x8xf32>
    %186 = vector.extract_strided_slice %143 {offsets = [7, 0], sizes = [1, 8], strides = [1, 1]} : vector<9x8xf32> to vector<1x8xf32>
    %187 = vector.shape_cast %186 : vector<1x8xf32> to vector<1x1x8xf32>
    %188 = vector.broadcast %187 : vector<1x1x8xf32> to vector<16x16x8xf32>
    %189 = arith.mulf %185, %188 : vector<16x16x8xf32>
    %190 = arith.addf %184, %189 : vector<16x16x8xf32>
    %c2_121 = arith.constant 2 : index
    %c2_122 = arith.constant 2 : index
    %c0_123 = arith.constant 0 : index
    %191 = vector.load %arg21[%c2_121, %c2_122, %c0_123] : memref<18x18x8xf32, #tpu.memory_space<vmem>>, vector<16x16x8xf32>
    %192 = vector.extract_strided_slice %143 {offsets = [8, 0], sizes = [1, 8], strides = [1, 1]} : vector<9x8xf32> to vector<1x8xf32>
    %193 = vector.shape_cast %192 : vector<1x8xf32> to vector<1x1x8xf32>
    %194 = vector.broadcast %193 : vector<1x1x8xf32> to vector<16x16x8xf32>
    %195 = arith.mulf %191, %194 : vector<16x16x8xf32>
    %196 = arith.addf %190, %195 : vector<16x16x8xf32>
    %197 = vector.shape_cast %196 : vector<16x16x8xf32> to vector<256x8xf32>
    %c0_124 = arith.constant 0 : index
    %c0_125 = arith.constant 0 : index
    %198 = vector.load %arg17[%c0_124, %c0_125] : memref<64x256xf32, #tpu.memory_space<vmem>>, vector<64x256xf32>
    %cst_126 = arith.constant dense<0.000000e+00> : vector<64x8xf32>
    %199 = tpu.matmul %198, %197, %cst_126 {dimension_numbers = #tpu.dot_dimension_numbers<[1], [0], [0], [1], [0, 0, 1, 1], [], []>} : vector<64x256xf32>, vector<256x8xf32>, vector<64x8xf32> -> vector<64x8xf32>
    %c0_127 = arith.constant 0 : index
    %c0_128 = arith.constant 0 : index
    %200 = vector.load %arg11[%c0_127, %c0_128] : memref<8x8xf32, #tpu.memory_space<vmem>>, vector<8x8xf32>
    %cst_129 = arith.constant dense<0.000000e+00> : vector<64x8xf32>
    %201 = tpu.matmul %199, %200, %cst_129 {dimension_numbers = #tpu.dot_dimension_numbers<[1], [0], [0], [1], [0, 0, 1, 1], [], []>} : vector<64x8xf32>, vector<8x8xf32>, vector<64x8xf32> -> vector<64x8xf32>
    %202 = vector.shape_cast %201 : vector<64x8xf32> to vector<8x8x8xf32>
    %203 = vector.shape_cast %1 : vector<16x16x4xf32> to vector<256x4xf32>
    %c0_130 = arith.constant 0 : index
    %c0_131 = arith.constant 0 : index
    %204 = vector.load %arg17[%c0_130, %c0_131] : memref<64x256xf32, #tpu.memory_space<vmem>>, vector<64x256xf32>
    %cst_132 = arith.constant dense<0.000000e+00> : vector<64x4xf32>
    %205 = tpu.matmul %204, %203, %cst_132 {dimension_numbers = #tpu.dot_dimension_numbers<[1], [0], [0], [1], [0, 0, 1, 1], [], []>} : vector<64x256xf32>, vector<256x4xf32>, vector<64x4xf32> -> vector<64x4xf32>
    %c0_133 = arith.constant 0 : index
    %c0_134 = arith.constant 0 : index
    %206 = vector.load %arg14[%c0_133, %c0_134] : memref<4x8xf32, #tpu.memory_space<vmem>>, vector<4x8xf32>
    %cst_135 = arith.constant dense<0.000000e+00> : vector<64x8xf32>
    %207 = tpu.matmul %205, %206, %cst_135 {dimension_numbers = #tpu.dot_dimension_numbers<[1], [0], [0], [1], [0, 0, 1, 1], [], []>} : vector<64x4xf32>, vector<4x8xf32>, vector<64x8xf32> -> vector<64x8xf32>
    %c0_136 = arith.constant 0 : index
    %c0_137 = arith.constant 0 : index
    %208 = vector.load %arg15[%c0_136, %c0_137] : memref<1x8xf32, #tpu.memory_space<vmem>>, vector<1x8xf32>
    %209 = vector.broadcast %208 : vector<1x8xf32> to vector<64x8xf32>
    %210 = arith.mulf %207, %209 : vector<64x8xf32>
    %c0_138 = arith.constant 0 : index
    %c0_139 = arith.constant 0 : index
    %211 = vector.load %arg16[%c0_138, %c0_139] : memref<1x8xf32, #tpu.memory_space<vmem>>, vector<1x8xf32>
    %212 = vector.broadcast %211 : vector<1x8xf32> to vector<64x8xf32>
    %213 = arith.addf %210, %212 : vector<64x8xf32>
    %214 = vector.shape_cast %213 : vector<64x8xf32> to vector<8x8x8xf32>
    %215 = arith.addf %202, %214 : vector<8x8x8xf32>
    %c0_140 = arith.constant 0 : index
    %c0_141 = arith.constant 0 : index
    %c0_142 = arith.constant 0 : index
    %c0_143 = arith.constant 0 : index
    %216 = vector.load %arg18[%c0_140, %c0_141, %c0_142, %c0_143] : memref<1x8x8x8xf32, #tpu.memory_space<vmem>>, vector<1x8x8x8xf32>
    %217 = vector.shape_cast %216 : vector<1x8x8x8xf32> to vector<8x8x8xf32>
    %218 = vector.shape_cast %215 : vector<8x8x8xf32> to vector<1x8x8x8xf32>
    tpu.vector_store %arg18[%c0_140, %c0_141, %c0_142, %c0_143], %218 {strides = array<i32>} : memref<1x8x8x8xf32, #tpu.memory_space<vmem>>, vector<1x8x8x8xf32>,
    return
  }
  func.func @transform_0(%arg0: i32) -> (i32, i32, i32, i32) {
    %c0_i32 = arith.constant 0 : i32
    %c0_i32_0 = arith.constant 0 : i32
    %c0_i32_1 = arith.constant 0 : i32
    %c0_i32_2 = arith.constant 0 : i32
    return %arg0, %c0_i32, %c0_i32_0, %c0_i32_1 : i32, i32, i32, i32
  }
  func.func @transform_1(%arg0: i32) -> (i32, i32) {
    %c0_i32 = arith.constant 0 : i32
    %c0_i32_0 = arith.constant 0 : i32
    %c0_i32_1 = arith.constant 0 : i32
    return %c0_i32, %c0_i32_0 : i32, i32
  }
  func.func @transform_2(%arg0: i32) -> (i32, i32) {
    %c0_i32 = arith.constant 0 : i32
    %c0_i32_0 = arith.constant 0 : i32
    %c0_i32_1 = arith.constant 0 : i32
    return %c0_i32, %c0_i32_0 : i32, i32
  }
  func.func @transform_3(%arg0: i32) -> (i32, i32) {
    %c0_i32 = arith.constant 0 : i32
    %c0_i32_0 = arith.constant 0 : i32
    %c0_i32_1 = arith.constant 0 : i32
    return %c0_i32, %c0_i32_0 : i32, i32
  }
  func.func @transform_4(%arg0: i32) -> (i32, i32) {
    %c0_i32 = arith.constant 0 : i32
    %c0_i32_0 = arith.constant 0 : i32
    %c0_i32_1 = arith.constant 0 : i32
    return %c0_i32, %c0_i32_0 : i32, i32
  }
  func.func @transform_5(%arg0: i32) -> (i32, i32) {
    %c0_i32 = arith.constant 0 : i32
    %c0_i32_0 = arith.constant 0 : i32
    %c0_i32_1 = arith.constant 0 : i32
    return %c0_i32, %c0_i32_0 : i32, i32
  }
  func.func @transform_6(%arg0: i32) -> (i32, i32) {
    %c0_i32 = arith.constant 0 : i32
    %c0_i32_0 = arith.constant 0 : i32
    %c0_i32_1 = arith.constant 0 : i32
    return %c0_i32, %c0_i32_0 : i32, i32
  }
  func.func @transform_7(%arg0: i32) -> (i32, i32) {
    %c0_i32 = arith.constant 0 : i32
    %c0_i32_0 = arith.constant 0 : i32
    %c0_i32_1 = arith.constant 0 : i32
    return %c0_i32, %c0_i32_0 : i32, i32
  }
  func.func @transform_8(%arg0: i32) -> (i32, i32) {
    %c0_i32 = arith.constant 0 : i32
    %c0_i32_0 = arith.constant 0 : i32
    %c0_i32_1 = arith.constant 0 : i32
    return %c0_i32, %c0_i32_0 : i32, i32
  }
  func.func @transform_9(%arg0: i32) -> (i32, i32) {
    %c0_i32 = arith.constant 0 : i32
    %c0_i32_0 = arith.constant 0 : i32
    %c0_i32_1 = arith.constant 0 : i32
    return %c0_i32, %c0_i32_0 : i32, i32
  }
  func.func @transform_10(%arg0: i32) -> (i32, i32) {
    %c0_i32 = arith.constant 0 : i32
    %c0_i32_0 = arith.constant 0 : i32
    %c0_i32_1 = arith.constant 0 : i32
    return %c0_i32, %c0_i32_0 : i32, i32
  }
  func.func @transform_11(%arg0: i32) -> (i32, i32) {
    %c0_i32 = arith.constant 0 : i32
    %c0_i32_0 = arith.constant 0 : i32
    %c0_i32_1 = arith.constant 0 : i32
    return %c0_i32, %c0_i32_0 : i32, i32
  }
  func.func @transform_12(%arg0: i32) -> (i32, i32) {
    %c0_i32 = arith.constant 0 : i32
    %c0_i32_0 = arith.constant 0 : i32
    %c0_i32_1 = arith.constant 0 : i32
    return %c0_i32, %c0_i32_0 : i32, i32
  }
  func.func @transform_13(%arg0: i32) -> (i32, i32) {
    %c0_i32 = arith.constant 0 : i32
    %c0_i32_0 = arith.constant 0 : i32
    %c0_i32_1 = arith.constant 0 : i32
    return %c0_i32, %c0_i32_0 : i32, i32
  }
  func.func @transform_14(%arg0: i32) -> (i32, i32) {
    %c0_i32 = arith.constant 0 : i32
    %c0_i32_0 = arith.constant 0 : i32
    %c0_i32_1 = arith.constant 0 : i32
    return %c0_i32, %c0_i32_0 : i32, i32
  }
  func.func @transform_15(%arg0: i32) -> (i32, i32) {
    %c0_i32 = arith.constant 0 : i32
    %c0_i32_0 = arith.constant 0 : i32
    %c0_i32_1 = arith.constant 0 : i32
    return %c0_i32, %c0_i32_0 : i32, i32
  }
  func.func @transform_16(%arg0: i32) -> (i32, i32) {
    %c0_i32 = arith.constant 0 : i32
    %c0_i32_0 = arith.constant 0 : i32
    %c0_i32_1 = arith.constant 0 : i32
    return %c0_i32, %c0_i32_0 : i32, i32
  }
  func.func @transform_17(%arg0: i32) -> (i32, i32, i32, i32) {
    %c0_i32 = arith.constant 0 : i32
    %c0_i32_0 = arith.constant 0 : i32
    %c0_i32_1 = arith.constant 0 : i32
    %c0_i32_2 = arith.constant 0 : i32
    return %arg0, %c0_i32, %c0_i32_0, %c0_i32_1 : i32, i32, i32, i32
  }
}

</mosaic_0001>

<llo_original>
// kernel: tpu_custom_call.1
$region0: #{tpu_custom_call.1}
  #allocation0 [shape = 'u32[]', space=smem, size = 0x4, offset = 0x4, fixed_abs, tag = 'smem constant byte address 0x4 - core index']
  #allocation1 [shape = 'u32[144,128]{1,0:T(1,128)}', space=vmem, size = 0x12000, scoped, tag = 'internal scratch']
  #allocation2 [shape = 'f32[18,18,4]{2,1,0:T(8,128)}', space=vmem, size = 0x36000, scoped, tag = 'scratch operand']
  #allocation3 [shape = 'f32[18,18,8]{2,1,0:T(8,128)}', space=vmem, size = 0x36000, scoped, tag = 'scratch operand']
  #allocation4 [shape = 'f32[18,18,8]{2,1,0:T(8,128)}', space=vmem, size = 0x36000, scoped, tag = 'scratch operand']
  %s0 = inlined_call_operand.vmem [shape: f32[2,16,16,4], index: 0, kind: input, shape index: {}]
  %s1 = inlined_call_operand.vmem [shape: f32[9,4], index: 1, kind: input, shape index: {}]
  %s2 = inlined_call_operand.vmem [shape: f32[4,8], index: 2, kind: input, shape index: {}]
  %s3 = inlined_call_operand.vmem [shape: f32[1,8], index: 3, kind: input, shape index: {}]
  %s4 = inlined_call_operand.vmem [shape: f32[1,8], index: 4, kind: input, shape index: {}]
  %s5 = inlined_call_operand.vmem [shape: f32[9,8], index: 5, kind: input, shape index: {}]
  %s6 = inlined_call_operand.vmem [shape: f32[8,8], index: 6, kind: input, shape index: {}]
  %s7 = inlined_call_operand.vmem [shape: f32[1,8], index: 7, kind: input, shape index: {}]
  %s8 = inlined_call_operand.vmem [shape: f32[1,8], index: 8, kind: input, shape index: {}]
  %s9 = inlined_call_operand.vmem [shape: f32[9,8], index: 9, kind: input, shape index: {}]
  %s10 = inlined_call_operand.vmem [shape: f32[8,8], index: 10, kind: input, shape index: {}]
  %s11 = inlined_call_operand.vmem [shape: f32[1,8], index: 11, kind: input, shape index: {}]
  %s12 = inlined_call_operand.vmem [shape: f32[1,8], index: 12, kind: input, shape index: {}]
  %s13 = inlined_call_operand.vmem [shape: f32[4,8], index: 13, kind: input, shape index: {}]
  %s14 = inlined_call_operand.vmem [shape: f32[1,8], index: 14, kind: input, shape index: {}]
  %s15 = inlined_call_operand.vmem [shape: f32[1,8], index: 15, kind: input, shape index: {}]
  %s16 = inlined_call_operand.vmem [shape: f32[64,256], index: 16, kind: input, shape index: {}]
  %s17 = inlined_call_operand.hbm [shape: f32[2,8,8,8], index: 17, kind: output, shape index: {}]
  %s18 = sld [smem:[#allocation0]]
  $region101: #{tpu_custom_call.1} parent=0
    _
  %s20 = ssub.s32 1, %s18
  %s21 = scalar_select 0, %s20, %s18
  $region1: #{tpu_custom_call.1} parent=0
    #allocation5 [shape = 'u8[65536]{0}', space=vmem, size = 0x10000, scoped, tag = 'output window, operand 0']
    #allocation6 [shape = 's32[2]{0}', space=sflag, size = 0x8, scoped, tag = 'scoped memory for tpu_custom_call.1']
    %22 = vsyncpa [#allocation6], 0
    %s23 = scalar_lea.sflag [#allocation6], 1
    %24 = vsyncpa %s23, 0
    loop: start=0, step=1, limit=4
    $region2: #{tpu_custom_call.1} parent=1 // loop_pre_header
      _
    $region3: #{tpu_custom_call.1} parent=1 // loop_header
      %s26 = sphi 0, %s30
      %p27 = scmp.ge.s32.totalorder %s26, 4
      %s36 = sphi 0, %s38
      %s39 = sphi 0, %s36
      %s40 = sphi 0, %s39
      %s56 = sphi 0, %s40
      %s60 = sphi 0, %s60
      %s62 = sphi 0, %s60
      %s63 = sphi 0, %s62
      %s77 = sphi 0, %s63
      %s81 = sphi 0, %s81
      %s83 = sphi 0, %s81
      %s84 = sphi 0, %s83
      %s98 = sphi 0, %s84
      %s102 = sphi 0, %s102
      %s104 = sphi 0, %s102
      %s105 = sphi 0, %s104
      %s119 = sphi 0, %s105
      %s123 = sphi 0, %s123
      %s125 = sphi 0, %s123
      %s126 = sphi 0, %s125
      %s140 = sphi 0, %s126
      %s144 = sphi 0, %s144
      %s146 = sphi 0, %s144
      %s147 = sphi 0, %s146
      %s161 = sphi 0, %s147
      %s165 = sphi 0, %s165
      %s167 = sphi 0, %s165
      %s168 = sphi 0, %s167
      %s182 = sphi 0, %s168
      %s186 = sphi 0, %s186
      %s188 = sphi 0, %s186
      %s189 = sphi 0, %s188
      %s203 = sphi 0, %s189
      %s207 = sphi 0, %s207
      %s209 = sphi 0, %s207
      %s210 = sphi 0, %s209
      %s224 = sphi 0, %s210
      %s228 = sphi 0, %s228
      %s230 = sphi 0, %s228
      %s231 = sphi 0, %s230
      %s245 = sphi 0, %s231
      %s249 = sphi 0, %s249
      %s251 = sphi 0, %s249
      %s252 = sphi 0, %s251
      %s266 = sphi 0, %s252
      %s270 = sphi 0, %s270
      %s272 = sphi 0, %s270
      %s273 = sphi 0, %s272
      %s287 = sphi 0, %s273
      %s291 = sphi 0, %s291
      %s293 = sphi 0, %s291
      %s294 = sphi 0, %s293
      %s308 = sphi 0, %s294
      %s312 = sphi 0, %s312
      %s314 = sphi 0, %s312
      %s315 = sphi 0, %s314
      %s329 = sphi 0, %s315
      %s333 = sphi 0, %s333
      %s335 = sphi 0, %s333
      %s336 = sphi 0, %s335
      %s350 = sphi 0, %s336
      %s354 = sphi 0, %s354
      %s356 = sphi 0, %s354
      %s357 = sphi 0, %s356
      %s371 = sphi 0, %s357
      %s375 = sphi 0, %s375
      %s377 = sphi 0, %s375
      %s378 = sphi 0, %s377
      %s392 = sphi 0, %s378
      %s398 = sphi 0, %s400
      %s401 = sphi 0, %s398
      %s402 = sphi 0, %s401
      %s418 = sphi 0, %s402
    $region4: #{tpu_custom_call.1} parent=1 // loop_header_branch
      %29 = sbr.rel (%p27) target = $region8
    $region5: #{tpu_custom_call.1} parent=1 // loop_body
      %s31 = ssub.s32 %s26, 1
      %s32 = ssub.s32 %s26, 2
      %s33 = sadd.s32 %s26, 1
      %s34 = ssub.s32 %s26, %s33
      %p35 = scmp.eq.s32.totalorder %s34, 0
      %s37 = sadd.s32 %s36, 1
      %s38 = scalar_select %p35, %s36, %s37
      %p41 = pneg %p35
      %p42 = scmp.eq.s32.totalorder %s26, 1
      %p43 = por %p41, %p42
      %p44 = scmp.ne.s32.totalorder %s36, %s39
      %p45 = scmp.eq.s32.totalorder %s26, 0
      %p46 = por %p44, %p45
      %p47 = scmp.ne.s32.totalorder %s36, %s39
      %p48 = scmp.eq.s32.totalorder %s31, 1
      %p49 = por %p47, %p48
      %p50 = scmp.ne.s32.totalorder %s39, %s40
      %p51 = scmp.eq.s32.totalorder %s31, 0
      %p52 = por %p50, %p51
      %p53 = scmp.ne.s32.totalorder %s39, %s40
      %p54 = scmp.eq.s32.totalorder %s32, 1
      %p55 = por %p53, %p54
      %p57 = scmp.ne.s32.totalorder %s40, %s56
      %p58 = scmp.eq.s32.totalorder %s32, 0
      %p59 = por %p57, %p58
      %s61 = sadd.s32 %s60, 1
      %p64 = scmp.eq.s32.totalorder %s26, 1
      %p65 = scmp.ne.s32.totalorder %s60, %s62
      %p66 = scmp.eq.s32.totalorder %s26, 0
      %p67 = por %p65, %p66
      %p68 = scmp.ne.s32.totalorder %s60, %s62
      %p69 = scmp.eq.s32.totalorder %s31, 1
      %p70 = por %p68, %p69
      %p71 = scmp.ne.s32.totalorder %s62, %s63
      %p72 = scmp.eq.s32.totalorder %s31, 0
      %p73 = por %p71, %p72
      %p74 = scmp.ne.s32.totalorder %s62, %s63
      %p75 = scmp.eq.s32.totalorder %s32, 1
      %p76 = por %p74, %p75
      %p78 = scmp.ne.s32.totalorder %s63, %s77
      %p79 = scmp.eq.s32.totalorder %s32, 0
      %p80 = por %p78, %p79
      %s82 = sadd.s32 %s81, 1
      %p85 = scmp.eq.s32.totalorder %s26, 1
      %p86 = scmp.ne.s32.totalorder %s81, %s83
      %p87 = scmp.eq.s32.totalorder %s26, 0
      %p88 = por %p86, %p87
      %p89 = scmp.ne.s32.totalorder %s81, %s83
      %p90 = scmp.eq.s32.totalorder %s31, 1
      %p91 = por %p89, %p90
      %p92 = scmp.ne.s32.totalorder %s83, %s84
      %p93 = scmp.eq.s32.totalorder %s31, 0
      %p94 = por %p92, %p93
      %p95 = scmp.ne.s32.totalorder %s83, %s84
      %p96 = scmp.eq.s32.totalorder %s32, 1
      %p97 = por %p95, %p96
      %p99 = scmp.ne.s32.totalorder %s84, %s98
      %p100 = scmp.eq.s32.totalorder %s32, 0
      %p101 = por %p99, %p100
      %s103 = sadd.s32 %s102, 1
      %p106 = scmp.eq.s32.totalorder %s26, 1
      %p107 = scmp.ne.s32.totalorder %s102, %s104
      %p108 = scmp.eq.s32.totalorder %s26, 0
      %p109 = por %p107, %p108
      %p110 = scmp.ne.s32.totalorder %s102, %s104
      %p111 = scmp.eq.s32.totalorder %s31, 1
      %p112 = por %p110, %p111
      %p113 = scmp.ne.s32.totalorder %s104, %s105
      %p114 = scmp.eq.s32.totalorder %s31, 0
      %p115 = por %p113, %p114
      %p116 = scmp.ne.s32.totalorder %s104, %s105
      %p117 = scmp.eq.s32.totalorder %s32, 1
      %p118 = por %p116, %p117
      %p120 = scmp.ne.s32.totalorder %s105, %s119
      %p121 = scmp.eq.s32.totalorder %s32, 0
      %p122 = por %p120, %p121
      %s124 = sadd.s32 %s123, 1
      %p127 = scmp.eq.s32.totalorder %s26, 1
      %p128 = scmp.ne.s32.totalorder %s123, %s125
      %p129 = scmp.eq.s32.totalorder %s26, 0
      %p130 = por %p128, %p129
      %p131 = scmp.ne.s32.totalorder %s123, %s125
      %p132 = scmp.eq.s32.totalorder %s31, 1
      %p133 = por %p131, %p132
      %p134 = scmp.ne.s32.totalorder %s125, %s126
      %p135 = scmp.eq.s32.totalorder %s31, 0
      %p136 = por %p134, %p135
      %p137 = scmp.ne.s32.totalorder %s125, %s126
      %p138 = scmp.eq.s32.totalorder %s32, 1
      %p139 = por %p137, %p138
      %p141 = scmp.ne.s32.totalorder %s126, %s140
      %p142 = scmp.eq.s32.totalorder %s32, 0
      %p143 = por %p141, %p142
      %s145 = sadd.s32 %s144, 1
      %p148 = scmp.eq.s32.totalorder %s26, 1
      %p149 = scmp.ne.s32.totalorder %s144, %s146
      %p150 = scmp.eq.s32.totalorder %s26, 0
      %p151 = por %p149, %p150
      %p152 = scmp.ne.s32.totalorder %s144, %s146
      %p153 = scmp.eq.s32.totalorder %s31, 1
      %p154 = por %p152, %p153
      %p155 = scmp.ne.s32.totalorder %s146, %s147
      %p156 = scmp.eq.s32.totalorder %s31, 0
      %p157 = por %p155, %p156
      %p158 = scmp.ne.s32.totalorder %s146, %s147
      %p159 = scmp.eq.s32.totalorder %s32, 1
      %p160 = por %p158, %p159
      %p162 = scmp.ne.s32.totalorder %s147, %s161
      %p163 = scmp.eq.s32.totalorder %s32, 0
      %p164 = por %p162, %p163
      %s166 = sadd.s32 %s165, 1
      %p169 = scmp.eq.s32.totalorder %s26, 1
      %p170 = scmp.ne.s32.totalorder %s165, %s167
      %p171 = scmp.eq.s32.totalorder %s26, 0
      %p172 = por %p170, %p171
      %p173 = scmp.ne.s32.totalorder %s165, %s167
      %p174 = scmp.eq.s32.totalorder %s31, 1
      %p175 = por %p173, %p174
      %p176 = scmp.ne.s32.totalorder %s167, %s168
      %p177 = scmp.eq.s32.totalorder %s31, 0
      %p178 = por %p176, %p177
      %p179 = scmp.ne.s32.totalorder %s167, %s168
      %p180 = scmp.eq.s32.totalorder %s32, 1
      %p181 = por %p179, %p180
      %p183 = scmp.ne.s32.totalorder %s168, %s182
      %p184 = scmp.eq.s32.totalorder %s32, 0
      %p185 = por %p183, %p184
      %s187 = sadd.s32 %s186, 1
      %p190 = scmp.eq.s32.totalorder %s26, 1
      %p191 = scmp.ne.s32.totalorder %s186, %s188
      %p192 = scmp.eq.s32.totalorder %s26, 0
      %p193 = por %p191, %p192
      %p194 = scmp.ne.s32.totalorder %s186, %s188
      %p195 = scmp.eq.s32.totalorder %s31, 1
      %p196 = por %p194, %p195
      %p197 = scmp.ne.s32.totalorder %s188, %s189
      %p198 = scmp.eq.s32.totalorder %s31, 0
      %p199 = por %p197, %p198
      %p200 = scmp.ne.s32.totalorder %s188, %s189
      %p201 = scmp.eq.s32.totalorder %s32, 1
      %p202 = por %p200, %p201
      %p204 = scmp.ne.s32.totalorder %s189, %s203
      %p205 = scmp.eq.s32.totalorder %s32, 0
      %p206 = por %p204, %p205
      %s208 = sadd.s32 %s207, 1
      %p211 = scmp.eq.s32.totalorder %s26, 1
      %p212 = scmp.ne.s32.totalorder %s207, %s209
      %p213 = scmp.eq.s32.totalorder %s26, 0
      %p214 = por %p212, %p213
      %p215 = scmp.ne.s32.totalorder %s207, %s209
      %p216 = scmp.eq.s32.totalorder %s31, 1
      %p217 = por %p215, %p216
      %p218 = scmp.ne.s32.totalorder %s209, %s210
      %p219 = scmp.eq.s32.totalorder %s31, 0
      %p220 = por %p218, %p219
      %p221 = scmp.ne.s32.totalorder %s209, %s210
      %p222 = scmp.eq.s32.totalorder %s32, 1
      %p223 = por %p221, %p222
      %p225 = scmp.ne.s32.totalorder %s210, %s224
      %p226 = scmp.eq.s32.totalorder %s32, 0
      %p227 = por %p225, %p226
      %s229 = sadd.s32 %s228, 1
      %p232 = scmp.eq.s32.totalorder %s26, 1
      %p233 = scmp.ne.s32.totalorder %s228, %s230
      %p234 = scmp.eq.s32.totalorder %s26, 0
      %p235 = por %p233, %p234
      %p236 = scmp.ne.s32.totalorder %s228, %s230
      %p237 = scmp.eq.s32.totalorder %s31, 1
      %p238 = por %p236, %p237
      %p239 = scmp.ne.s32.totalorder %s230, %s231
      %p240 = scmp.eq.s32.totalorder %s31, 0
      %p241 = por %p239, %p240
      %p242 = scmp.ne.s32.totalorder %s230, %s231
      %p243 = scmp.eq.s32.totalorder %s32, 1
      %p244 = por %p242, %p243
      %p246 = scmp.ne.s32.totalorder %s231, %s245
      %p247 = scmp.eq.s32.totalorder %s32, 0
      %p248 = por %p246, %p247
      %s250 = sadd.s32 %s249, 1
      %p253 = scmp.eq.s32.totalorder %s26, 1
      %p254 = scmp.ne.s32.totalorder %s249, %s251
      %p255 = scmp.eq.s32.totalorder %s26, 0
      %p256 = por %p254, %p255
      %p257 = scmp.ne.s32.totalorder %s249, %s251
      %p258 = scmp.eq.s32.totalorder %s31, 1
      %p259 = por %p257, %p258
      %p260 = scmp.ne.s32.totalorder %s251, %s252
      %p261 = scmp.eq.s32.totalorder %s31, 0
      %p262 = por %p260, %p261
      %p263 = scmp.ne.s32.totalorder %s251, %s252
      %p264 = scmp.eq.s32.totalorder %s32, 1
      %p265 = por %p263, %p264
      %p267 = scmp.ne.s32.totalorder %s252, %s266
      %p268 = scmp.eq.s32.totalorder %s32, 0
      %p269 = por %p267, %p268
      %s271 = sadd.s32 %s270, 1
      %p274 = scmp.eq.s32.totalorder %s26, 1
      %p275 = scmp.ne.s32.totalorder %s270, %s272
      %p276 = scmp.eq.s32.totalorder %s26, 0
      %p277 = por %p275, %p276
      %p278 = scmp.ne.s32.totalorder %s270, %s272
      %p279 = scmp.eq.s32.totalorder %s31, 1
      %p280 = por %p278, %p279
      %p281 = scmp.ne.s32.totalorder %s272, %s273
      %p282 = scmp.eq.s32.totalorder %s31, 0
      %p283 = por %p281, %p282
      %p284 = scmp.ne.s32.totalorder %s272, %s273
      %p285 = scmp.eq.s32.totalorder %s32, 1
      %p286 = por %p284, %p285
      %p288 = scmp.ne.s32.totalorder %s273, %s287
      %p289 = scmp.eq.s32.totalorder %s32, 0
      %p290 = por %p288, %p289
      %s292 = sadd.s32 %s291, 1
      %p295 = scmp.eq.s32.totalorder %s26, 1
      %p296 = scmp.ne.s32.totalorder %s291, %s293
      %p297 = scmp.eq.s32.totalorder %s26, 0
      %p298 = por %p296, %p297
      %p299 = scmp.ne.s32.totalorder %s291, %s293
      %p300 = scmp.eq.s32.totalorder %s31, 1
      %p301 = por %p299, %p300
      %p302 = scmp.ne.s32.totalorder %s293, %s294
      %p303 = scmp.eq.s32.totalorder %s31, 0
      %p304 = por %p302, %p303
      %p305 = scmp.ne.s32.totalorder %s293, %s294
      %p306 = scmp.eq.s32.totalorder %s32, 1
      %p307 = por %p305, %p306
      %p309 = scmp.ne.s32.totalorder %s294, %s308
      %p310 = scmp.eq.s32.totalorder %s32, 0
      %p311 = por %p309, %p310
      %s313 = sadd.s32 %s312, 1
      %p316 = scmp.eq.s32.totalorder %s26, 1
      %p317 = scmp.ne.s32.totalorder %s312, %s314
      %p318 = scmp.eq.s32.totalorder %s26, 0
      %p319 = por %p317, %p318
      %p320 = scmp.ne.s32.totalorder %s312, %s314
      %p321 = scmp.eq.s32.totalorder %s31, 1
      %p322 = por %p320, %p321
      %p323 = scmp.ne.s32.totalorder %s314, %s315
      %p324 = scmp.eq.s32.totalorder %s31, 0
      %p325 = por %p323, %p324
      %p326 = scmp.ne.s32.totalorder %s314, %s315
      %p327 = scmp.eq.s32.totalorder %s32, 1
      %p328 = por %p326, %p327
      %p330 = scmp.ne.s32.totalorder %s315, %s329
      %p331 = scmp.eq.s32.totalorder %s32, 0
      %p332 = por %p330, %p331
      %s334 = sadd.s32 %s333, 1
      %p337 = scmp.eq.s32.totalorder %s26, 1
      %p338 = scmp.ne.s32.totalorder %s333, %s335
      %p339 = scmp.eq.s32.totalorder %s26, 0
      %p340 = por %p338, %p339
      %p341 = scmp.ne.s32.totalorder %s333, %s335
      %p342 = scmp.eq.s32.totalorder %s31, 1
      %p343 = por %p341, %p342
      %p344 = scmp.ne.s32.totalorder %s335, %s336
      %p345 = scmp.eq.s32.totalorder %s31, 0
      %p346 = por %p344, %p345
      %p347 = scmp.ne.s32.totalorder %s335, %s336
      %p348 = scmp.eq.s32.totalorder %s32, 1
      %p349 = por %p347, %p348
      %p351 = scmp.ne.s32.totalorder %s336, %s350
      %p352 = scmp.eq.s32.totalorder %s32, 0
      %p353 = por %p351, %p352
      %s355 = sadd.s32 %s354, 1
      %p358 = scmp.eq.s32.totalorder %s26, 1
      %p359 = scmp.ne.s32.totalorder %s354, %s356
      %p360 = scmp.eq.s32.totalorder %s26, 0
      %p361 = por %p359, %p360
      %p362 = scmp.ne.s32.totalorder %s354, %s356
      %p363 = scmp.eq.s32.totalorder %s31, 1
      %p364 = por %p362, %p363
      %p365 = scmp.ne.s32.totalorder %s356, %s357
      %p366 = scmp.eq.s32.totalorder %s31, 0
      %p367 = por %p365, %p366
      %p368 = scmp.ne.s32.totalorder %s356, %s357
      %p369 = scmp.eq.s32.totalorder %s32, 1
      %p370 = por %p368, %p369
      %p372 = scmp.ne.s32.totalorder %s357, %s371
      %p373 = scmp.eq.s32.totalorder %s32, 0
      %p374 = por %p372, %p373
      %s376 = sadd.s32 %s375, 1
      %p379 = scmp.eq.s32.totalorder %s26, 1
      %p380 = scmp.ne.s32.totalorder %s375, %s377
      %p381 = scmp.eq.s32.totalorder %s26, 0
      %p382 = por %p380, %p381
      %p383 = scmp.ne.s32.totalorder %s375, %s377
      %p384 = scmp.eq.s32.totalorder %s31, 1
      %p385 = por %p383, %p384
      %p386 = scmp.ne.s32.totalorder %s377, %s378
      %p387 = scmp.eq.s32.totalorder %s31, 0
      %p388 = por %p386, %p387
      %p389 = scmp.ne.s32.totalorder %s377, %s378
      %p390 = scmp.eq.s32.totalorder %s32, 1
      %p391 = por %p389, %p390
      %p393 = scmp.ne.s32.totalorder %s378, %s392
      %p394 = scmp.eq.s32.totalorder %s32, 0
      %p395 = por %p393, %p394
      %s396 = ssub.s32 %s26, %s33
      %p397 = scmp.eq.s32.totalorder %s396, 0
      %s399 = sadd.s32 %s398, 1
      %s400 = scalar_select %p397, %s398, %s399
      %p403 = pneg %p397
      %p404 = scmp.eq.s32.totalorder %s26, 1
      %p405 = por %p403, %p404
      %p406 = scmp.ne.s32.totalorder %s398, %s401
      %p407 = scmp.eq.s32.totalorder %s26, 0
      %p408 = por %p406, %p407
      %p409 = scmp.ne.s32.totalorder %s398, %s401
      %p410 = scmp.eq.s32.totalorder %s31, 1
      %p411 = por %p409, %p410
      %p412 = scmp.ne.s32.totalorder %s401, %s402
      %p413 = scmp.eq.s32.totalorder %s31, 0
      %p414 = por %p412, %p413
      %p415 = scmp.ne.s32.totalorder %s401, %s402
      %p416 = scmp.eq.s32.totalorder %s32, 1
      %p417 = por %p415, %p416
      %p419 = scmp.ne.s32.totalorder %s402, %s418
      %p420 = scmp.eq.s32.totalorder %s32, 0
      %p421 = por %p419, %p420
      %p422 = scmp.le.s32.totalorder 1, %s26
      %p423 = scmp.lt.s32.totalorder %s26, 3
      %p424 = pnand %p422, %p423
      %p425 = pneg %p424
      // Predicated region
      $region9: #{tpu_custom_call.1} parent=5 // pred_check
        _
      $region10: #{tpu_custom_call.1} parent=5 // pred_check_branch
        %427 = sbr.rel (%p424) target = $region12
      $region11: #{tpu_custom_call.1} parent=5 // pred_region
        %s428 = ssub.s32 %s26, 1
        // Predicated region
        $region13: #{tpu_custom_call.1} parent=11 // pred_check
          %p429 = pneg %p73
        $region14: #{tpu_custom_call.1} parent=11 // pred_check_branch
          %431 = sbr.rel (%p429) target = $region16
        $region15: #{tpu_custom_call.1} parent=11 // pred_region
          _
        $region16: #{tpu_custom_call.1} parent=11 // pred_fallthru
          _
        // Predicated region
        $region17: #{tpu_custom_call.1} parent=11 // pred_check
          %p432 = pneg %p94
        $region18: #{tpu_custom_call.1} parent=11 // pred_check_branch
          %434 = sbr.rel (%p432) target = $region20
        $region19: #{tpu_custom_call.1} parent=11 // pred_region
          _
        $region20: #{tpu_custom_call.1} parent=11 // pred_fallthru
          _
        // Predicated region
        $region21: #{tpu_custom_call.1} parent=11 // pred_check
          %p435 = pneg %p115
        $region22: #{tpu_custom_call.1} parent=11 // pred_check_branch
          %437 = sbr.rel (%p435) target = $region24
        $region23: #{tpu_custom_call.1} parent=11 // pred_region
          _
        $region24: #{tpu_custom_call.1} parent=11 // pred_fallthru
          _
        // Predicated region
        $region25: #{tpu_custom_call.1} parent=11 // pred_check
          %p438 = pneg %p136
        $region26: #{tpu_custom_call.1} parent=11 // pred_check_branch
          %440 = sbr.rel (%p438) target = $region28
        $region27: #{tpu_custom_call.1} parent=11 // pred_region
          _
        $region28: #{tpu_custom_call.1} parent=11 // pred_fallthru
          _
        // Predicated region
        $region29: #{tpu_custom_call.1} parent=11 // pred_check
          %p441 = pneg %p157
        $region30: #{tpu_custom_call.1} parent=11 // pred_check_branch
          %443 = sbr.rel (%p441) target = $region32
        $region31: #{tpu_custom_call.1} parent=11 // pred_region
          _
        $region32: #{tpu_custom_call.1} parent=11 // pred_fallthru
          _
        // Predicated region
        $region33: #{tpu_custom_call.1} parent=11 // pred_check
          %p444 = pneg %p178
        $region34: #{tpu_custom_call.1} parent=11 // pred_check_branch
          %446 = sbr.rel (%p444) target = $region36
        $region35: #{tpu_custom_call.1} parent=11 // pred_region
          _
        $region36: #{tpu_custom_call.1} parent=11 // pred_fallthru
          _
        // Predicated region
        $region37: #{tpu_custom_call.1} parent=11 // pred_check
          %p447 = pneg %p199
        $region38: #{tpu_custom_call.1} parent=11 // pred_check_branch
          %449 = sbr.rel (%p447) target = $region40
        $region39: #{tpu_custom_call.1} parent=11 // pred_region
          _
        $region40: #{tpu_custom_call.1} parent=11 // pred_fallthru
          _
        // Predicated region
        $region41: #{tpu_custom_call.1} parent=11 // pred_check
          %p450 = pneg %p220
        $region42: #{tpu_custom_call.1} parent=11 // pred_check_branch
          %452 = sbr.rel (%p450) target = $region44
        $region43: #{tpu_custom_call.1} parent=11 // pred_region
          _
        $region44: #{tpu_custom_call.1} parent=11 // pred_fallthru
          _
        // Predicated region
        $region45: #{tpu_custom_call.1} parent=11 // pred_check
          %p453 = pneg %p241
        $region46: #{tpu_custom_call.1} parent=11 // pred_check_branch
          %455 = sbr.rel (%p453) target = $region48
        $region47: #{tpu_custom_call.1} parent=11 // pred_region
          _
        $region48: #{tpu_custom_call.1} parent=11 // pred_fallthru
          _
        // Predicated region
        $region49: #{tpu_custom_call.1} parent=11 // pred_check
          %p456 = pneg %p262
        $region50: #{tpu_custom_call.1} parent=11 // pred_check_branch
          %458 = sbr.rel (%p456) target = $region52
        $region51: #{tpu_custom_call.1} parent=11 // pred_region
          _
        $region52: #{tpu_custom_call.1} parent=11 // pred_fallthru
          _
        // Predicated region
        $region53: #{tpu_custom_call.1} parent=11 // pred_check
          %p459 = pneg %p283
        $region54: #{tpu_custom_call.1} parent=11 // pred_check_branch
          %461 = sbr.rel (%p459) target = $region56
        $region55: #{tpu_custom_call.1} parent=11 // pred_region
          _
        $region56: #{tpu_custom_call.1} parent=11 // pred_fallthru
          _
        // Predicated region
        $region57: #{tpu_custom_call.1} parent=11 // pred_check
          %p462 = pneg %p304
        $region58: #{tpu_custom_call.1} parent=11 // pred_check_branch
          %464 = sbr.rel (%p462) target = $region60
        $region59: #{tpu_custom_call.1} parent=11 // pred_region
          _
        $region60: #{tpu_custom_call.1} parent=11 // pred_fallthru
          _
        // Predicated region
        $region61: #{tpu_custom_call.1} parent=11 // pred_check
          %p465 = pneg %p325
        $region62: #{tpu_custom_call.1} parent=11 // pred_check_branch
          %467 = sbr.rel (%p465) target = $region64
        $region63: #{tpu_custom_call.1} parent=11 // pred_region
          _
        $region64: #{tpu_custom_call.1} parent=11 // pred_fallthru
          _
        // Predicated region
        $region65: #{tpu_custom_call.1} parent=11 // pred_check
          %p468 = pneg %p346
        $region66: #{tpu_custom_call.1} parent=11 // pred_check_branch
          %470 = sbr.rel (%p468) target = $region68
        $region67: #{tpu_custom_call.1} parent=11 // pred_region
          _
        $region68: #{tpu_custom_call.1} parent=11 // pred_fallthru
          _
        // Predicated region
        $region69: #{tpu_custom_call.1} parent=11 // pred_check
          %p471 = pneg %p367
        $region70: #{tpu_custom_call.1} parent=11 // pred_check_branch
          %473 = sbr.rel (%p471) target = $region72
        $region71: #{tpu_custom_call.1} parent=11 // pred_region
          _
        $region72: #{tpu_custom_call.1} parent=11 // pred_fallthru
          _
        // Predicated region
        $region73: #{tpu_custom_call.1} parent=11 // pred_check
          %p474 = pneg %p388
        $region74: #{tpu_custom_call.1} parent=11 // pred_check_branch
          %476 = sbr.rel (%p474) target = $region76
        $region75: #{tpu_custom_call.1} parent=11 // pred_region
          _
        $region76: #{tpu_custom_call.1} parent=11 // pred_fallthru
          _
      $region12: #{tpu_custom_call.1} parent=5 // pred_fallthru
        _
      %p477 = scmp.lt.s32.totalorder %s26, 2
      // Predicated region
      $region77: #{tpu_custom_call.1} parent=5 // pred_check
        %p478 = pneg %p477
      $region78: #{tpu_custom_call.1} parent=5 // pred_check_branch
        %480 = sbr.rel (%p478) target = $region80
      $region79: #{tpu_custom_call.1} parent=5 // pred_region
        // Predicated region
        $region81: #{tpu_custom_call.1} parent=79 // pred_check
          %p481 = pneg %p46
        $region82: #{tpu_custom_call.1} parent=79 // pred_check_branch
          %483 = sbr.rel (%p481) target = $region84
        $region83: #{tpu_custom_call.1} parent=79 // pred_region
          %p484 = scmp.lt.s32.totalorder %s26, 1
          %s485 = scalar_select %p484, %s26, 1
          %s486 = smul.addr %s485, 32
          %s487 = smul.addr %s486, 8
          %s488 = scalar_lea.vmem %s0, %s487
        $region84: #{tpu_custom_call.1} parent=79 // pred_fallthru
          _
      $region80: #{tpu_custom_call.1} parent=5 // pred_fallthru
        _
      %p489 = scmp.le.s32.totalorder 1, %s26
      %p490 = scmp.lt.s32.totalorder %s26, 3
      %p491 = pnand %p489, %p490
      %p492 = pneg %p491
      // Predicated region
      $region85: #{tpu_custom_call.1} parent=5 // pred_check
        _
      $region86: #{tpu_custom_call.1} parent=5 // pred_check_branch
        %494 = sbr.rel (%p491) target = $region88
      $region87: #{tpu_custom_call.1} parent=5 // pred_region
        %s495 = ssub.s32 %s26, 1
        %p496 = scmp.lt.s32.totalorder %s31, 1
        %s497 = scalar_select %p496, %s31, 1
        %s498 = smul.addr %s497, 32
        %s499 = smul.addr %s498, 8
        %s500 = scalar_lea.vmem %s0, %s499
        %p501 = pneg %p52
        %p502 = pneg %p49
        %p503 = pneg %p73
        %p504 = pneg %p70
        %p505 = pneg %p94
        %p506 = pneg %p91
        %p507 = pneg %p115
        %p508 = pneg %p112
        %p509 = pneg %p136
        %p510 = pneg %p133
        %p511 = pneg %p157
        %p512 = pneg %p154
        %p513 = pneg %p178
        %p514 = pneg %p175
        %p515 = pneg %p199
        %p516 = pneg %p196
        %p517 = pneg %p220
        %p518 = pneg %p217
        %p519 = pneg %p241
        %p520 = pneg %p238
        %p521 = pneg %p262
        %p522 = pneg %p259
        %p523 = pneg %p283
        %p524 = pneg %p280
        %p525 = pneg %p304
        %p526 = pneg %p301
        %p527 = pneg %p325
        %p528 = pneg %p322
        %p529 = pneg %p346
        %p530 = pneg %p343
        %p531 = pneg %p367
        %p532 = pneg %p364
        %p533 = pneg %p388
        %p534 = pneg %p385
        %p535 = pneg %p414
        %p536 = pneg %p411
        %s537 = sand.u32 %s401, 1
        %s538 = scalar_lea.sflag [#allocation6], %s537
        %s539 = sand.u32 %s401, 1
        %s540 = smul.addr %s539, 64
        %s541 = scalar_lea.vmem [#allocation5], %s540
        %p542 = scmp.lt.s32.totalorder %s31, 1
        %s543 = scalar_select %p542, %s31, 1
        %s544 = smul.addr %s543, 32
        %s545 = smul.addr %s544, 8
        %s546 = scalar_lea.vmem %s0, %s545
        %v547 = vld [vmem:[%s546] sm:$0xff]
        %v548 = vld [vmem:[%s546 + $0x8] sm:$0xff]
        %v549 = vld [vmem:[%s546 + $0x10] sm:$0xff]
        %v550 = vld [vmem:[%s546 + $0x18] sm:$0xff]
        %v551 = vld [vmem:[%s546 + $0x20] sm:$0xff]
        %v552 = vld [vmem:[%s546 + $0x28] sm:$0xff]
        %v553 = vld [vmem:[%s546 + $0x30] sm:$0xff]
        %v554 = vld [vmem:[%s546 + $0x38] sm:$0xff]
        %v555 = vld [vmem:[%s546 + $0x40] sm:$0xff]
        %v556 = vld [vmem:[%s546 + $0x48] sm:$0xff]
        %v557 = vld [vmem:[%s546 + $0x50] sm:$0xff]
        %v558 = vld [vmem:[%s546 + $0x58] sm:$0xff]
        %v559 = vld [vmem:[%s546 + $0x60] sm:$0xff]
        %v560 = vld [vmem:[%s546 + $0x68] sm:$0xff]
        %v561 = vld [vmem:[%s546 + $0x70] sm:$0xff]
        %v562 = vld [vmem:[%s546 + $0x78] sm:$0xff]
        %v563 = vld [vmem:[%s546 + $0x80] sm:$0xff]
        %v564 = vld [vmem:[%s546 + $0x88] sm:$0xff]
        %v565 = vld [vmem:[%s546 + $0x90] sm:$0xff]
        %v566 = vld [vmem:[%s546 + $0x98] sm:$0xff]
        %v567 = vld [vmem:[%s546 + $0xa0] sm:$0xff]
        %v568 = vld [vmem:[%s546 + $0xa8] sm:$0xff]
        %v569 = vld [vmem:[%s546 + $0xb0] sm:$0xff]
        %v570 = vld [vmem:[%s546 + $0xb8] sm:$0xff]
        %v571 = vld [vmem:[%s546 + $0xc0] sm:$0xff]
        %v572 = vld [vmem:[%s546 + $0xc8] sm:$0xff]
        %v573 = vld [vmem:[%s546 + $0xd0] sm:$0xff]
        %v574 = vld [vmem:[%s546 + $0xd8] sm:$0xff]
        %v575 = vld [vmem:[%s546 + $0xe0] sm:$0xff]
        %v576 = vld [vmem:[%s546 + $0xe8] sm:$0xff]
        %v577 = vld [vmem:[%s546 + $0xf0] sm:$0xff]
        %v578 = vld [vmem:[%s546 + $0xf8] sm:$0xff]
        %v579 = vmax.f32 %v547, 0.0
        %v580 = vmax.f32 %v548, 0.0
        %v581 = vmax.f32 %v549, 0.0
        %v582 = vmax.f32 %v550, 0.0
        %v583 = vmax.f32 %v551, 0.0
        %v584 = vmax.f32 %v552, 0.0
        %v585 = vmax.f32 %v553, 0.0
        %v586 = vmax.f32 %v554, 0.0
        %v587 = vmax.f32 %v555, 0.0
        %v588 = vmax.f32 %v556, 0.0
        %v589 = vmax.f32 %v557, 0.0
        %v590 = vmax.f32 %v558, 0.0
        %v591 = vmax.f32 %v559, 0.0
        %v592 = vmax.f32 %v560, 0.0
        %v593 = vmax.f32 %v561, 0.0
        %v594 = vmax.f32 %v562, 0.0
        %v595 = vmax.f32 %v563, 0.0
        %v596 = vmax.f32 %v564, 0.0
        %v597 = vmax.f32 %v565, 0.0
        %v598 = vmax.f32 %v566, 0.0
        %v599 = vmax.f32 %v567, 0.0
        %v600 = vmax.f32 %v568, 0.0
        %v601 = vmax.f32 %v569, 0.0
        %v602 = vmax.f32 %v570, 0.0
        %v603 = vmax.f32 %v571, 0.0
        %v604 = vmax.f32 %v572, 0.0
        %v605 = vmax.f32 %v573, 0.0
        %v606 = vmax.f32 %v574, 0.0
        %v607 = vmax.f32 %v575, 0.0
        %v608 = vmax.f32 %v576, 0.0
        %v609 = vmax.f32 %v577, 0.0
        %v610 = vmax.f32 %v578, 0.0
        %vm611 = vcmask 31744
        %612 = vst.msk [vmem:[#allocation2] sm:$0xff] %vm611, 0.0
        %613 = vst.msk [vmem:[#allocation2 + $0x8] sm:$0xff] %vm611, 0.0
        %vm614 = vcmask 25600
        %615 = vst.msk [vmem:[#allocation2 + $0x10] sm:$0x3] %vm614, 0.0
        %616 = vst.msk [vmem:[#allocation2 + $0x18] sm:$0xff] %vm611, 0.0
        %617 = vst.msk [vmem:[#allocation2 + $0x20] sm:$0xff] %vm611, 0.0
        %618 = vst.msk [vmem:[#allocation2 + $0x28] sm:$0x3] %vm614, 0.0
        %619 = vst.msk [vmem:[#allocation2 + $0x30] sm:$0xff] %vm611, 0.0
        %620 = vst.msk [vmem:[#allocation2 + $0x38] sm:$0xff] %vm611, 0.0
        %621 = vst.msk [vmem:[#allocation2 + $0x40] sm:$0x3] %vm614, 0.0
        %622 = vst.msk [vmem:[#allocation2 + $0x48] sm:$0xff] %vm611, 0.0
        %623 = vst.msk [vmem:[#allocation2 + $0x50] sm:$0xff] %vm611, 0.0
        %624 = vst.msk [vmem:[#allocation2 + $0x58] sm:$0x3] %vm614, 0.0
        %625 = vst.msk [vmem:[#allocation2 + $0x60] sm:$0xff] %vm611, 0.0
        %626 = vst.msk [vmem:[#allocation2 + $0x68] sm:$0xff] %vm611, 0.0
        %627 = vst.msk [vmem:[#allocation2 + $0x70] sm:$0x3] %vm614, 0.0
        %628 = vst.msk [vmem:[#allocation2 + $0x78] sm:$0xff] %vm611, 0.0
        %629 = vst.msk [vmem:[#allocation2 + $0x80] sm:$0xff] %vm611, 0.0
        %630 = vst.msk [vmem:[#allocation2 + $0x88] sm:$0x3] %vm614, 0.0
        %631 = vst.msk [vmem:[#allocation2 + $0x90] sm:$0xff] %vm611, 0.0
        %632 = vst.msk [vmem:[#allocation2 + $0x98] sm:$0xff] %vm611, 0.0
        %633 = vst.msk [vmem:[#allocation2 + $0xa0] sm:$0x3] %vm614, 0.0
        %634 = vst.msk [vmem:[#allocation2 + $0xa8] sm:$0xff] %vm611, 0.0
        %635 = vst.msk [vmem:[#allocation2 + $0xb0] sm:$0xff] %vm611, 0.0
        %636 = vst.msk [vmem:[#allocation2 + $0xb8] sm:$0x3] %vm614, 0.0
        %637 = vst.msk [vmem:[#allocation2 + $0xc0] sm:$0xff] %vm611, 0.0
        %638 = vst.msk [vmem:[#allocation2 + $0xc8] sm:$0xff] %vm611, 0.0
        %639 = vst.msk [vmem:[#allocation2 + $0xd0] sm:$0x3] %vm614, 0.0
        %640 = vst.msk [vmem:[#allocation2 + $0xd8] sm:$0xff] %vm611, 0.0
        %641 = vst.msk [vmem:[#allocation2 + $0xe0] sm:$0xff] %vm611, 0.0
        %642 = vst.msk [vmem:[#allocation2 + $0xe8] sm:$0x3] %vm614, 0.0
        %643 = vst.msk [vmem:[#allocation2 + $0xf0] sm:$0xff] %vm611, 0.0
        %644 = vst.msk [vmem:[#allocation2 + $0xf8] sm:$0xff] %vm611, 0.0
        %645 = vst.msk [vmem:[#allocation2 + $0x100] sm:$0x3] %vm614, 0.0
        %646 = vst.msk [vmem:[#allocation2 + $0x108] sm:$0xff] %vm611, 0.0
        %647 = vst.msk [vmem:[#allocation2 + $0x110] sm:$0xff] %vm611, 0.0
        %648 = vst.msk [vmem:[#allocation2 + $0x118] sm:$0x3] %vm614, 0.0
        %649 = vst.msk [vmem:[#allocation2 + $0x120] sm:$0xff] %vm611, 0.0
        %650 = vst.msk [vmem:[#allocation2 + $0x128] sm:$0xff] %vm611, 0.0
        %651 = vst.msk [vmem:[#allocation2 + $0x130] sm:$0x3] %vm614, 0.0
        %652 = vst.msk [vmem:[#allocation2 + $0x138] sm:$0xff] %vm611, 0.0
        %653 = vst.msk [vmem:[#allocation2 + $0x140] sm:$0xff] %vm611, 0.0
        %654 = vst.msk [vmem:[#allocation2 + $0x148] sm:$0x3] %vm614, 0.0
        %655 = vst.msk [vmem:[#allocation2 + $0x150] sm:$0xff] %vm611, 0.0
        %656 = vst.msk [vmem:[#allocation2 + $0x158] sm:$0xff] %vm611, 0.0
        %657 = vst.msk [vmem:[#allocation2 + $0x160] sm:$0x3] %vm614, 0.0
        %658 = vst.msk [vmem:[#allocation2 + $0x168] sm:$0xff] %vm611, 0.0
        %659 = vst.msk [vmem:[#allocation2 + $0x170] sm:$0xff] %vm611, 0.0
        %660 = vst.msk [vmem:[#allocation2 + $0x178] sm:$0x3] %vm614, 0.0
        %661 = vst.msk [vmem:[#allocation2 + $0x180] sm:$0xff] %vm611, 0.0
        %662 = vst.msk [vmem:[#allocation2 + $0x188] sm:$0xff] %vm611, 0.0
        %663 = vst.msk [vmem:[#allocation2 + $0x190] sm:$0x3] %vm614, 0.0
        %664 = vst.msk [vmem:[#allocation2 + $0x198] sm:$0xff] %vm611, 0.0
        %665 = vst.msk [vmem:[#allocation2 + $0x1a0] sm:$0xff] %vm611, 0.0
        %666 = vst.msk [vmem:[#allocation2 + $0x1a8] sm:$0x3] %vm614, 0.0
        %s667 = scalar_lea.vmem [#allocation2], 24
        %668 = vst.msk [vmem:[%s667 + $0x1] sm:$0xff] %vm611, %v579
        %669 = vst.msk [vmem:[%s667 + $0x9] sm:$0xff] %vm611, %v580
        %670 = vst.msk [vmem:[%s667 + $0x19] sm:$0xff] %vm611, %v581
        %671 = vst.msk [vmem:[%s667 + $0x21] sm:$0xff] %vm611, %v582
        %672 = vst.msk [vmem:[%s667 + $0x31] sm:$0xff] %vm611, %v583
        %673 = vst.msk [vmem:[%s667 + $0x39] sm:$0xff] %vm611, %v584
        %674 = vst.msk [vmem:[%s667 + $0x49] sm:$0xff] %vm611, %v585
        %675 = vst.msk [vmem:[%s667 + $0x51] sm:$0xff] %vm611, %v586
        %676 = vst.msk [vmem:[%s667 + $0x61] sm:$0xff] %vm611, %v587
        %677 = vst.msk [vmem:[%s667 + $0x69] sm:$0xff] %vm611, %v588
        %678 = vst.msk [vmem:[%s667 + $0x79] sm:$0xff] %vm611, %v589
        %679 = vst.msk [vmem:[%s667 + $0x81] sm:$0xff] %vm611, %v590
        %680 = vst.msk [vmem:[%s667 + $0x91] sm:$0xff] %vm611, %v591
        %681 = vst.msk [vmem:[%s667 + $0x99] sm:$0xff] %vm611, %v592
        %682 = vst.msk [vmem:[%s667 + $0xa9] sm:$0xff] %vm611, %v593
        %683 = vst.msk [vmem:[%s667 + $0xb1] sm:$0xff] %vm611, %v594
        %684 = vst.msk [vmem:[%s667 + $0xc1] sm:$0xff] %vm611, %v595
        %685 = vst.msk [vmem:[%s667 + $0xc9] sm:$0xff] %vm611, %v596
        %686 = vst.msk [vmem:[%s667 + $0xd9] sm:$0xff] %vm611, %v597
        %687 = vst.msk [vmem:[%s667 + $0xe1] sm:$0xff] %vm611, %v598
        %688 = vst.msk [vmem:[%s667 + $0xf1] sm:$0xff] %vm611, %v599
        %689 = vst.msk [vmem:[%s667 + $0xf9] sm:$0xff] %vm611, %v600
        %690 = vst.msk [vmem:[%s667 + $0x109] sm:$0xff] %vm611, %v601
        %691 = vst.msk [vmem:[%s667 + $0x111] sm:$0xff] %vm611, %v602
        %692 = vst.msk [vmem:[%s667 + $0x121] sm:$0xff] %vm611, %v603
        %693 = vst.msk [vmem:[%s667 + $0x129] sm:$0xff] %vm611, %v604
        %694 = vst.msk [vmem:[%s667 + $0x139] sm:$0xff] %vm611, %v605
        %695 = vst.msk [vmem:[%s667 + $0x141] sm:$0xff] %vm611, %v606
        %696 = vst.msk [vmem:[%s667 + $0x151] sm:$0xff] %vm611, %v607
        %697 = vst.msk [vmem:[%s667 + $0x159] sm:$0xff] %vm611, %v608
        %698 = vst.msk [vmem:[%s667 + $0x169] sm:$0xff] %vm611, %v609
        %699 = vst.msk [vmem:[%s667 + $0x171] sm:$0xff] %vm611, %v610
        %v700 = vld [vmem:[%s1] sm:$0xff]
        %v701 = vld [vmem:[%s1 + $0x8] sm:$0x1]
        %v702 = vld [vmem:[#allocation2] sm:$0xff]
        %v703 = vld [vmem:[#allocation2 + $0x8] sm:$0xff]
        %v704 = vld [vmem:[#allocation2 + $0x18] sm:$0xff]
        %v705 = vld [vmem:[#allocation2 + $0x20] sm:$0xff]
        %v706 = vld [vmem:[#allocation2 + $0x30] sm:$0xff]
        %v707 = vld [vmem:[#allocation2 + $0x38] sm:$0xff]
        %v708 = vld [vmem:[#allocation2 + $0x48] sm:$0xff]
        %v709 = vld [vmem:[#allocation2 + $0x50] sm:$0xff]
        %v710 = vld [vmem:[#allocation2 + $0x60] sm:$0xff]
        %v711 = vld [vmem:[#allocation2 + $0x68] sm:$0xff]
        %v712 = vld [vmem:[#allocation2 + $0x78] sm:$0xff]
        %v713 = vld [vmem:[#allocation2 + $0x80] sm:$0xff]
        %v714 = vld [vmem:[#allocation2 + $0x90] sm:$0xff]
        %v715 = vld [vmem:[#allocation2 + $0x98] sm:$0xff]
        %v716 = vld [vmem:[#allocation2 + $0xa8] sm:$0xff]
        %v717 = vld [vmem:[#allocation2 + $0xb0] sm:$0xff]
        %v718 = vld [vmem:[#allocation2 + $0xc0] sm:$0xff]
        %v719 = vld [vmem:[#allocation2 + $0xc8] sm:$0xff]
        %v720 = vld [vmem:[#allocation2 + $0xd8] sm:$0xff]
        %v721 = vld [vmem:[#allocation2 + $0xe0] sm:$0xff]
        %v722 = vld [vmem:[#allocation2 + $0xf0] sm:$0xff]
        %v723 = vld [vmem:[#allocation2 + $0xf8] sm:$0xff]
        %v724 = vld [vmem:[#allocation2 + $0x108] sm:$0xff]
        %v725 = vld [vmem:[#allocation2 + $0x110] sm:$0xff]
        %v726 = vld [vmem:[#allocation2 + $0x120] sm:$0xff]
        %v727 = vld [vmem:[#allocation2 + $0x128] sm:$0xff]
        %v728 = vld [vmem:[#allocation2 + $0x138] sm:$0xff]
        %v729 = vld [vmem:[#allocation2 + $0x140] sm:$0xff]
        %v730 = vld [vmem:[#allocation2 + $0x150] sm:$0xff]
        %v731 = vld [vmem:[#allocation2 + $0x158] sm:$0xff]
        %v732 = vld [vmem:[#allocation2 + $0x168] sm:$0xff]
        %v733 = vld [vmem:[#allocation2 + $0x170] sm:$0xff]
        %v734 = vlaneseq
        %v735 = vshrl.u32 %v734, 7
        %v736 = vsub.s32 0, %v735
        %v737 = vrot.slane %v700, %v736
        %v738 = vmul.f32 %v702, %v737
        %v739 = vmul.f32 %v703, %v737
        %v740 = vmul.f32 %v704, %v737
        %v741 = vmul.f32 %v705, %v737
        %v742 = vmul.f32 %v706, %v737
        %v743 = vmul.f32 %v707, %v737
        %v744 = vmul.f32 %v708, %v737
        %v745 = vmul.f32 %v709, %v737
        %v746 = vmul.f32 %v710, %v737
        %v747 = vmul.f32 %v711, %v737
        %v748 = vmul.f32 %v712, %v737
        %v749 = vmul.f32 %v713, %v737
        %v750 = vmul.f32 %v714, %v737
        %v751 = vmul.f32 %v715, %v737
        %v752 = vmul.f32 %v716, %v737
        %v753 = vmul.f32 %v717, %v737
        %v754 = vmul.f32 %v718, %v737
        %v755 = vmul.f32 %v719, %v737
        %v756 = vmul.f32 %v720, %v737
        %v757 = vmul.f32 %v721, %v737
        %v758 = vmul.f32 %v722, %v737
        %v759 = vmul.f32 %v723, %v737
        %v760 = vmul.f32 %v724, %v737
        %v761 = vmul.f32 %v725, %v737
        %v762 = vmul.f32 %v726, %v737
        %v763 = vmul.f32 %v727, %v737
        %v764 = vmul.f32 %v728, %v737
        %v765 = vmul.f32 %v729, %v737
        %v766 = vmul.f32 %v730, %v737
        %v767 = vmul.f32 %v731, %v737
        %v768 = vmul.f32 %v732, %v737
        %v769 = vmul.f32 %v733, %v737
        %v770 = vld [vmem:[#allocation2 + $0x1] sm:$0xff]
        %v771 = vld [vmem:[#allocation2 + $0x9] sm:$0xff]
        %v772 = vld [vmem:[#allocation2 + $0x19] sm:$0xff]
        %v773 = vld [vmem:[#allocation2 + $0x21] sm:$0xff]
        %v774 = vld [vmem:[#allocation2 + $0x31] sm:$0xff]
        %v775 = vld [vmem:[#allocation2 + $0x39] sm:$0xff]
        %v776 = vld [vmem:[#allocation2 + $0x49] sm:$0xff]
        %v777 = vld [vmem:[#allocation2 + $0x51] sm:$0xff]
        %v778 = vld [vmem:[#allocation2 + $0x61] sm:$0xff]
        %v779 = vld [vmem:[#allocation2 + $0x69] sm:$0xff]
        %v780 = vld [vmem:[#allocation2 + $0x79] sm:$0xff]
        %v781 = vld [vmem:[#allocation2 + $0x81] sm:$0xff]
        %v782 = vld [vmem:[#allocation2 + $0x91] sm:$0xff]
        %v783 = vld [vmem:[#allocation2 + $0x99] sm:$0xff]
        %v784 = vld [vmem:[#allocation2 + $0xa9] sm:$0xff]
        %v785 = vld [vmem:[#allocation2 + $0xb1] sm:$0xff]
        %v786 = vld [vmem:[#allocation2 + $0xc1] sm:$0xff]
        %v787 = vld [vmem:[#allocation2 + $0xc9] sm:$0xff]
        %v788 = vld [vmem:[#allocation2 + $0xd9] sm:$0xff]
        %v789 = vld [vmem:[#allocation2 + $0xe1] sm:$0xff]
        %v790 = vld [vmem:[#allocation2 + $0xf1] sm:$0xff]
        %v791 = vld [vmem:[#allocation2 + $0xf9] sm:$0xff]
        %v792 = vld [vmem:[#allocation2 + $0x109] sm:$0xff]
        %v793 = vld [vmem:[#allocation2 + $0x111] sm:$0xff]
        %v794 = vld [vmem:[#allocation2 + $0x121] sm:$0xff]
        %v795 = vld [vmem:[#allocation2 + $0x129] sm:$0xff]
        %v796 = vld [vmem:[#allocation2 + $0x139] sm:$0xff]
        %v797 = vld [vmem:[#allocation2 + $0x141] sm:$0xff]
        %v798 = vld [vmem:[#allocation2 + $0x151] sm:$0xff]
        %v799 = vld [vmem:[#allocation2 + $0x159] sm:$0xff]
        %v800 = vld [vmem:[#allocation2 + $0x169] sm:$0xff]
        %v801 = vld [vmem:[#allocation2 + $0x171] sm:$0xff]
        %v802 = vlaneseq
        %v803 = vshrl.u32 %v802, 7
        %v804 = vsub.s32 1, %v803
        %v805 = vrot.slane %v700, %v804
        %v806 = vmul.f32 %v770, %v805
        %v807 = vmul.f32 %v771, %v805
        %v808 = vmul.f32 %v772, %v805
        %v809 = vmul.f32 %v773, %v805
        %v810 = vmul.f32 %v774, %v805
        %v811 = vmul.f32 %v775, %v805
        %v812 = vmul.f32 %v776, %v805
        %v813 = vmul.f32 %v777, %v805
        %v814 = vmul.f32 %v778, %v805
        %v815 = vmul.f32 %v779, %v805
        %v816 = vmul.f32 %v780, %v805
        %v817 = vmul.f32 %v781, %v805
        %v818 = vmul.f32 %v782, %v805
        %v819 = vmul.f32 %v783, %v805
        %v820 = vmul.f32 %v784, %v805
        %v821 = vmul.f32 %v785, %v805
        %v822 = vmul.f32 %v786, %v805
        %v823 = vmul.f32 %v787, %v805
        %v824 = vmul.f32 %v788, %v805
        %v825 = vmul.f32 %v789, %v805
        %v826 = vmul.f32 %v790, %v805
        %v827 = vmul.f32 %v791, %v805
        %v828 = vmul.f32 %v792, %v805
        %v829 = vmul.f32 %v793, %v805
        %v830 = vmul.f32 %v794, %v805
        %v831 = vmul.f32 %v795, %v805
        %v832 = vmul.f32 %v796, %v805
        %v833 = vmul.f32 %v797, %v805
        %v834 = vmul.f32 %v798, %v805
        %v835 = vmul.f32 %v799, %v805
        %v836 = vmul.f32 %v800, %v805
        %v837 = vmul.f32 %v801, %v805
        %v838 = vadd.f32 %v738, %v806
        %v839 = vadd.f32 %v739, %v807
        %v840 = vadd.f32 %v740, %v808
        %v841 = vadd.f32 %v741, %v809
        %v842 = vadd.f32 %v742, %v810
        %v843 = vadd.f32 %v743, %v811
        %v844 = vadd.f32 %v744, %v812
        %v845 = vadd.f32 %v745, %v813
        %v846 = vadd.f32 %v746, %v814
        %v847 = vadd.f32 %v747, %v815
        %v848 = vadd.f32 %v748, %v816
        %v849 = vadd.f32 %v749, %v817
        %v850 = vadd.f32 %v750, %v818
        %v851 = vadd.f32 %v751, %v819
        %v852 = vadd.f32 %v752, %v820
        %v853 = vadd.f32 %v753, %v821
        %v854 = vadd.f32 %v754, %v822
        %v855 = vadd.f32 %v755, %v823
        %v856 = vadd.f32 %v756, %v824
        %v857 = vadd.f32 %v757, %v825
        %v858 = vadd.f32 %v758, %v826
        %v859 = vadd.f32 %v759, %v827
        %v860 = vadd.f32 %v760, %v828
        %v861 = vadd.f32 %v761, %v829
        %v862 = vadd.f32 %v762, %v830
        %v863 = vadd.f32 %v763, %v831
        %v864 = vadd.f32 %v764, %v832
        %v865 = vadd.f32 %v765, %v833
        %v866 = vadd.f32 %v766, %v834
        %v867 = vadd.f32 %v767, %v835
        %v868 = vadd.f32 %v768, %v836
        %v869 = vadd.f32 %v769, %v837
        %v870 = vld [vmem:[#allocation2 + $0x2] sm:$0xff]
        %v871 = vld [vmem:[#allocation2 + $0xa] sm:$0xff]
        %v872 = vld [vmem:[#allocation2 + $0x1a] sm:$0xff]
        %v873 = vld [vmem:[#allocation2 + $0x22] sm:$0xff]
        %v874 = vld [vmem:[#allocation2 + $0x32] sm:$0xff]
        %v875 = vld [vmem:[#allocation2 + $0x3a] sm:$0xff]
        %v876 = vld [vmem:[#allocation2 + $0x4a] sm:$0xff]
        %v877 = vld [vmem:[#allocation2 + $0x52] sm:$0xff]
        %v878 = vld [vmem:[#allocation2 + $0x62] sm:$0xff]
        %v879 = vld [vmem:[#allocation2 + $0x6a] sm:$0xff]
        %v880 = vld [vmem:[#allocation2 + $0x7a] sm:$0xff]
        %v881 = vld [vmem:[#allocation2 + $0x82] sm:$0xff]
        %v882 = vld [vmem:[#allocation2 + $0x92] sm:$0xff]
        %v883 = vld [vmem:[#allocation2 + $0x9a] sm:$0xff]
        %v884 = vld [vmem:[#allocation2 + $0xaa] sm:$0xff]
        %v885 = vld [vmem:[#allocation2 + $0xb2] sm:$0xff]
        %v886 = vld [vmem:[#allocation2 + $0xc2] sm:$0xff]
        %v887 = vld [vmem:[#allocation2 + $0xca] sm:$0xff]
        %v888 = vld [vmem:[#allocation2 + $0xda] sm:$0xff]
        %v889 = vld [vmem:[#allocation2 + $0xe2] sm:$0xff]
        %v890 = vld [vmem:[#allocation2 + $0xf2] sm:$0xff]
        %v891 = vld [vmem:[#allocation2 + $0xfa] sm:$0xff]
        %v892 = vld [vmem:[#allocation2 + $0x10a] sm:$0xff]
        %v893 = vld [vmem:[#allocation2 + $0x112] sm:$0xff]
        %v894 = vld [vmem:[#allocation2 + $0x122] sm:$0xff]
        %v895 = vld [vmem:[#allocation2 + $0x12a] sm:$0xff]
        %v896 = vld [vmem:[#allocation2 + $0x13a] sm:$0xff]
        %v897 = vld [vmem:[#allocation2 + $0x142] sm:$0xff]
        %v898 = vld [vmem:[#allocation2 + $0x152] sm:$0xff]
        %v899 = vld [vmem:[#allocation2 + $0x15a] sm:$0xff]
        %v900 = vld [vmem:[#allocation2 + $0x16a] sm:$0xff]
        %v901 = vld [vmem:[#allocation2 + $0x172] sm:$0xff]
        %v902 = vlaneseq
        %v903 = vshrl.u32 %v902, 7
        %v904 = vsub.s32 2, %v903
        %v905 = vrot.slane %v700, %v904
        %v906 = vmul.f32 %v870, %v905
        %v907 = vmul.f32 %v871, %v905
        %v908 = vmul.f32 %v872, %v905
        %v909 = vmul.f32 %v873, %v905
        %v910 = vmul.f32 %v874, %v905
        %v911 = vmul.f32 %v875, %v905
        %v912 = vmul.f32 %v876, %v905
        %v913 = vmul.f32 %v877, %v905
        %v914 = vmul.f32 %v878, %v905
        %v915 = vmul.f32 %v879, %v905
        %v916 = vmul.f32 %v880, %v905
        %v917 = vmul.f32 %v881, %v905
        %v918 = vmul.f32 %v882, %v905
        %v919 = vmul.f32 %v883, %v905
        %v920 = vmul.f32 %v884, %v905
        %v921 = vmul.f32 %v885, %v905
        %v922 = vmul.f32 %v886, %v905
        %v923 = vmul.f32 %v887, %v905
        %v924 = vmul.f32 %v888, %v905
        %v925 = vmul.f32 %v889, %v905
        %v926 = vmul.f32 %v890, %v905
        %v927 = vmul.f32 %v891, %v905
        %v928 = vmul.f32 %v892, %v905
        %v929 = vmul.f32 %v893, %v905
        %v930 = vmul.f32 %v894, %v905
        %v931 = vmul.f32 %v895, %v905
        %v932 = vmul.f32 %v896, %v905
        %v933 = vmul.f32 %v897, %v905
        %v934 = vmul.f32 %v898, %v905
        %v935 = vmul.f32 %v899, %v905
        %v936 = vmul.f32 %v900, %v905
        %v937 = vmul.f32 %v901, %v905
        %v938 = vadd.f32 %v838, %v906
        %v939 = vadd.f32 %v839, %v907
        %v940 = vadd.f32 %v840, %v908
        %v941 = vadd.f32 %v841, %v909
        %v942 = vadd.f32 %v842, %v910
        %v943 = vadd.f32 %v843, %v911
        %v944 = vadd.f32 %v844, %v912
        %v945 = vadd.f32 %v845, %v913
        %v946 = vadd.f32 %v846, %v914
        %v947 = vadd.f32 %v847, %v915
        %v948 = vadd.f32 %v848, %v916
        %v949 = vadd.f32 %v849, %v917
        %v950 = vadd.f32 %v850, %v918
        %v951 = vadd.f32 %v851, %v919
        %v952 = vadd.f32 %v852, %v920
        %v953 = vadd.f32 %v853, %v921
        %v954 = vadd.f32 %v854, %v922
        %v955 = vadd.f32 %v855, %v923
        %v956 = vadd.f32 %v856, %v924
        %v957 = vadd.f32 %v857, %v925
        %v958 = vadd.f32 %v858, %v926
        %v959 = vadd.f32 %v859, %v927
        %v960 = vadd.f32 %v860, %v928
        %v961 = vadd.f32 %v861, %v929
        %v962 = vadd.f32 %v862, %v930
        %v963 = vadd.f32 %v863, %v931
        %v964 = vadd.f32 %v864, %v932
        %v965 = vadd.f32 %v865, %v933
        %v966 = vadd.f32 %v866, %v934
        %v967 = vadd.f32 %v867, %v935
        %v968 = vadd.f32 %v868, %v936
        %v969 = vadd.f32 %v869, %v937
        %v970 = vld [vmem:[%s667] sm:$0xff]
        %v971 = vld [vmem:[%s667 + $0x8] sm:$0xff]
        %v972 = vld [vmem:[%s667 + $0x18] sm:$0xff]
        %v973 = vld [vmem:[%s667 + $0x20] sm:$0xff]
        %v974 = vld [vmem:[%s667 + $0x30] sm:$0xff]
        %v975 = vld [vmem:[%s667 + $0x38] sm:$0xff]
        %v976 = vld [vmem:[%s667 + $0x48] sm:$0xff]
        %v977 = vld [vmem:[%s667 + $0x50] sm:$0xff]
        %v978 = vld [vmem:[%s667 + $0x60] sm:$0xff]
        %v979 = vld [vmem:[%s667 + $0x68] sm:$0xff]
        %v980 = vld [vmem:[%s667 + $0x78] sm:$0xff]
        %v981 = vld [vmem:[%s667 + $0x80] sm:$0xff]
        %v982 = vld [vmem:[%s667 + $0x90] sm:$0xff]
        %v983 = vld [vmem:[%s667 + $0x98] sm:$0xff]
        %v984 = vld [vmem:[%s667 + $0xa8] sm:$0xff]
        %v985 = vld [vmem:[%s667 + $0xb0] sm:$0xff]
        %v986 = vld [vmem:[%s667 + $0xc0] sm:$0xff]
        %v987 = vld [vmem:[%s667 + $0xc8] sm:$0xff]
        %v988 = vld [vmem:[%s667 + $0xd8] sm:$0xff]
        %v989 = vld [vmem:[%s667 + $0xe0] sm:$0xff]
        %v990 = vld [vmem:[%s667 + $0xf0] sm:$0xff]
        %v991 = vld [vmem:[%s667 + $0xf8] sm:$0xff]
        %v992 = vld [vmem:[%s667 + $0x108] sm:$0xff]
        %v993 = vld [vmem:[%s667 + $0x110] sm:$0xff]
        %v994 = vld [vmem:[%s667 + $0x120] sm:$0xff]
        %v995 = vld [vmem:[%s667 + $0x128] sm:$0xff]
        %v996 = vld [vmem:[%s667 + $0x138] sm:$0xff]
        %v997 = vld [vmem:[%s667 + $0x140] sm:$0xff]
        %v998 = vld [vmem:[%s667 + $0x150] sm:$0xff]
        %v999 = vld [vmem:[%s667 + $0x158] sm:$0xff]
        %v1000 = vld [vmem:[%s667 + $0x168] sm:$0xff]
        %v1001 = vld [vmem:[%s667 + $0x170] sm:$0xff]
        %v1002 = vlaneseq
        %v1003 = vshrl.u32 %v1002, 7
        %v1004 = vsub.s32 3, %v1003
        %v1005 = vrot.slane %v700, %v1004
        %v1006 = vmul.f32 %v970, %v1005
        %v1007 = vmul.f32 %v971, %v1005
        %v1008 = vmul.f32 %v972, %v1005
        %v1009 = vmul.f32 %v973, %v1005
        %v1010 = vmul.f32 %v974, %v1005
        %v1011 = vmul.f32 %v975, %v1005
        %v1012 = vmul.f32 %v976, %v1005
        %v1013 = vmul.f32 %v977, %v1005
        %v1014 = vmul.f32 %v978, %v1005
        %v1015 = vmul.f32 %v979, %v1005
        %v1016 = vmul.f32 %v980, %v1005
        %v1017 = vmul.f32 %v981, %v1005
        %v1018 = vmul.f32 %v982, %v1005
        %v1019 = vmul.f32 %v983, %v1005
        %v1020 = vmul.f32 %v984, %v1005
        %v1021 = vmul.f32 %v985, %v1005
        %v1022 = vmul.f32 %v986, %v1005
        %v1023 = vmul.f32 %v987, %v1005
        %v1024 = vmul.f32 %v988, %v1005
        %v1025 = vmul.f32 %v989, %v1005
        %v1026 = vmul.f32 %v990, %v1005
        %v1027 = vmul.f32 %v991, %v1005
        %v1028 = vmul.f32 %v992, %v1005
        %v1029 = vmul.f32 %v993, %v1005
        %v1030 = vmul.f32 %v994, %v1005
        %v1031 = vmul.f32 %v995, %v1005
        %v1032 = vmul.f32 %v996, %v1005
        %v1033 = vmul.f32 %v997, %v1005
        %v1034 = vmul.f32 %v998, %v1005
        %v1035 = vmul.f32 %v999, %v1005
        %v1036 = vmul.f32 %v1000, %v1005
        %v1037 = vmul.f32 %v1001, %v1005
        %v1038 = vadd.f32 %v938, %v1006
        %v1039 = vadd.f32 %v939, %v1007
        %v1040 = vadd.f32 %v940, %v1008
        %v1041 = vadd.f32 %v941, %v1009
        %v1042 = vadd.f32 %v942, %v1010
        %v1043 = vadd.f32 %v943, %v1011
        %v1044 = vadd.f32 %v944, %v1012
        %v1045 = vadd.f32 %v945, %v1013
        %v1046 = vadd.f32 %v946, %v1014
        %v1047 = vadd.f32 %v947, %v1015
        %v1048 = vadd.f32 %v948, %v1016
        %v1049 = vadd.f32 %v949, %v1017
        %v1050 = vadd.f32 %v950, %v1018
        %v1051 = vadd.f32 %v951, %v1019
        %v1052 = vadd.f32 %v952, %v1020
        %v1053 = vadd.f32 %v953, %v1021
        %v1054 = vadd.f32 %v954, %v1022
        %v1055 = vadd.f32 %v955, %v1023
        %v1056 = vadd.f32 %v956, %v1024
        %v1057 = vadd.f32 %v957, %v1025
        %v1058 = vadd.f32 %v958, %v1026
        %v1059 = vadd.f32 %v959, %v1027
        %v1060 = vadd.f32 %v960, %v1028
        %v1061 = vadd.f32 %v961, %v1029
        %v1062 = vadd.f32 %v962, %v1030
        %v1063 = vadd.f32 %v963, %v1031
        %v1064 = vadd.f32 %v964, %v1032
        %v1065 = vadd.f32 %v965, %v1033
        %v1066 = vadd.f32 %v966, %v1034
        %v1067 = vadd.f32 %v967, %v1035
        %v1068 = vadd.f32 %v968, %v1036
        %v1069 = vadd.f32 %v969, %v1037
        %v1070 = vld [vmem:[%s667 + $0x1] sm:$0xff]
        %v1071 = vld [vmem:[%s667 + $0x9] sm:$0xff]
        %v1072 = vld [vmem:[%s667 + $0x19] sm:$0xff]
        %v1073 = vld [vmem:[%s667 + $0x21] sm:$0xff]
        %v1074 = vld [vmem:[%s667 + $0x31] sm:$0xff]
        %v1075 = vld [vmem:[%s667 + $0x39] sm:$0xff]
        %v1076 = vld [vmem:[%s667 + $0x49] sm:$0xff]
        %v1077 = vld [vmem:[%s667 + $0x51] sm:$0xff]
        %v1078 = vld [vmem:[%s667 + $0x61] sm:$0xff]
        %v1079 = vld [vmem:[%s667 + $0x69] sm:$0xff]
        %v1080 = vld [vmem:[%s667 + $0x79] sm:$0xff]
        %v1081 = vld [vmem:[%s667 + $0x81] sm:$0xff]
        %v1082 = vld [vmem:[%s667 + $0x91] sm:$0xff]
        %v1083 = vld [vmem:[%s667 + $0x99] sm:$0xff]
        %v1084 = vld [vmem:[%s667 + $0xa9] sm:$0xff]
        %v1085 = vld [vmem:[%s667 + $0xb1] sm:$0xff]
        %v1086 = vld [vmem:[%s667 + $0xc1] sm:$0xff]
        %v1087 = vld [vmem:[%s667 + $0xc9] sm:$0xff]
        %v1088 = vld [vmem:[%s667 + $0xd9] sm:$0xff]
        %v1089 = vld [vmem:[%s667 + $0xe1] sm:$0xff]
        %v1090 = vld [vmem:[%s667 + $0xf1] sm:$0xff]
        %v1091 = vld [vmem:[%s667 + $0xf9] sm:$0xff]
        %v1092 = vld [vmem:[%s667 + $0x109] sm:$0xff]
        %v1093 = vld [vmem:[%s667 + $0x111] sm:$0xff]
        %v1094 = vld [vmem:[%s667 + $0x121] sm:$0xff]
        %v1095 = vld [vmem:[%s667 + $0x129] sm:$0xff]
        %v1096 = vld [vmem:[%s667 + $0x139] sm:$0xff]
        %v1097 = vld [vmem:[%s667 + $0x141] sm:$0xff]
        %v1098 = vld [vmem:[%s667 + $0x151] sm:$0xff]
        %v1099 = vld [vmem:[%s667 + $0x159] sm:$0xff]
        %v1100 = vld [vmem:[%s667 + $0x169] sm:$0xff]
        %v1101 = vld [vmem:[%s667 + $0x171] sm:$0xff]
        %v1102 = vlaneseq
        %v1103 = vshrl.u32 %v1102, 7
        %v1104 = vsub.s32 4, %v1103
        %v1105 = vrot.slane %v700, %v1104
        %v1106 = vmul.f32 %v1070, %v1105
        %v1107 = vmul.f32 %v1071, %v1105
        %v1108 = vmul.f32 %v1072, %v1105
        %v1109 = vmul.f32 %v1073, %v1105
        %v1110 = vmul.f32 %v1074, %v1105
        %v1111 = vmul.f32 %v1075, %v1105
        %v1112 = vmul.f32 %v1076, %v1105
        %v1113 = vmul.f32 %v1077, %v1105
        %v1114 = vmul.f32 %v1078, %v1105
        %v1115 = vmul.f32 %v1079, %v1105
        %v1116 = vmul.f32 %v1080, %v1105
        %v1117 = vmul.f32 %v1081, %v1105
        %v1118 = vmul.f32 %v1082, %v1105
        %v1119 = vmul.f32 %v1083, %v1105
        %v1120 = vmul.f32 %v1084, %v1105
        %v1121 = vmul.f32 %v1085, %v1105
        %v1122 = vmul.f32 %v1086, %v1105
        %v1123 = vmul.f32 %v1087, %v1105
        %v1124 = vmul.f32 %v1088, %v1105
        %v1125 = vmul.f32 %v1089, %v1105
        %v1126 = vmul.f32 %v1090, %v1105
        %v1127 = vmul.f32 %v1091, %v1105
        %v1128 = vmul.f32 %v1092, %v1105
        %v1129 = vmul.f32 %v1093, %v1105
        %v1130 = vmul.f32 %v1094, %v1105
        %v1131 = vmul.f32 %v1095, %v1105
        %v1132 = vmul.f32 %v1096, %v1105
        %v1133 = vmul.f32 %v1097, %v1105
        %v1134 = vmul.f32 %v1098, %v1105
        %v1135 = vmul.f32 %v1099, %v1105
        %v1136 = vmul.f32 %v1100, %v1105
        %v1137 = vmul.f32 %v1101, %v1105
        %v1138 = vadd.f32 %v1038, %v1106
        %v1139 = vadd.f32 %v1039, %v1107
        %v1140 = vadd.f32 %v1040, %v1108
        %v1141 = vadd.f32 %v1041, %v1109
        %v1142 = vadd.f32 %v1042, %v1110
        %v1143 = vadd.f32 %v1043, %v1111
        %v1144 = vadd.f32 %v1044, %v1112
        %v1145 = vadd.f32 %v1045, %v1113
        %v1146 = vadd.f32 %v1046, %v1114
        %v1147 = vadd.f32 %v1047, %v1115
        %v1148 = vadd.f32 %v1048, %v1116
        %v1149 = vadd.f32 %v1049, %v1117
        %v1150 = vadd.f32 %v1050, %v1118
        %v1151 = vadd.f32 %v1051, %v1119
        %v1152 = vadd.f32 %v1052, %v1120
        %v1153 = vadd.f32 %v1053, %v1121
        %v1154 = vadd.f32 %v1054, %v1122
        %v1155 = vadd.f32 %v1055, %v1123
        %v1156 = vadd.f32 %v1056, %v1124
        %v1157 = vadd.f32 %v1057, %v1125
        %v1158 = vadd.f32 %v1058, %v1126
        %v1159 = vadd.f32 %v1059, %v1127
        %v1160 = vadd.f32 %v1060, %v1128
        %v1161 = vadd.f32 %v1061, %v1129
        %v1162 = vadd.f32 %v1062, %v1130
        %v1163 = vadd.f32 %v1063, %v1131
        %v1164 = vadd.f32 %v1064, %v1132
        %v1165 = vadd.f32 %v1065, %v1133
        %v1166 = vadd.f32 %v1066, %v1134
        %v1167 = vadd.f32 %v1067, %v1135
        %v1168 = vadd.f32 %v1068, %v1136
        %v1169 = vadd.f32 %v1069, %v1137
        %v1170 = vld [vmem:[%s667 + $0x2] sm:$0xff]
        %v1171 = vld [vmem:[%s667 + $0xa] sm:$0xff]
        %v1172 = vld [vmem:[%s667 + $0x1a] sm:$0xff]
        %v1173 = vld [vmem:[%s667 + $0x22] sm:$0xff]
        %v1174 = vld [vmem:[%s667 + $0x32] sm:$0xff]
        %v1175 = vld [vmem:[%s667 + $0x3a] sm:$0xff]
        %v1176 = vld [vmem:[%s667 + $0x4a] sm:$0xff]
        %v1177 = vld [vmem:[%s667 + $0x52] sm:$0xff]
        %v1178 = vld [vmem:[%s667 + $0x62] sm:$0xff]
        %v1179 = vld [vmem:[%s667 + $0x6a] sm:$0xff]
        %v1180 = vld [vmem:[%s667 + $0x7a] sm:$0xff]
        %v1181 = vld [vmem:[%s667 + $0x82] sm:$0xff]
        %v1182 = vld [vmem:[%s667 + $0x92] sm:$0xff]
        %v1183 = vld [vmem:[%s667 + $0x9a] sm:$0xff]
        %v1184 = vld [vmem:[%s667 + $0xaa] sm:$0xff]
        %v1185 = vld [vmem:[%s667 + $0xb2] sm:$0xff]
        %v1186 = vld [vmem:[%s667 + $0xc2] sm:$0xff]
        %v1187 = vld [vmem:[%s667 + $0xca] sm:$0xff]
        %v1188 = vld [vmem:[%s667 + $0xda] sm:$0xff]
        %v1189 = vld [vmem:[%s667 + $0xe2] sm:$0xff]
        %v1190 = vld [vmem:[%s667 + $0xf2] sm:$0xff]
        %v1191 = vld [vmem:[%s667 + $0xfa] sm:$0xff]
        %v1192 = vld [vmem:[%s667 + $0x10a] sm:$0xff]
        %v1193 = vld [vmem:[%s667 + $0x112] sm:$0xff]
        %v1194 = vld [vmem:[%s667 + $0x122] sm:$0xff]
        %v1195 = vld [vmem:[%s667 + $0x12a] sm:$0xff]
        %v1196 = vld [vmem:[%s667 + $0x13a] sm:$0xff]
        %v1197 = vld [vmem:[%s667 + $0x142] sm:$0xff]
        %v1198 = vld [vmem:[%s667 + $0x152] sm:$0xff]
        %v1199 = vld [vmem:[%s667 + $0x15a] sm:$0xff]
        %v1200 = vld [vmem:[%s667 + $0x16a] sm:$0xff]
        %v1201 = vld [vmem:[%s667 + $0x172] sm:$0xff]
        %v1202 = vlaneseq
        %v1203 = vshrl.u32 %v1202, 7
        %v1204 = vsub.s32 5, %v1203
        %v1205 = vrot.slane %v700, %v1204
        %v1206 = vmul.f32 %v1170, %v1205
        %v1207 = vmul.f32 %v1171, %v1205
        %v1208 = vmul.f32 %v1172, %v1205
        %v1209 = vmul.f32 %v1173, %v1205
        %v1210 = vmul.f32 %v1174, %v1205
        %v1211 = vmul.f32 %v1175, %v1205
        %v1212 = vmul.f32 %v1176, %v1205
        %v1213 = vmul.f32 %v1177, %v1205
        %v1214 = vmul.f32 %v1178, %v1205
        %v1215 = vmul.f32 %v1179, %v1205
        %v1216 = vmul.f32 %v1180, %v1205
        %v1217 = vmul.f32 %v1181, %v1205
        %v1218 = vmul.f32 %v1182, %v1205
        %v1219 = vmul.f32 %v1183, %v1205
        %v1220 = vmul.f32 %v1184, %v1205
        %v1221 = vmul.f32 %v1185, %v1205
        %v1222 = vmul.f32 %v1186, %v1205
        %v1223 = vmul.f32 %v1187, %v1205
        %v1224 = vmul.f32 %v1188, %v1205
        %v1225 = vmul.f32 %v1189, %v1205
        %v1226 = vmul.f32 %v1190, %v1205
        %v1227 = vmul.f32 %v1191, %v1205
        %v1228 = vmul.f32 %v1192, %v1205
        %v1229 = vmul.f32 %v1193, %v1205
        %v1230 = vmul.f32 %v1194, %v1205
        %v1231 = vmul.f32 %v1195, %v1205
        %v1232 = vmul.f32 %v1196, %v1205
        %v1233 = vmul.f32 %v1197, %v1205
        %v1234 = vmul.f32 %v1198, %v1205
        %v1235 = vmul.f32 %v1199, %v1205
        %v1236 = vmul.f32 %v1200, %v1205
        %v1237 = vmul.f32 %v1201, %v1205
        %v1238 = vadd.f32 %v1138, %v1206
        %v1239 = vadd.f32 %v1139, %v1207
        %v1240 = vadd.f32 %v1140, %v1208
        %v1241 = vadd.f32 %v1141, %v1209
        %v1242 = vadd.f32 %v1142, %v1210
        %v1243 = vadd.f32 %v1143, %v1211
        %v1244 = vadd.f32 %v1144, %v1212
        %v1245 = vadd.f32 %v1145, %v1213
        %v1246 = vadd.f32 %v1146, %v1214
        %v1247 = vadd.f32 %v1147, %v1215
        %v1248 = vadd.f32 %v1148, %v1216
        %v1249 = vadd.f32 %v1149, %v1217
        %v1250 = vadd.f32 %v1150, %v1218
        %v1251 = vadd.f32 %v1151, %v1219
        %v1252 = vadd.f32 %v1152, %v1220
        %v1253 = vadd.f32 %v1153, %v1221
        %v1254 = vadd.f32 %v1154, %v1222
        %v1255 = vadd.f32 %v1155, %v1223
        %v1256 = vadd.f32 %v1156, %v1224
        %v1257 = vadd.f32 %v1157, %v1225
        %v1258 = vadd.f32 %v1158, %v1226
        %v1259 = vadd.f32 %v1159, %v1227
        %v1260 = vadd.f32 %v1160, %v1228
        %v1261 = vadd.f32 %v1161, %v1229
        %v1262 = vadd.f32 %v1162, %v1230
        %v1263 = vadd.f32 %v1163, %v1231
        %v1264 = vadd.f32 %v1164, %v1232
        %v1265 = vadd.f32 %v1165, %v1233
        %v1266 = vadd.f32 %v1166, %v1234
        %v1267 = vadd.f32 %v1167, %v1235
        %v1268 = vadd.f32 %v1168, %v1236
        %v1269 = vadd.f32 %v1169, %v1237
        %s1270 = scalar_lea.vmem [#allocation2], 48
        %v1271 = vld [vmem:[%s1270] sm:$0xff]
        %v1272 = vld [vmem:[%s1270 + $0x8] sm:$0xff]
        %v1273 = vld [vmem:[%s1270 + $0x18] sm:$0xff]
        %v1274 = vld [vmem:[%s1270 + $0x20] sm:$0xff]
        %v1275 = vld [vmem:[%s1270 + $0x30] sm:$0xff]
        %v1276 = vld [vmem:[%s1270 + $0x38] sm:$0xff]
        %v1277 = vld [vmem:[%s1270 + $0x48] sm:$0xff]
        %v1278 = vld [vmem:[%s1270 + $0x50] sm:$0xff]
        %v1279 = vld [vmem:[%s1270 + $0x60] sm:$0xff]
        %v1280 = vld [vmem:[%s1270 + $0x68] sm:$0xff]
        %v1281 = vld [vmem:[%s1270 + $0x78] sm:$0xff]
        %v1282 = vld [vmem:[%s1270 + $0x80] sm:$0xff]
        %v1283 = vld [vmem:[%s1270 + $0x90] sm:$0xff]
        %v1284 = vld [vmem:[%s1270 + $0x98] sm:$0xff]
        %v1285 = vld [vmem:[%s1270 + $0xa8] sm:$0xff]
        %v1286 = vld [vmem:[%s1270 + $0xb0] sm:$0xff]
        %v1287 = vld [vmem:[%s1270 + $0xc0] sm:$0xff]
        %v1288 = vld [vmem:[%s1270 + $0xc8] sm:$0xff]
        %v1289 = vld [vmem:[%s1270 + $0xd8] sm:$0xff]
        %v1290 = vld [vmem:[%s1270 + $0xe0] sm:$0xff]
        %v1291 = vld [vmem:[%s1270 + $0xf0] sm:$0xff]
        %v1292 = vld [vmem:[%s1270 + $0xf8] sm:$0xff]
        %v1293 = vld [vmem:[%s1270 + $0x108] sm:$0xff]
        %v1294 = vld [vmem:[%s1270 + $0x110] sm:$0xff]
        %v1295 = vld [vmem:[%s1270 + $0x120] sm:$0xff]
        %v1296 = vld [vmem:[%s1270 + $0x128] sm:$0xff]
        %v1297 = vld [vmem:[%s1270 + $0x138] sm:$0xff]
        %v1298 = vld [vmem:[%s1270 + $0x140] sm:$0xff]
        %v1299 = vld [vmem:[%s1270 + $0x150] sm:$0xff]
        %v1300 = vld [vmem:[%s1270 + $0x158] sm:$0xff]
        %v1301 = vld [vmem:[%s1270 + $0x168] sm:$0xff]
        %v1302 = vld [vmem:[%s1270 + $0x170] sm:$0xff]
        %v1303 = vlaneseq
        %v1304 = vshrl.u32 %v1303, 7
        %v1305 = vsub.s32 6, %v1304
        %v1306 = vrot.slane %v700, %v1305
        %v1307 = vmul.f32 %v1271, %v1306
        %v1308 = vmul.f32 %v1272, %v1306
        %v1309 = vmul.f32 %v1273, %v1306
        %v1310 = vmul.f32 %v1274, %v1306
        %v1311 = vmul.f32 %v1275, %v1306
        %v1312 = vmul.f32 %v1276, %v1306
        %v1313 = vmul.f32 %v1277, %v1306
        %v1314 = vmul.f32 %v1278, %v1306
        %v1315 = vmul.f32 %v1279, %v1306
        %v1316 = vmul.f32 %v1280, %v1306
        %v1317 = vmul.f32 %v1281, %v1306
        %v1318 = vmul.f32 %v1282, %v1306
        %v1319 = vmul.f32 %v1283, %v1306
        %v1320 = vmul.f32 %v1284, %v1306
        %v1321 = vmul.f32 %v1285, %v1306
        %v1322 = vmul.f32 %v1286, %v1306
        %v1323 = vmul.f32 %v1287, %v1306
        %v1324 = vmul.f32 %v1288, %v1306
        %v1325 = vmul.f32 %v1289, %v1306
        %v1326 = vmul.f32 %v1290, %v1306
        %v1327 = vmul.f32 %v1291, %v1306
        %v1328 = vmul.f32 %v1292, %v1306
        %v1329 = vmul.f32 %v1293, %v1306
        %v1330 = vmul.f32 %v1294, %v1306
        %v1331 = vmul.f32 %v1295, %v1306
        %v1332 = vmul.f32 %v1296, %v1306
        %v1333 = vmul.f32 %v1297, %v1306
        %v1334 = vmul.f32 %v1298, %v1306
        %v1335 = vmul.f32 %v1299, %v1306
        %v1336 = vmul.f32 %v1300, %v1306
        %v1337 = vmul.f32 %v1301, %v1306
        %v1338 = vmul.f32 %v1302, %v1306
        %v1339 = vadd.f32 %v1238, %v1307
        %v1340 = vadd.f32 %v1239, %v1308
        %v1341 = vadd.f32 %v1240, %v1309
        %v1342 = vadd.f32 %v1241, %v1310
        %v1343 = vadd.f32 %v1242, %v1311
        %v1344 = vadd.f32 %v1243, %v1312
        %v1345 = vadd.f32 %v1244, %v1313
        %v1346 = vadd.f32 %v1245, %v1314
        %v1347 = vadd.f32 %v1246, %v1315
        %v1348 = vadd.f32 %v1247, %v1316
        %v1349 = vadd.f32 %v1248, %v1317
        %v1350 = vadd.f32 %v1249, %v1318
        %v1351 = vadd.f32 %v1250, %v1319
        %v1352 = vadd.f32 %v1251, %v1320
        %v1353 = vadd.f32 %v1252, %v1321
        %v1354 = vadd.f32 %v1253, %v1322
        %v1355 = vadd.f32 %v1254, %v1323
        %v1356 = vadd.f32 %v1255, %v1324
        %v1357 = vadd.f32 %v1256, %v1325
        %v1358 = vadd.f32 %v1257, %v1326
        %v1359 = vadd.f32 %v1258, %v1327
        %v1360 = vadd.f32 %v1259, %v1328
        %v1361 = vadd.f32 %v1260, %v1329
        %v1362 = vadd.f32 %v1261, %v1330
        %v1363 = vadd.f32 %v1262, %v1331
        %v1364 = vadd.f32 %v1263, %v1332
        %v1365 = vadd.f32 %v1264, %v1333
        %v1366 = vadd.f32 %v1265, %v1334
        %v1367 = vadd.f32 %v1266, %v1335
        %v1368 = vadd.f32 %v1267, %v1336
        %v1369 = vadd.f32 %v1268, %v1337
        %v1370 = vadd.f32 %v1269, %v1338
        %v1371 = vld [vmem:[%s1270 + $0x1] sm:$0xff]
        %v1372 = vld [vmem:[%s1270 + $0x9] sm:$0xff]
        %v1373 = vld [vmem:[%s1270 + $0x19] sm:$0xff]
        %v1374 = vld [vmem:[%s1270 + $0x21] sm:$0xff]
        %v1375 = vld [vmem:[%s1270 + $0x31] sm:$0xff]
        %v1376 = vld [vmem:[%s1270 + $0x39] sm:$0xff]
        %v1377 = vld [vmem:[%s1270 + $0x49] sm:$0xff]
        %v1378 = vld [vmem:[%s1270 + $0x51] sm:$0xff]
        %v1379 = vld [vmem:[%s1270 + $0x61] sm:$0xff]
        %v1380 = vld [vmem:[%s1270 + $0x69] sm:$0xff]
        %v1381 = vld [vmem:[%s1270 + $0x79] sm:$0xff]
        %v1382 = vld [vmem:[%s1270 + $0x81] sm:$0xff]
        %v1383 = vld [vmem:[%s1270 + $0x91] sm:$0xff]
        %v1384 = vld [vmem:[%s1270 + $0x99] sm:$0xff]
        %v1385 = vld [vmem:[%s1270 + $0xa9] sm:$0xff]
        %v1386 = vld [vmem:[%s1270 + $0xb1] sm:$0xff]
        %v1387 = vld [vmem:[%s1270 + $0xc1] sm:$0xff]
        %v1388 = vld [vmem:[%s1270 + $0xc9] sm:$0xff]
        %v1389 = vld [vmem:[%s1270 + $0xd9] sm:$0xff]
        %v1390 = vld [vmem:[%s1270 + $0xe1] sm:$0xff]
        %v1391 = vld [vmem:[%s1270 + $0xf1] sm:$0xff]
        %v1392 = vld [vmem:[%s1270 + $0xf9] sm:$0xff]
        %v1393 = vld [vmem:[%s1270 + $0x109] sm:$0xff]
        %v1394 = vld [vmem:[%s1270 + $0x111] sm:$0xff]
        %v1395 = vld [vmem:[%s1270 + $0x121] sm:$0xff]
        %v1396 = vld [vmem:[%s1270 + $0x129] sm:$0xff]
        %v1397 = vld [vmem:[%s1270 + $0x139] sm:$0xff]
        %v1398 = vld [vmem:[%s1270 + $0x141] sm:$0xff]
        %v1399 = vld [vmem:[%s1270 + $0x151] sm:$0xff]
        %v1400 = vld [vmem:[%s1270 + $0x159] sm:$0xff]
        %v1401 = vld [vmem:[%s1270 + $0x169] sm:$0xff]
        %v1402 = vld [vmem:[%s1270 + $0x171] sm:$0xff]
        %v1403 = vlaneseq
        %v1404 = vshrl.u32 %v1403, 7
        %v1405 = vsub.s32 7, %v1404
        %v1406 = vrot.slane %v700, %v1405
        %v1407 = vmul.f32 %v1371, %v1406
        %v1408 = vmul.f32 %v1372, %v1406
        %v1409 = vmul.f32 %v1373, %v1406
        %v1410 = vmul.f32 %v1374, %v1406
        %v1411 = vmul.f32 %v1375, %v1406
        %v1412 = vmul.f32 %v1376, %v1406
        %v1413 = vmul.f32 %v1377, %v1406
        %v1414 = vmul.f32 %v1378, %v1406
        %v1415 = vmul.f32 %v1379, %v1406
        %v1416 = vmul.f32 %v1380, %v1406
        %v1417 = vmul.f32 %v1381, %v1406
        %v1418 = vmul.f32 %v1382, %v1406
        %v1419 = vmul.f32 %v1383, %v1406
        %v1420 = vmul.f32 %v1384, %v1406
        %v1421 = vmul.f32 %v1385, %v1406
        %v1422 = vmul.f32 %v1386, %v1406
        %v1423 = vmul.f32 %v1387, %v1406
        %v1424 = vmul.f32 %v1388, %v1406
        %v1425 = vmul.f32 %v1389, %v1406
        %v1426 = vmul.f32 %v1390, %v1406
        %v1427 = vmul.f32 %v1391, %v1406
        %v1428 = vmul.f32 %v1392, %v1406
        %v1429 = vmul.f32 %v1393, %v1406
        %v1430 = vmul.f32 %v1394, %v1406
        %v1431 = vmul.f32 %v1395, %v1406
        %v1432 = vmul.f32 %v1396, %v1406
        %v1433 = vmul.f32 %v1397, %v1406
        %v1434 = vmul.f32 %v1398, %v1406
        %v1435 = vmul.f32 %v1399, %v1406
        %v1436 = vmul.f32 %v1400, %v1406
        %v1437 = vmul.f32 %v1401, %v1406
        %v1438 = vmul.f32 %v1402, %v1406
        %v1439 = vadd.f32 %v1339, %v1407
        %v1440 = vadd.f32 %v1340, %v1408
        %v1441 = vadd.f32 %v1341, %v1409
        %v1442 = vadd.f32 %v1342, %v1410
        %v1443 = vadd.f32 %v1343, %v1411
        %v1444 = vadd.f32 %v1344, %v1412
        %v1445 = vadd.f32 %v1345, %v1413
        %v1446 = vadd.f32 %v1346, %v1414
        %v1447 = vadd.f32 %v1347, %v1415
        %v1448 = vadd.f32 %v1348, %v1416
        %v1449 = vadd.f32 %v1349, %v1417
        %v1450 = vadd.f32 %v1350, %v1418
        %v1451 = vadd.f32 %v1351, %v1419
        %v1452 = vadd.f32 %v1352, %v1420
        %v1453 = vadd.f32 %v1353, %v1421
        %v1454 = vadd.f32 %v1354, %v1422
        %v1455 = vadd.f32 %v1355, %v1423
        %v1456 = vadd.f32 %v1356, %v1424
        %v1457 = vadd.f32 %v1357, %v1425
        %v1458 = vadd.f32 %v1358, %v1426
        %v1459 = vadd.f32 %v1359, %v1427
        %v1460 = vadd.f32 %v1360, %v1428
        %v1461 = vadd.f32 %v1361, %v1429
        %v1462 = vadd.f32 %v1362, %v1430
        %v1463 = vadd.f32 %v1363, %v1431
        %v1464 = vadd.f32 %v1364, %v1432
        %v1465 = vadd.f32 %v1365, %v1433
        %v1466 = vadd.f32 %v1366, %v1434
        %v1467 = vadd.f32 %v1367, %v1435
        %v1468 = vadd.f32 %v1368, %v1436
        %v1469 = vadd.f32 %v1369, %v1437
        %v1470 = vadd.f32 %v1370, %v1438
        %v1471 = vld [vmem:[%s1270 + $0x2] sm:$0xff]
        %v1472 = vld [vmem:[%s1270 + $0xa] sm:$0xff]
        %v1473 = vld [vmem:[%s1270 + $0x1a] sm:$0xff]
        %v1474 = vld [vmem:[%s1270 + $0x22] sm:$0xff]
        %v1475 = vld [vmem:[%s1270 + $0x32] sm:$0xff]
        %v1476 = vld [vmem:[%s1270 + $0x3a] sm:$0xff]
        %v1477 = vld [vmem:[%s1270 + $0x4a] sm:$0xff]
        %v1478 = vld [vmem:[%s1270 + $0x52] sm:$0xff]
        %v1479 = vld [vmem:[%s1270 + $0x62] sm:$0xff]
        %v1480 = vld [vmem:[%s1270 + $0x6a] sm:$0xff]
        %v1481 = vld [vmem:[%s1270 + $0x7a] sm:$0xff]
        %v1482 = vld [vmem:[%s1270 + $0x82] sm:$0xff]
        %v1483 = vld [vmem:[%s1270 + $0x92] sm:$0xff]
        %v1484 = vld [vmem:[%s1270 + $0x9a] sm:$0xff]
        %v1485 = vld [vmem:[%s1270 + $0xaa] sm:$0xff]
        %v1486 = vld [vmem:[%s1270 + $0xb2] sm:$0xff]
        %v1487 = vld [vmem:[%s1270 + $0xc2] sm:$0xff]
        %v1488 = vld [vmem:[%s1270 + $0xca] sm:$0xff]
        %v1489 = vld [vmem:[%s1270 + $0xda] sm:$0xff]
        %v1490 = vld [vmem:[%s1270 + $0xe2] sm:$0xff]
        %v1491 = vld [vmem:[%s1270 + $0xf2] sm:$0xff]
        %v1492 = vld [vmem:[%s1270 + $0xfa] sm:$0xff]
        %v1493 = vld [vmem:[%s1270 + $0x10a] sm:$0xff]
        %v1494 = vld [vmem:[%s1270 + $0x112] sm:$0xff]
        %v1495 = vld [vmem:[%s1270 + $0x122] sm:$0xff]
        %v1496 = vld [vmem:[%s1270 + $0x12a] sm:$0xff]
        %v1497 = vld [vmem:[%s1270 + $0x13a] sm:$0xff]
        %v1498 = vld [vmem:[%s1270 + $0x142] sm:$0xff]
        %v1499 = vld [vmem:[%s1270 + $0x152] sm:$0xff]
        %v1500 = vld [vmem:[%s1270 + $0x15a] sm:$0xff]
        %v1501 = vld [vmem:[%s1270 + $0x16a] sm:$0xff]
        %v1502 = vld [vmem:[%s1270 + $0x172] sm:$0xff]
        %v1503 = vlaneseq
        %v1504 = vshrl.u32 %v1503, 7
        %v1505 = vsub.s32 0, %v1504
        %v1506 = vrot.slane %v701, %v1505
        %v1507 = vmul.f32 %v1471, %v1506
        %v1508 = vmul.f32 %v1472, %v1506
        %v1509 = vmul.f32 %v1473, %v1506
        %v1510 = vmul.f32 %v1474, %v1506
        %v1511 = vmul.f32 %v1475, %v1506
        %v1512 = vmul.f32 %v1476, %v1506
        %v1513 = vmul.f32 %v1477, %v1506
        %v1514 = vmul.f32 %v1478, %v1506
        %v1515 = vmul.f32 %v1479, %v1506
        %v1516 = vmul.f32 %v1480, %v1506
        %v1517 = vmul.f32 %v1481, %v1506
        %v1518 = vmul.f32 %v1482, %v1506
        %v1519 = vmul.f32 %v1483, %v1506
        %v1520 = vmul.f32 %v1484, %v1506
        %v1521 = vmul.f32 %v1485, %v1506
        %v1522 = vmul.f32 %v1486, %v1506
        %v1523 = vmul.f32 %v1487, %v1506
        %v1524 = vmul.f32 %v1488, %v1506
        %v1525 = vmul.f32 %v1489, %v1506
        %v1526 = vmul.f32 %v1490, %v1506
        %v1527 = vmul.f32 %v1491, %v1506
        %v1528 = vmul.f32 %v1492, %v1506
        %v1529 = vmul.f32 %v1493, %v1506
        %v1530 = vmul.f32 %v1494, %v1506
        %v1531 = vmul.f32 %v1495, %v1506
        %v1532 = vmul.f32 %v1496, %v1506
        %v1533 = vmul.f32 %v1497, %v1506
        %v1534 = vmul.f32 %v1498, %v1506
        %v1535 = vmul.f32 %v1499, %v1506
        %v1536 = vmul.f32 %v1500, %v1506
        %v1537 = vmul.f32 %v1501, %v1506
        %v1538 = vmul.f32 %v1502, %v1506
        %v1539 = vadd.f32 %v1439, %v1507
        %v1540 = vadd.f32 %v1440, %v1508
        %v1541 = vadd.f32 %v1441, %v1509
        %v1542 = vadd.f32 %v1442, %v1510
        %v1543 = vadd.f32 %v1443, %v1511
        %v1544 = vadd.f32 %v1444, %v1512
        %v1545 = vadd.f32 %v1445, %v1513
        %v1546 = vadd.f32 %v1446, %v1514
        %v1547 = vadd.f32 %v1447, %v1515
        %v1548 = vadd.f32 %v1448, %v1516
        %v1549 = vadd.f32 %v1449, %v1517
        %v1550 = vadd.f32 %v1450, %v1518
        %v1551 = vadd.f32 %v1451, %v1519
        %v1552 = vadd.f32 %v1452, %v1520
        %v1553 = vadd.f32 %v1453, %v1521
        %v1554 = vadd.f32 %v1454, %v1522
        %v1555 = vadd.f32 %v1455, %v1523
        %v1556 = vadd.f32 %v1456, %v1524
        %v1557 = vadd.f32 %v1457, %v1525
        %v1558 = vadd.f32 %v1458, %v1526
        %v1559 = vadd.f32 %v1459, %v1527
        %v1560 = vadd.f32 %v1460, %v1528
        %v1561 = vadd.f32 %v1461, %v1529
        %v1562 = vadd.f32 %v1462, %v1530
        %v1563 = vadd.f32 %v1463, %v1531
        %v1564 = vadd.f32 %v1464, %v1532
        %v1565 = vadd.f32 %v1465, %v1533
        %v1566 = vadd.f32 %v1466, %v1534
        %v1567 = vadd.f32 %v1467, %v1535
        %v1568 = vadd.f32 %v1468, %v1536
        %v1569 = vadd.f32 %v1469, %v1537
        %v1570 = vadd.f32 %v1470, %v1538
        %v1571 = vld [vmem:[%s2] sm:$0xf]
        %v1573 = vsel %vm611, %v1539, 0
        %v1576 = vsel %vm611, %v1540, 0
        %v1579 = vsel %vm611, %v1541, 0
        %v1582 = vsel %vm611, %v1542, 0
        %v1585 = vsel %vm611, %v1543, 0
        %v1588 = vsel %vm611, %v1544, 0
        %v1591 = vsel %vm611, %v1545, 0
        %v1594 = vsel %vm611, %v1546, 0
        %v1597 = vsel %vm611, %v1547, 0
        %v1600 = vsel %vm611, %v1548, 0
        %v1603 = vsel %vm611, %v1549, 0
        %v1606 = vsel %vm611, %v1550, 0
        %v1609 = vsel %vm611, %v1551, 0
        %v1612 = vsel %vm611, %v1552, 0
        %v1615 = vsel %vm611, %v1553, 0
        %v1618 = vsel %vm611, %v1554, 0
        %v1621 = vsel %vm611, %v1555, 0
        %v1624 = vsel %vm611, %v1556, 0
        %v1627 = vsel %vm611, %v1557, 0
        %v1630 = vsel %vm611, %v1558, 0
        %v1633 = vsel %vm611, %v1559, 0
        %v1636 = vsel %vm611, %v1560, 0
        %v1639 = vsel %vm611, %v1561, 0
        %v1642 = vsel %vm611, %v1562, 0
        %v1645 = vsel %vm611, %v1563, 0
        %v1648 = vsel %vm611, %v1564, 0
        %v1651 = vsel %vm611, %v1565, 0
        %v1654 = vsel %vm611, %v1566, 0
        %v1657 = vsel %vm611, %v1567, 0
        %v1660 = vsel %vm611, %v1568, 0
        %v1663 = vsel %vm611, %v1569, 0
        %v1666 = vsel %vm611, %v1570, 0
        %vm1668 = vcmask 1043456
        %v1670 = vsel %vm1668, %v1571, 0
        %1672 = vmatprep.subr.mxu0 0.0
        %1673 = vmatpush1.msra.mxu0 %v1670
        %1674 = vmatprep.subr.mxu0 0.0
        %1675 = vmatpush1.msra.mxu0 0.0
        %1676 = vmatprep.subr.mxu0 0.0
        %1677 = vmatpush1.msra.mxu0 0.0
        %1678 = vmatprep.subr.mxu0 0.0
        %1679 = vmatpush1.msra.mxu0 0.0
        %1680 = vmatprep.subr.mxu0 0.0
        %1681 = vmatpush1.msra.mxu0 0.0
        %1682 = vmatprep.subr.mxu0 0.0
        %1683 = vmatpush1.msra.mxu0 0.0
        %1684 = vmatprep.subr.mxu0 0.0
        %1685 = vmatpush1.msra.mxu0 0.0
        %1686 = vmatprep.subr.mxu0 0.0
        %1687 = vmatpush1.msra.mxu0 0.0
        %1688 = vmatprep.subr.mxu0 0.0
        %1689 = vmatpush1.msra.mxu0 0.0
        %1690 = vmatprep.subr.mxu0 0.0
        %1691 = vmatpush1.msra.mxu0 0.0
        %1692 = vmatprep.subr.mxu0 0.0
        %1693 = vmatpush1.msra.mxu0 0.0
        %1694 = vmatprep.subr.mxu0 0.0
        %1695 = vmatpush1.msra.mxu0 0.0
        %1696 = vmatprep.subr.mxu0 0.0
        %1697 = vmatpush1.msra.mxu0 0.0
        %1698 = vmatprep.subr.mxu0 0.0
        %1699 = vmatpush1.msra.mxu0 0.0
        %1700 = vmatprep.subr.mxu0 0.0
        %1701 = vmatpush1.msra.mxu0 0.0
        %1702 = vmatprep.subr.mxu0 0.0
        %1703 = vmatpush1.msra.mxu0 0.0
        %1704 = vmatprep.subr.mxu0 0.0
        %1705 = vmatpush1.msra.mxu0 0.0
        %1706 = vmatprep.subr.mxu0 0.0
        %1707 = vmatpush1.msra.mxu0 0.0
        %1708 = vmatprep.subr.mxu0 0.0
        %1709 = vmatpush1.msra.mxu0 0.0
        %1710 = vmatprep.subr.mxu0 0.0
        %1711 = vmatpush1.msra.mxu0 0.0
        %1712 = vmatprep.subr.mxu0 0.0
        %1713 = vmatpush1.msra.mxu0 0.0
        %1714 = vmatprep.subr.mxu0 0.0
        %1715 = vmatpush1.msra.mxu0 0.0
        %1716 = vmatprep.subr.mxu0 0.0
        %1717 = vmatpush1.msra.mxu0 0.0
        %1718 = vmatprep.subr.mxu0 0.0
        %1719 = vmatpush1.msra.mxu0 0.0
        %1720 = vmatprep.subr.mxu0 0.0
        %1721 = vmatpush1.msra.mxu0 0.0
        %1722 = vmatprep.subr.mxu0 0.0
        %1723 = vmatpush1.msra.mxu0 0.0
        %1724 = vmatprep.subr.mxu0 0.0
        %1725 = vmatpush1.msra.mxu0 0.0
        %1726 = vmatprep.subr.mxu0 0.0
        %1727 = vmatpush1.msra.mxu0 0.0
        %1728 = vmatprep.subr.mxu0 0.0
        %1729 = vmatpush1.msra.mxu0 0.0
        %1730 = vmatprep.subr.mxu0 0.0
        %1731 = vmatpush1.msra.mxu0 0.0
        %1732 = vmatprep.subr.mxu0 0.0
        %1733 = vmatpush1.msra.mxu0 0.0
        %1734 = vmatprep.subr.mxu0 0.0
        %1735 = vmatpush1.msra.mxu0 0.0
        %1736 = vmatprep.mubr.f32.mxu0 0.0
        %1737 = vmatmul.mubr.f32.gmra.mrb[0].mxu0 %v1573
        %v1738 = vpop.f32.mrb[0].mxu0
        %v1739 = vadd.f32 0.0, %v1738
        %v1740 = vpop.f32.mrb[0].mxu0
        %1741 = vmatprep.mubr.f32.mxu0 0.0
        %1742 = vmatmul.mubr.f32.gmra.mrb[0].mxu0 %v1576
        %v1743 = vpop.f32.mrb[0].mxu0
        %v1744 = vadd.f32 0.0, %v1743
        %v1745 = vpop.f32.mrb[0].mxu0
        %1746 = vmatprep.mubr.f32.mxu0 0.0
        %1747 = vmatmul.mubr.f32.gmra.mrb[0].mxu0 %v1579
        %v1748 = vpop.f32.mrb[0].mxu0
        %v1749 = vadd.f32 0.0, %v1748
        %v1750 = vpop.f32.mrb[0].mxu0
        %1751 = vmatprep.mubr.f32.mxu0 0.0
        %1752 = vmatmul.mubr.f32.gmra.mrb[0].mxu0 %v1582
        %v1753 = vpop.f32.mrb[0].mxu0
        %v1754 = vadd.f32 0.0, %v1753
        %v1755 = vpop.f32.mrb[0].mxu0
        %1756 = vmatprep.mubr.f32.mxu0 0.0
        %1757 = vmatmul.mubr.f32.gmra.mrb[0].mxu0 %v1585
        %v1758 = vpop.f32.mrb[0].mxu0
        %v1759 = vadd.f32 0.0, %v1758
        %v1760 = vpop.f32.mrb[0].mxu0
        %1761 = vmatprep.mubr.f32.mxu0 0.0
        %1762 = vmatmul.mubr.f32.gmra.mrb[0].mxu0 %v1588
        %v1763 = vpop.f32.mrb[0].mxu0
        %v1764 = vadd.f32 0.0, %v1763
        %v1765 = vpop.f32.mrb[0].mxu0
        %1766 = vmatprep.mubr.f32.mxu0 0.0
        %1767 = vmatmul.mubr.f32.gmra.mrb[0].mxu0 %v1591
        %v1768 = vpop.f32.mrb[0].mxu0
        %v1769 = vadd.f32 0.0, %v1768
        %v1770 = vpop.f32.mrb[0].mxu0
        %1771 = vmatprep.mubr.f32.mxu0 0.0
        %1772 = vmatmul.mubr.f32.gmra.mrb[0].mxu0 %v1594
        %v1773 = vpop.f32.mrb[0].mxu0
        %v1774 = vadd.f32 0.0, %v1773
        %v1775 = vpop.f32.mrb[0].mxu0
        %1776 = vmatprep.mubr.f32.mxu0 0.0
        %1777 = vmatmul.mubr.f32.gmra.mrb[0].mxu0 %v1597
        %v1778 = vpop.f32.mrb[0].mxu0
        %v1779 = vadd.f32 0.0, %v1778
        %v1780 = vpop.f32.mrb[0].mxu0
        %1781 = vmatprep.mubr.f32.mxu0 0.0
        %1782 = vmatmul.mubr.f32.gmra.mrb[0].mxu0 %v1600
        %v1783 = vpop.f32.mrb[0].mxu0
        %v1784 = vadd.f32 0.0, %v1783
        %v1785 = vpop.f32.mrb[0].mxu0
        %1786 = vmatprep.mubr.f32.mxu0 0.0
        %1787 = vmatmul.mubr.f32.gmra.mrb[0].mxu0 %v1603
        %v1788 = vpop.f32.mrb[0].mxu0
        %v1789 = vadd.f32 0.0, %v1788
        %v1790 = vpop.f32.mrb[0].mxu0
        %1791 = vmatprep.mubr.f32.mxu0 0.0
        %1792 = vmatmul.mubr.f32.gmra.mrb[0].mxu0 %v1606
        %v1793 = vpop.f32.mrb[0].mxu0
        %v1794 = vadd.f32 0.0, %v1793
        %v1795 = vpop.f32.mrb[0].mxu0
        %1796 = vmatprep.mubr.f32.mxu0 0.0
        %1797 = vmatmul.mubr.f32.gmra.mrb[0].mxu0 %v1609
        %v1798 = vpop.f32.mrb[0].mxu0
        %v1799 = vadd.f32 0.0, %v1798
        %v1800 = vpop.f32.mrb[0].mxu0
        %1801 = vmatprep.mubr.f32.mxu0 0.0
        %1802 = vmatmul.mubr.f32.gmra.mrb[0].mxu0 %v1612
        %v1803 = vpop.f32.mrb[0].mxu0
        %v1804 = vadd.f32 0.0, %v1803
        %v1805 = vpop.f32.mrb[0].mxu0
        %1806 = vmatprep.mubr.f32.mxu0 0.0
        %1807 = vmatmul.mubr.f32.gmra.mrb[0].mxu0 %v1615
        %v1808 = vpop.f32.mrb[0].mxu0
        %v1809 = vadd.f32 0.0, %v1808
        %v1810 = vpop.f32.mrb[0].mxu0
        %1811 = vmatprep.mubr.f32.mxu0 0.0
        %1812 = vmatmul.mubr.f32.gmra.mrb[0].mxu0 %v1618
        %v1813 = vpop.f32.mrb[0].mxu0
        %v1814 = vadd.f32 0.0, %v1813
        %v1815 = vpop.f32.mrb[0].mxu0
        %1816 = vmatprep.mubr.f32.mxu0 0.0
        %1817 = vmatmul.mubr.f32.gmra.mrb[0].mxu0 %v1621
        %v1818 = vpop.f32.mrb[0].mxu0
        %v1819 = vadd.f32 0.0, %v1818
        %v1820 = vpop.f32.mrb[0].mxu0
        %1821 = vmatprep.mubr.f32.mxu0 0.0
        %1822 = vmatmul.mubr.f32.gmra.mrb[0].mxu0 %v1624
        %v1823 = vpop.f32.mrb[0].mxu0
        %v1824 = vadd.f32 0.0, %v1823
        %v1825 = vpop.f32.mrb[0].mxu0
        %1826 = vmatprep.mubr.f32.mxu0 0.0
        %1827 = vmatmul.mubr.f32.gmra.mrb[0].mxu0 %v1627
        %v1828 = vpop.f32.mrb[0].mxu0
        %v1829 = vadd.f32 0.0, %v1828
        %v1830 = vpop.f32.mrb[0].mxu0
        %1831 = vmatprep.mubr.f32.mxu0 0.0
        %1832 = vmatmul.mubr.f32.gmra.mrb[0].mxu0 %v1630
        %v1833 = vpop.f32.mrb[0].mxu0
        %v1834 = vadd.f32 0.0, %v1833
        %v1835 = vpop.f32.mrb[0].mxu0
        %1836 = vmatprep.mubr.f32.mxu0 0.0
        %1837 = vmatmul.mubr.f32.gmra.mrb[0].mxu0 %v1633
        %v1838 = vpop.f32.mrb[0].mxu0
        %v1839 = vadd.f32 0.0, %v1838
        %v1840 = vpop.f32.mrb[0].mxu0
        %1841 = vmatprep.mubr.f32.mxu0 0.0
        %1842 = vmatmul.mubr.f32.gmra.mrb[0].mxu0 %v1636
        %v1843 = vpop.f32.mrb[0].mxu0
        %v1844 = vadd.f32 0.0, %v1843
        %v1845 = vpop.f32.mrb[0].mxu0
        %1846 = vmatprep.mubr.f32.mxu0 0.0
        %1847 = vmatmul.mubr.f32.gmra.mrb[0].mxu0 %v1639
        %v1848 = vpop.f32.mrb[0].mxu0
        %v1849 = vadd.f32 0.0, %v1848
        %v1850 = vpop.f32.mrb[0].mxu0
        %1851 = vmatprep.mubr.f32.mxu0 0.0
        %1852 = vmatmul.mubr.f32.gmra.mrb[0].mxu0 %v1642
        %v1853 = vpop.f32.mrb[0].mxu0
        %v1854 = vadd.f32 0.0, %v1853
        %v1855 = vpop.f32.mrb[0].mxu0
        %1856 = vmatprep.mubr.f32.mxu0 0.0
        %1857 = vmatmul.mubr.f32.gmra.mrb[0].mxu0 %v1645
        %v1858 = vpop.f32.mrb[0].mxu0
        %v1859 = vadd.f32 0.0, %v1858
        %v1860 = vpop.f32.mrb[0].mxu0
        %1861 = vmatprep.mubr.f32.mxu0 0.0
        %1862 = vmatmul.mubr.f32.gmra.mrb[0].mxu0 %v1648
        %v1863 = vpop.f32.mrb[0].mxu0
        %v1864 = vadd.f32 0.0, %v1863
        %v1865 = vpop.f32.mrb[0].mxu0
        %1866 = vmatprep.mubr.f32.mxu0 0.0
        %1867 = vmatmul.mubr.f32.gmra.mrb[0].mxu0 %v1651
        %v1868 = vpop.f32.mrb[0].mxu0
        %v1869 = vadd.f32 0.0, %v1868
        %v1870 = vpop.f32.mrb[0].mxu0
        %1871 = vmatprep.mubr.f32.mxu0 0.0
        %1872 = vmatmul.mubr.f32.gmra.mrb[0].mxu0 %v1654
        %v1873 = vpop.f32.mrb[0].mxu0
        %v1874 = vadd.f32 0.0, %v1873
        %v1875 = vpop.f32.mrb[0].mxu0
        %1876 = vmatprep.mubr.f32.mxu0 0.0
        %1877 = vmatmul.mubr.f32.gmra.mrb[0].mxu0 %v1657
        %v1878 = vpop.f32.mrb[0].mxu0
        %v1879 = vadd.f32 0.0, %v1878
        %v1880 = vpop.f32.mrb[0].mxu0
        %1881 = vmatprep.mubr.f32.mxu0 0.0
        %1882 = vmatmul.mubr.f32.gmra.mrb[0].mxu0 %v1660
        %v1883 = vpop.f32.mrb[0].mxu0
        %v1884 = vadd.f32 0.0, %v1883
        %v1885 = vpop.f32.mrb[0].mxu0
        %1886 = vmatprep.mubr.f32.mxu0 0.0
        %1887 = vmatmul.mubr.f32.gmra.mrb[0].mxu0 %v1663
        %v1888 = vpop.f32.mrb[0].mxu0
        %v1889 = vadd.f32 0.0, %v1888
        %v1890 = vpop.f32.mrb[0].mxu0
        %1891 = vmatprep.mubr.f32.mxu0 0.0
        %1892 = vmatmul.mubr.f32.gmra.mrb[0].mxu0 %v1666
        %v1893 = vpop.f32.mrb[0].mxu0
        %v1894 = vadd.f32 0.0, %v1893
        %v1895 = vpop.f32.mrb[0].mxu0
        %1896 = vdwg.mxu0
        %v1897 = vld [vmem:[%s3] sm:$0x1]
        %v1899 = vlaneseq
        %v1900 = vshrl.u32 %v1899, 7
        %v1901 = vsub.s32 0, %v1900
        %v1902 = vrot.slane %v1897, %v1901
        %v1904 = vmul.f32 %v1739, %v1902
        %v1905 = vmul.f32 %v1744, %v1902
        %v1906 = vmul.f32 %v1749, %v1902
        %v1907 = vmul.f32 %v1754, %v1902
        %v1908 = vmul.f32 %v1759, %v1902
        %v1909 = vmul.f32 %v1764, %v1902
        %v1910 = vmul.f32 %v1769, %v1902
        %v1911 = vmul.f32 %v1774, %v1902
        %v1912 = vmul.f32 %v1779, %v1902
        %v1913 = vmul.f32 %v1784, %v1902
        %v1914 = vmul.f32 %v1789, %v1902
        %v1915 = vmul.f32 %v1794, %v1902
        %v1916 = vmul.f32 %v1799, %v1902
        %v1917 = vmul.f32 %v1804, %v1902
        %v1918 = vmul.f32 %v1809, %v1902
        %v1919 = vmul.f32 %v1814, %v1902
        %v1920 = vmul.f32 %v1819, %v1902
        %v1921 = vmul.f32 %v1824, %v1902
        %v1922 = vmul.f32 %v1829, %v1902
        %v1923 = vmul.f32 %v1834, %v1902
        %v1924 = vmul.f32 %v1839, %v1902
        %v1925 = vmul.f32 %v1844, %v1902
        %v1926 = vmul.f32 %v1849, %v1902
        %v1927 = vmul.f32 %v1854, %v1902
        %v1928 = vmul.f32 %v1859, %v1902
        %v1929 = vmul.f32 %v1864, %v1902
        %v1930 = vmul.f32 %v1869, %v1902
        %v1931 = vmul.f32 %v1874, %v1902
        %v1932 = vmul.f32 %v1879, %v1902
        %v1933 = vmul.f32 %v1884, %v1902
        %v1934 = vmul.f32 %v1889, %v1902
        %v1935 = vmul.f32 %v1894, %v1902
        %v1936 = vld [vmem:[%s4] sm:$0x1]
        %v1938 = vlaneseq
        %v1939 = vshrl.u32 %v1938, 7
        %v1940 = vsub.s32 0, %v1939
        %v1941 = vrot.slane %v1936, %v1940
        %v1943 = vadd.f32 %v1904, %v1941
        %v1944 = vadd.f32 %v1905, %v1941
        %v1945 = vadd.f32 %v1906, %v1941
        %v1946 = vadd.f32 %v1907, %v1941
        %v1947 = vadd.f32 %v1908, %v1941
        %v1948 = vadd.f32 %v1909, %v1941
        %v1949 = vadd.f32 %v1910, %v1941
        %v1950 = vadd.f32 %v1911, %v1941
        %v1951 = vadd.f32 %v1912, %v1941
        %v1952 = vadd.f32 %v1913, %v1941
        %v1953 = vadd.f32 %v1914, %v1941
        %v1954 = vadd.f32 %v1915, %v1941
        %v1955 = vadd.f32 %v1916, %v1941
        %v1956 = vadd.f32 %v1917, %v1941
        %v1957 = vadd.f32 %v1918, %v1941
        %v1958 = vadd.f32 %v1919, %v1941
        %v1959 = vadd.f32 %v1920, %v1941
        %v1960 = vadd.f32 %v1921, %v1941
        %v1961 = vadd.f32 %v1922, %v1941
        %v1962 = vadd.f32 %v1923, %v1941
        %v1963 = vadd.f32 %v1924, %v1941
        %v1964 = vadd.f32 %v1925, %v1941
        %v1965 = vadd.f32 %v1926, %v1941
        %v1966 = vadd.f32 %v1927, %v1941
        %v1967 = vadd.f32 %v1928, %v1941
        %v1968 = vadd.f32 %v1929, %v1941
        %v1969 = vadd.f32 %v1930, %v1941
        %v1970 = vadd.f32 %v1931, %v1941
        %v1971 = vadd.f32 %v1932, %v1941
        %v1972 = vadd.f32 %v1933, %v1941
        %v1973 = vadd.f32 %v1934, %v1941
        %v1974 = vadd.f32 %v1935, %v1941
        %v1975 = vmax.f32 %v1943, 0.0
        %v1976 = vmax.f32 %v1944, 0.0
        %v1977 = vmax.f32 %v1945, 0.0
        %v1978 = vmax.f32 %v1946, 0.0
        %v1979 = vmax.f32 %v1947, 0.0
        %v1980 = vmax.f32 %v1948, 0.0
        %v1981 = vmax.f32 %v1949, 0.0
        %v1982 = vmax.f32 %v1950, 0.0
        %v1983 = vmax.f32 %v1951, 0.0
        %v1984 = vmax.f32 %v1952, 0.0
        %v1985 = vmax.f32 %v1953, 0.0
        %v1986 = vmax.f32 %v1954, 0.0
        %v1987 = vmax.f32 %v1955, 0.0
        %v1988 = vmax.f32 %v1956, 0.0
        %v1989 = vmax.f32 %v1957, 0.0
        %v1990 = vmax.f32 %v1958, 0.0
        %v1991 = vmax.f32 %v1959, 0.0
        %v1992 = vmax.f32 %v1960, 0.0
        %v1993 = vmax.f32 %v1961, 0.0
        %v1994 = vmax.f32 %v1962, 0.0
        %v1995 = vmax.f32 %v1963, 0.0
        %v1996 = vmax.f32 %v1964, 0.0
        %v1997 = vmax.f32 %v1965, 0.0
        %v1998 = vmax.f32 %v1966, 0.0
        %v1999 = vmax.f32 %v1967, 0.0
        %v2000 = vmax.f32 %v1968, 0.0
        %v2001 = vmax.f32 %v1969, 0.0
        %v2002 = vmax.f32 %v1970, 0.0
        %v2003 = vmax.f32 %v1971, 0.0
        %v2004 = vmax.f32 %v1972, 0.0
        %v2005 = vmax.f32 %v1973, 0.0
        %v2006 = vmax.f32 %v1974, 0.0
        %vm2007 = vcmask 64512
        %2008 = vst.msk [vmem:[#allocation3] sm:$0xff] %vm2007, 0.0
        %2009 = vst.msk [vmem:[#allocation3 + $0x8] sm:$0xff] %vm2007, 0.0
        %vm2010 = vcmask 58368
        %2011 = vst.msk [vmem:[#allocation3 + $0x10] sm:$0x3] %vm2010, 0.0
        %2012 = vst.msk [vmem:[#allocation3 + $0x18] sm:$0xff] %vm2007, 0.0
        %2013 = vst.msk [vmem:[#allocation3 + $0x20] sm:$0xff] %vm2007, 0.0
        %2014 = vst.msk [vmem:[#allocation3 + $0x28] sm:$0x3] %vm2010, 0.0
        %2015 = vst.msk [vmem:[#allocation3 + $0x30] sm:$0xff] %vm2007, 0.0
        %2016 = vst.msk [vmem:[#allocation3 + $0x38] sm:$0xff] %vm2007, 0.0
        %2017 = vst.msk [vmem:[#allocation3 + $0x40] sm:$0x3] %vm2010, 0.0
        %2018 = vst.msk [vmem:[#allocation3 + $0x48] sm:$0xff] %vm2007, 0.0
        %2019 = vst.msk [vmem:[#allocation3 + $0x50] sm:$0xff] %vm2007, 0.0
        %2020 = vst.msk [vmem:[#allocation3 + $0x58] sm:$0x3] %vm2010, 0.0
        %2021 = vst.msk [vmem:[#allocation3 + $0x60] sm:$0xff] %vm2007, 0.0
        %2022 = vst.msk [vmem:[#allocation3 + $0x68] sm:$0xff] %vm2007, 0.0
        %2023 = vst.msk [vmem:[#allocation3 + $0x70] sm:$0x3] %vm2010, 0.0
        %2024 = vst.msk [vmem:[#allocation3 + $0x78] sm:$0xff] %vm2007, 0.0
        %2025 = vst.msk [vmem:[#allocation3 + $0x80] sm:$0xff] %vm2007, 0.0
        %2026 = vst.msk [vmem:[#allocation3 + $0x88] sm:$0x3] %vm2010, 0.0
        %2027 = vst.msk [vmem:[#allocation3 + $0x90] sm:$0xff] %vm2007, 0.0
        %2028 = vst.msk [vmem:[#allocation3 + $0x98] sm:$0xff] %vm2007, 0.0
        %2029 = vst.msk [vmem:[#allocation3 + $0xa0] sm:$0x3] %vm2010, 0.0
        %2030 = vst.msk [vmem:[#allocation3 + $0xa8] sm:$0xff] %vm2007, 0.0
        %2031 = vst.msk [vmem:[#allocation3 + $0xb0] sm:$0xff] %vm2007, 0.0
        %2032 = vst.msk [vmem:[#allocation3 + $0xb8] sm:$0x3] %vm2010, 0.0
        %2033 = vst.msk [vmem:[#allocation3 + $0xc0] sm:$0xff] %vm2007, 0.0
        %2034 = vst.msk [vmem:[#allocation3 + $0xc8] sm:$0xff] %vm2007, 0.0
        %2035 = vst.msk [vmem:[#allocation3 + $0xd0] sm:$0x3] %vm2010, 0.0
        %2036 = vst.msk [vmem:[#allocation3 + $0xd8] sm:$0xff] %vm2007, 0.0
        %2037 = vst.msk [vmem:[#allocation3 + $0xe0] sm:$0xff] %vm2007, 0.0
        %2038 = vst.msk [vmem:[#allocation3 + $0xe8] sm:$0x3] %vm2010, 0.0
        %2039 = vst.msk [vmem:[#allocation3 + $0xf0] sm:$0xff] %vm2007, 0.0
        %2040 = vst.msk [vmem:[#allocation3 + $0xf8] sm:$0xff] %vm2007, 0.0
        %2041 = vst.msk [vmem:[#allocation3 + $0x100] sm:$0x3] %vm2010, 0.0
        %2042 = vst.msk [vmem:[#allocation3 + $0x108] sm:$0xff] %vm2007, 0.0
        %2043 = vst.msk [vmem:[#allocation3 + $0x110] sm:$0xff] %vm2007, 0.0
        %2044 = vst.msk [vmem:[#allocation3 + $0x118] sm:$0x3] %vm2010, 0.0
        %2045 = vst.msk [vmem:[#allocation3 + $0x120] sm:$0xff] %vm2007, 0.0
        %2046 = vst.msk [vmem:[#allocation3 + $0x128] sm:$0xff] %vm2007, 0.0
        %2047 = vst.msk [vmem:[#allocation3 + $0x130] sm:$0x3] %vm2010, 0.0
        %2048 = vst.msk [vmem:[#allocation3 + $0x138] sm:$0xff] %vm2007, 0.0
        %2049 = vst.msk [vmem:[#allocation3 + $0x140] sm:$0xff] %vm2007, 0.0
        %2050 = vst.msk [vmem:[#allocation3 + $0x148] sm:$0x3] %vm2010, 0.0
        %2051 = vst.msk [vmem:[#allocation3 + $0x150] sm:$0xff] %vm2007, 0.0
        %2052 = vst.msk [vmem:[#allocation3 + $0x158] sm:$0xff] %vm2007, 0.0
        %2053 = vst.msk [vmem:[#allocation3 + $0x160] sm:$0x3] %vm2010, 0.0
        %2054 = vst.msk [vmem:[#allocation3 + $0x168] sm:$0xff] %vm2007, 0.0
        %2055 = vst.msk [vmem:[#allocation3 + $0x170] sm:$0xff] %vm2007, 0.0
        %2056 = vst.msk [vmem:[#allocation3 + $0x178] sm:$0x3] %vm2010, 0.0
        %2057 = vst.msk [vmem:[#allocation3 + $0x180] sm:$0xff] %vm2007, 0.0
        %2058 = vst.msk [vmem:[#allocation3 + $0x188] sm:$0xff] %vm2007, 0.0
        %2059 = vst.msk [vmem:[#allocation3 + $0x190] sm:$0x3] %vm2010, 0.0
        %2060 = vst.msk [vmem:[#allocation3 + $0x198] sm:$0xff] %vm2007, 0.0
        %2061 = vst.msk [vmem:[#allocation3 + $0x1a0] sm:$0xff] %vm2007, 0.0
        %2062 = vst.msk [vmem:[#allocation3 + $0x1a8] sm:$0x3] %vm2010, 0.0
        %s2063 = scalar_lea.vmem [#allocation3], 24
        %2064 = vst.msk [vmem:[%s2063 + $0x1] sm:$0xff] %vm2007, %v1975
        %2065 = vst.msk [vmem:[%s2063 + $0x9] sm:$0xff] %vm2007, %v1976
        %2066 = vst.msk [vmem:[%s2063 + $0x19] sm:$0xff] %vm2007, %v1977
        %2067 = vst.msk [vmem:[%s2063 + $0x21] sm:$0xff] %vm2007, %v1978
        %2068 = vst.msk [vmem:[%s2063 + $0x31] sm:$0xff] %vm2007, %v1979
        %2069 = vst.msk [vmem:[%s2063 + $0x39] sm:$0xff] %vm2007, %v1980
        %2070 = vst.msk [vmem:[%s2063 + $0x49] sm:$0xff] %vm2007, %v1981
        %2071 = vst.msk [vmem:[%s2063 + $0x51] sm:$0xff] %vm2007, %v1982
        %2072 = vst.msk [vmem:[%s2063 + $0x61] sm:$0xff] %vm2007, %v1983
        %2073 = vst.msk [vmem:[%s2063 + $0x69] sm:$0xff] %vm2007, %v1984
        %2074 = vst.msk [vmem:[%s2063 + $0x79] sm:$0xff] %vm2007, %v1985
        %2075 = vst.msk [vmem:[%s2063 + $0x81] sm:$0xff] %vm2007, %v1986
        %2076 = vst.msk [vmem:[%s2063 + $0x91] sm:$0xff] %vm2007, %v1987
        %2077 = vst.msk [vmem:[%s2063 + $0x99] sm:$0xff] %vm2007, %v1988
        %2078 = vst.msk [vmem:[%s2063 + $0xa9] sm:$0xff] %vm2007, %v1989
        %2079 = vst.msk [vmem:[%s2063 + $0xb1] sm:$0xff] %vm2007, %v1990
        %2080 = vst.msk [vmem:[%s2063 + $0xc1] sm:$0xff] %vm2007, %v1991
        %2081 = vst.msk [vmem:[%s2063 + $0xc9] sm:$0xff] %vm2007, %v1992
        %2082 = vst.msk [vmem:[%s2063 + $0xd9] sm:$0xff] %vm2007, %v1993
        %2083 = vst.msk [vmem:[%s2063 + $0xe1] sm:$0xff] %vm2007, %v1994
        %2084 = vst.msk [vmem:[%s2063 + $0xf1] sm:$0xff] %vm2007, %v1995
        %2085 = vst.msk [vmem:[%s2063 + $0xf9] sm:$0xff] %vm2007, %v1996
        %2086 = vst.msk [vmem:[%s2063 + $0x109] sm:$0xff] %vm2007, %v1997
        %2087 = vst.msk [vmem:[%s2063 + $0x111] sm:$0xff] %vm2007, %v1998
        %2088 = vst.msk [vmem:[%s2063 + $0x121] sm:$0xff] %vm2007, %v1999
        %2089 = vst.msk [vmem:[%s2063 + $0x129] sm:$0xff] %vm2007, %v2000
        %2090 = vst.msk [vmem:[%s2063 + $0x139] sm:$0xff] %vm2007, %v2001
        %2091 = vst.msk [vmem:[%s2063 + $0x141] sm:$0xff] %vm2007, %v2002
        %2092 = vst.msk [vmem:[%s2063 + $0x151] sm:$0xff] %vm2007, %v2003
        %2093 = vst.msk [vmem:[%s2063 + $0x159] sm:$0xff] %vm2007, %v2004
        %2094 = vst.msk [vmem:[%s2063 + $0x169] sm:$0xff] %vm2007, %v2005
        %2095 = vst.msk [vmem:[%s2063 + $0x171] sm:$0xff] %vm2007, %v2006
        %v2096 = vld [vmem:[%s5] sm:$0xff]
        %v2097 = vld [vmem:[%s5 + $0x8] sm:$0x1]
        %v2098 = vld [vmem:[#allocation3] sm:$0xff]
        %v2099 = vld [vmem:[#allocation3 + $0x8] sm:$0xff]
        %v2100 = vld [vmem:[#allocation3 + $0x18] sm:$0xff]
        %v2101 = vld [vmem:[#allocation3 + $0x20] sm:$0xff]
        %v2102 = vld [vmem:[#allocation3 + $0x30] sm:$0xff]
        %v2103 = vld [vmem:[#allocation3 + $0x38] sm:$0xff]
        %v2104 = vld [vmem:[#allocation3 + $0x48] sm:$0xff]
        %v2105 = vld [vmem:[#allocation3 + $0x50] sm:$0xff]
        %v2106 = vld [vmem:[#allocation3 + $0x60] sm:$0xff]
        %v2107 = vld [vmem:[#allocation3 + $0x68] sm:$0xff]
        %v2108 = vld [vmem:[#allocation3 + $0x78] sm:$0xff]
        %v2109 = vld [vmem:[#allocation3 + $0x80] sm:$0xff]
        %v2110 = vld [vmem:[#allocation3 + $0x90] sm:$0xff]
        %v2111 = vld [vmem:[#allocation3 + $0x98] sm:$0xff]
        %v2112 = vld [vmem:[#allocation3 + $0xa8] sm:$0xff]
        %v2113 = vld [vmem:[#allocation3 + $0xb0] sm:$0xff]
        %v2114 = vld [vmem:[#allocation3 + $0xc0] sm:$0xff]
        %v2115 = vld [vmem:[#allocation3 + $0xc8] sm:$0xff]
        %v2116 = vld [vmem:[#allocation3 + $0xd8] sm:$0xff]
        %v2117 = vld [vmem:[#allocation3 + $0xe0] sm:$0xff]
        %v2118 = vld [vmem:[#allocation3 + $0xf0] sm:$0xff]
        %v2119 = vld [vmem:[#allocation3 + $0xf8] sm:$0xff]
        %v2120 = vld [vmem:[#allocation3 + $0x108] sm:$0xff]
        %v2121 = vld [vmem:[#allocation3 + $0x110] sm:$0xff]
        %v2122 = vld [vmem:[#allocation3 + $0x120] sm:$0xff]
        %v2123 = vld [vmem:[#allocation3 + $0x128] sm:$0xff]
        %v2124 = vld [vmem:[#allocation3 + $0x138] sm:$0xff]
        %v2125 = vld [vmem:[#allocation3 + $0x140] sm:$0xff]
        %v2126 = vld [vmem:[#allocation3 + $0x150] sm:$0xff]
        %v2127 = vld [vmem:[#allocation3 + $0x158] sm:$0xff]
        %v2128 = vld [vmem:[#allocation3 + $0x168] sm:$0xff]
        %v2129 = vld [vmem:[#allocation3 + $0x170] sm:$0xff]
        %v2130 = vlaneseq
        %v2131 = vshrl.u32 %v2130, 7
        %v2132 = vsub.s32 0, %v2131
        %v2133 = vrot.slane %v2096, %v2132
        %v2134 = vmul.f32 %v2098, %v2133
        %v2135 = vmul.f32 %v2099, %v2133
        %v2136 = vmul.f32 %v2100, %v2133
        %v2137 = vmul.f32 %v2101, %v2133
        %v2138 = vmul.f32 %v2102, %v2133
        %v2139 = vmul.f32 %v2103, %v2133
        %v2140 = vmul.f32 %v2104, %v2133
        %v2141 = vmul.f32 %v2105, %v2133
        %v2142 = vmul.f32 %v2106, %v2133
        %v2143 = vmul.f32 %v2107, %v2133
        %v2144 = vmul.f32 %v2108, %v2133
        %v2145 = vmul.f32 %v2109, %v2133
        %v2146 = vmul.f32 %v2110, %v2133
        %v2147 = vmul.f32 %v2111, %v2133
        %v2148 = vmul.f32 %v2112, %v2133
        %v2149 = vmul.f32 %v2113, %v2133
        %v2150 = vmul.f32 %v2114, %v2133
        %v2151 = vmul.f32 %v2115, %v2133
        %v2152 = vmul.f32 %v2116, %v2133
        %v2153 = vmul.f32 %v2117, %v2133
        %v2154 = vmul.f32 %v2118, %v2133
        %v2155 = vmul.f32 %v2119, %v2133
        %v2156 = vmul.f32 %v2120, %v2133
        %v2157 = vmul.f32 %v2121, %v2133
        %v2158 = vmul.f32 %v2122, %v2133
        %v2159 = vmul.f32 %v2123, %v2133
        %v2160 = vmul.f32 %v2124, %v2133
        %v2161 = vmul.f32 %v2125, %v2133
        %v2162 = vmul.f32 %v2126, %v2133
        %v2163 = vmul.f32 %v2127, %v2133
        %v2164 = vmul.f32 %v2128, %v2133
        %v2165 = vmul.f32 %v2129, %v2133
        %v2166 = vld [vmem:[#allocation3 + $0x1] sm:$0xff]
        %v2167 = vld [vmem:[#allocation3 + $0x9] sm:$0xff]
        %v2168 = vld [vmem:[#allocation3 + $0x19] sm:$0xff]
        %v2169 = vld [vmem:[#allocation3 + $0x21] sm:$0xff]
        %v2170 = vld [vmem:[#allocation3 + $0x31] sm:$0xff]
        %v2171 = vld [vmem:[#allocation3 + $0x39] sm:$0xff]
        %v2172 = vld [vmem:[#allocation3 + $0x49] sm:$0xff]
        %v2173 = vld [vmem:[#allocation3 + $0x51] sm:$0xff]
        %v2174 = vld [vmem:[#allocation3 + $0x61] sm:$0xff]
        %v2175 = vld [vmem:[#allocation3 + $0x69] sm:$0xff]
        %v2176 = vld [vmem:[#allocation3 + $0x79] sm:$0xff]
        %v2177 = vld [vmem:[#allocation3 + $0x81] sm:$0xff]
        %v2178 = vld [vmem:[#allocation3 + $0x91] sm:$0xff]
        %v2179 = vld [vmem:[#allocation3 + $0x99] sm:$0xff]
        %v2180 = vld [vmem:[#allocation3 + $0xa9] sm:$0xff]
        %v2181 = vld [vmem:[#allocation3 + $0xb1] sm:$0xff]
        %v2182 = vld [vmem:[#allocation3 + $0xc1] sm:$0xff]
        %v2183 = vld [vmem:[#allocation3 + $0xc9] sm:$0xff]
        %v2184 = vld [vmem:[#allocation3 + $0xd9] sm:$0xff]
        %v2185 = vld [vmem:[#allocation3 + $0xe1] sm:$0xff]
        %v2186 = vld [vmem:[#allocation3 + $0xf1] sm:$0xff]
        %v2187 = vld [vmem:[#allocation3 + $0xf9] sm:$0xff]
        %v2188 = vld [vmem:[#allocation3 + $0x109] sm:$0xff]
        %v2189 = vld [vmem:[#allocation3 + $0x111] sm:$0xff]
        %v2190 = vld [vmem:[#allocation3 + $0x121] sm:$0xff]
        %v2191 = vld [vmem:[#allocation3 + $0x129] sm:$0xff]
        %v2192 = vld [vmem:[#allocation3 + $0x139] sm:$0xff]
        %v2193 = vld [vmem:[#allocation3 + $0x141] sm:$0xff]
        %v2194 = vld [vmem:[#allocation3 + $0x151] sm:$0xff]
        %v2195 = vld [vmem:[#allocation3 + $0x159] sm:$0xff]
        %v2196 = vld [vmem:[#allocation3 + $0x169] sm:$0xff]
        %v2197 = vld [vmem:[#allocation3 + $0x171] sm:$0xff]
        %v2198 = vlaneseq
        %v2199 = vshrl.u32 %v2198, 7
        %v2200 = vsub.s32 1, %v2199
        %v2201 = vrot.slane %v2096, %v2200
        %v2202 = vmul.f32 %v2166, %v2201
        %v2203 = vmul.f32 %v2167, %v2201
        %v2204 = vmul.f32 %v2168, %v2201
        %v2205 = vmul.f32 %v2169, %v2201
        %v2206 = vmul.f32 %v2170, %v2201
        %v2207 = vmul.f32 %v2171, %v2201
        %v2208 = vmul.f32 %v2172, %v2201
        %v2209 = vmul.f32 %v2173, %v2201
        %v2210 = vmul.f32 %v2174, %v2201
        %v2211 = vmul.f32 %v2175, %v2201
        %v2212 = vmul.f32 %v2176, %v2201
        %v2213 = vmul.f32 %v2177, %v2201
        %v2214 = vmul.f32 %v2178, %v2201
        %v2215 = vmul.f32 %v2179, %v2201
        %v2216 = vmul.f32 %v2180, %v2201
        %v2217 = vmul.f32 %v2181, %v2201
        %v2218 = vmul.f32 %v2182, %v2201
        %v2219 = vmul.f32 %v2183, %v2201
        %v2220 = vmul.f32 %v2184, %v2201
        %v2221 = vmul.f32 %v2185, %v2201
        %v2222 = vmul.f32 %v2186, %v2201
        %v2223 = vmul.f32 %v2187, %v2201
        %v2224 = vmul.f32 %v2188, %v2201
        %v2225 = vmul.f32 %v2189, %v2201
        %v2226 = vmul.f32 %v2190, %v2201
        %v2227 = vmul.f32 %v2191, %v2201
        %v2228 = vmul.f32 %v2192, %v2201
        %v2229 = vmul.f32 %v2193, %v2201
        %v2230 = vmul.f32 %v2194, %v2201
        %v2231 = vmul.f32 %v2195, %v2201
        %v2232 = vmul.f32 %v2196, %v2201
        %v2233 = vmul.f32 %v2197, %v2201
        %v2234 = vadd.f32 %v2134, %v2202
        %v2235 = vadd.f32 %v2135, %v2203
        %v2236 = vadd.f32 %v2136, %v2204
        %v2237 = vadd.f32 %v2137, %v2205
        %v2238 = vadd.f32 %v2138, %v2206
        %v2239 = vadd.f32 %v2139, %v2207
        %v2240 = vadd.f32 %v2140, %v2208
        %v2241 = vadd.f32 %v2141, %v2209
        %v2242 = vadd.f32 %v2142, %v2210
        %v2243 = vadd.f32 %v2143, %v2211
        %v2244 = vadd.f32 %v2144, %v2212
        %v2245 = vadd.f32 %v2145, %v2213
        %v2246 = vadd.f32 %v2146, %v2214
        %v2247 = vadd.f32 %v2147, %v2215
        %v2248 = vadd.f32 %v2148, %v2216
        %v2249 = vadd.f32 %v2149, %v2217
        %v2250 = vadd.f32 %v2150, %v2218
        %v2251 = vadd.f32 %v2151, %v2219
        %v2252 = vadd.f32 %v2152, %v2220
        %v2253 = vadd.f32 %v2153, %v2221
        %v2254 = vadd.f32 %v2154, %v2222
        %v2255 = vadd.f32 %v2155, %v2223
        %v2256 = vadd.f32 %v2156, %v2224
        %v2257 = vadd.f32 %v2157, %v2225
        %v2258 = vadd.f32 %v2158, %v2226
        %v2259 = vadd.f32 %v2159, %v2227
        %v2260 = vadd.f32 %v2160, %v2228
        %v2261 = vadd.f32 %v2161, %v2229
        %v2262 = vadd.f32 %v2162, %v2230
        %v2263 = vadd.f32 %v2163, %v2231
        %v2264 = vadd.f32 %v2164, %v2232
        %v2265 = vadd.f32 %v2165, %v2233
        %v2266 = vld [vmem:[#allocation3 + $0x2] sm:$0xff]
        %v2267 = vld [vmem:[#allocation3 + $0xa] sm:$0xff]
        %v2268 = vld [vmem:[#allocation3 + $0x1a] sm:$0xff]
        %v2269 = vld [vmem:[#allocation3 + $0x22] sm:$0xff]
        %v2270 = vld [vmem:[#allocation3 + $0x32] sm:$0xff]
        %v2271 = vld [vmem:[#allocation3 + $0x3a] sm:$0xff]
        %v2272 = vld [vmem:[#allocation3 + $0x4a] sm:$0xff]
        %v2273 = vld [vmem:[#allocation3 + $0x52] sm:$0xff]
        %v2274 = vld [vmem:[#allocation3 + $0x62] sm:$0xff]
        %v2275 = vld [vmem:[#allocation3 + $0x6a] sm:$0xff]
        %v2276 = vld [vmem:[#allocation3 + $0x7a] sm:$0xff]
        %v2277 = vld [vmem:[#allocation3 + $0x82] sm:$0xff]
        %v2278 = vld [vmem:[#allocation3 + $0x92] sm:$0xff]
        %v2279 = vld [vmem:[#allocation3 + $0x9a] sm:$0xff]
        %v2280 = vld [vmem:[#allocation3 + $0xaa] sm:$0xff]
        %v2281 = vld [vmem:[#allocation3 + $0xb2] sm:$0xff]
        %v2282 = vld [vmem:[#allocation3 + $0xc2] sm:$0xff]
        %v2283 = vld [vmem:[#allocation3 + $0xca] sm:$0xff]
        %v2284 = vld [vmem:[#allocation3 + $0xda] sm:$0xff]
        %v2285 = vld [vmem:[#allocation3 + $0xe2] sm:$0xff]
        %v2286 = vld [vmem:[#allocation3 + $0xf2] sm:$0xff]
        %v2287 = vld [vmem:[#allocation3 + $0xfa] sm:$0xff]
        %v2288 = vld [vmem:[#allocation3 + $0x10a] sm:$0xff]
        %v2289 = vld [vmem:[#allocation3 + $0x112] sm:$0xff]
        %v2290 = vld [vmem:[#allocation3 + $0x122] sm:$0xff]
        %v2291 = vld [vmem:[#allocation3 + $0x12a] sm:$0xff]
        %v2292 = vld [vmem:[#allocation3 + $0x13a] sm:$0xff]
        %v2293 = vld [vmem:[#allocation3 + $0x142] sm:$0xff]
        %v2294 = vld [vmem:[#allocation3 + $0x152] sm:$0xff]
        %v2295 = vld [vmem:[#allocation3 + $0x15a] sm:$0xff]
        %v2296 = vld [vmem:[#allocation3 + $0x16a] sm:$0xff]
        %v2297 = vld [vmem:[#allocation3 + $0x172] sm:$0xff]
        %v2298 = vlaneseq
        %v2299 = vshrl.u32 %v2298, 7
        %v2300 = vsub.s32 2, %v2299
        %v2301 = vrot.slane %v2096, %v2300
        %v2302 = vmul.f32 %v2266, %v2301
        %v2303 = vmul.f32 %v2267, %v2301
        %v2304 = vmul.f32 %v2268, %v2301
        %v2305 = vmul.f32 %v2269, %v2301
        %v2306 = vmul.f32 %v2270, %v2301
        %v2307 = vmul.f32 %v2271, %v2301
        %v2308 = vmul.f32 %v2272, %v2301
        %v2309 = vmul.f32 %v2273, %v2301
        %v2310 = vmul.f32 %v2274, %v2301
        %v2311 = vmul.f32 %v2275, %v2301
        %v2312 = vmul.f32 %v2276, %v2301
        %v2313 = vmul.f32 %v2277, %v2301
        %v2314 = vmul.f32 %v2278, %v2301
        %v2315 = vmul.f32 %v2279, %v2301
        %v2316 = vmul.f32 %v2280, %v2301
        %v2317 = vmul.f32 %v2281, %v2301
        %v2318 = vmul.f32 %v2282, %v2301
        %v2319 = vmul.f32 %v2283, %v2301
        %v2320 = vmul.f32 %v2284, %v2301
        %v2321 = vmul.f32 %v2285, %v2301
        %v2322 = vmul.f32 %v2286, %v2301
        %v2323 = vmul.f32 %v2287, %v2301
        %v2324 = vmul.f32 %v2288, %v2301
        %v2325 = vmul.f32 %v2289, %v2301
        %v2326 = vmul.f32 %v2290, %v2301
        %v2327 = vmul.f32 %v2291, %v2301
        %v2328 = vmul.f32 %v2292, %v2301
        %v2329 = vmul.f32 %v2293, %v2301
        %v2330 = vmul.f32 %v2294, %v2301
        %v2331 = vmul.f32 %v2295, %v2301
        %v2332 = vmul.f32 %v2296, %v2301
        %v2333 = vmul.f32 %v2297, %v2301
        %v2334 = vadd.f32 %v2234, %v2302
        %v2335 = vadd.f32 %v2235, %v2303
        %v2336 = vadd.f32 %v2236, %v2304
        %v2337 = vadd.f32 %v2237, %v2305
        %v2338 = vadd.f32 %v2238, %v2306
        %v2339 = vadd.f32 %v2239, %v2307
        %v2340 = vadd.f32 %v2240, %v2308
        %v2341 = vadd.f32 %v2241, %v2309
        %v2342 = vadd.f32 %v2242, %v2310
        %v2343 = vadd.f32 %v2243, %v2311
        %v2344 = vadd.f32 %v2244, %v2312
        %v2345 = vadd.f32 %v2245, %v2313
        %v2346 = vadd.f32 %v2246, %v2314
        %v2347 = vadd.f32 %v2247, %v2315
        %v2348 = vadd.f32 %v2248, %v2316
        %v2349 = vadd.f32 %v2249, %v2317
        %v2350 = vadd.f32 %v2250, %v2318
        %v2351 = vadd.f32 %v2251, %v2319
        %v2352 = vadd.f32 %v2252, %v2320
        %v2353 = vadd.f32 %v2253, %v2321
        %v2354 = vadd.f32 %v2254, %v2322
        %v2355 = vadd.f32 %v2255, %v2323
        %v2356 = vadd.f32 %v2256, %v2324
        %v2357 = vadd.f32 %v2257, %v2325
        %v2358 = vadd.f32 %v2258, %v2326
        %v2359 = vadd.f32 %v2259, %v2327
        %v2360 = vadd.f32 %v2260, %v2328
        %v2361 = vadd.f32 %v2261, %v2329
        %v2362 = vadd.f32 %v2262, %v2330
        %v2363 = vadd.f32 %v2263, %v2331
        %v2364 = vadd.f32 %v2264, %v2332
        %v2365 = vadd.f32 %v2265, %v2333
        %v2366 = vld [vmem:[%s2063] sm:$0xff]
        %v2367 = vld [vmem:[%s2063 + $0x8] sm:$0xff]
        %v2368 = vld [vmem:[%s2063 + $0x18] sm:$0xff]
        %v2369 = vld [vmem:[%s2063 + $0x20] sm:$0xff]
        %v2370 = vld [vmem:[%s2063 + $0x30] sm:$0xff]
        %v2371 = vld [vmem:[%s2063 + $0x38] sm:$0xff]
        %v2372 = vld [vmem:[%s2063 + $0x48] sm:$0xff]
        %v2373 = vld [vmem:[%s2063 + $0x50] sm:$0xff]
        %v2374 = vld [vmem:[%s2063 + $0x60] sm:$0xff]
        %v2375 = vld [vmem:[%s2063 + $0x68] sm:$0xff]
        %v2376 = vld [vmem:[%s2063 + $0x78] sm:$0xff]
        %v2377 = vld [vmem:[%s2063 + $0x80] sm:$0xff]
        %v2378 = vld [vmem:[%s2063 + $0x90] sm:$0xff]
        %v2379 = vld [vmem:[%s2063 + $0x98] sm:$0xff]
        %v2380 = vld [vmem:[%s2063 + $0xa8] sm:$0xff]
        %v2381 = vld [vmem:[%s2063 + $0xb0] sm:$0xff]
        %v2382 = vld [vmem:[%s2063 + $0xc0] sm:$0xff]
        %v2383 = vld [vmem:[%s2063 + $0xc8] sm:$0xff]
        %v2384 = vld [vmem:[%s2063 + $0xd8] sm:$0xff]
        %v2385 = vld [vmem:[%s2063 + $0xe0] sm:$0xff]
        %v2386 = vld [vmem:[%s2063 + $0xf0] sm:$0xff]
        %v2387 = vld [vmem:[%s2063 + $0xf8] sm:$0xff]
        %v2388 = vld [vmem:[%s2063 + $0x108] sm:$0xff]
        %v2389 = vld [vmem:[%s2063 + $0x110] sm:$0xff]
        %v2390 = vld [vmem:[%s2063 + $0x120] sm:$0xff]
        %v2391 = vld [vmem:[%s2063 + $0x128] sm:$0xff]
        %v2392 = vld [vmem:[%s2063 + $0x138] sm:$0xff]
        %v2393 = vld [vmem:[%s2063 + $0x140] sm:$0xff]
        %v2394 = vld [vmem:[%s2063 + $0x150] sm:$0xff]
        %v2395 = vld [vmem:[%s2063 + $0x158] sm:$0xff]
        %v2396 = vld [vmem:[%s2063 + $0x168] sm:$0xff]
        %v2397 = vld [vmem:[%s2063 + $0x170] sm:$0xff]
        %v2398 = vlaneseq
        %v2399 = vshrl.u32 %v2398, 7
        %v2400 = vsub.s32 3, %v2399
        %v2401 = vrot.slane %v2096, %v2400
        %v2402 = vmul.f32 %v2366, %v2401
        %v2403 = vmul.f32 %v2367, %v2401
        %v2404 = vmul.f32 %v2368, %v2401
        %v2405 = vmul.f32 %v2369, %v2401
        %v2406 = vmul.f32 %v2370, %v2401
        %v2407 = vmul.f32 %v2371, %v2401
        %v2408 = vmul.f32 %v2372, %v2401
        %v2409 = vmul.f32 %v2373, %v2401
        %v2410 = vmul.f32 %v2374, %v2401
        %v2411 = vmul.f32 %v2375, %v2401
        %v2412 = vmul.f32 %v2376, %v2401
        %v2413 = vmul.f32 %v2377, %v2401
        %v2414 = vmul.f32 %v2378, %v2401
        %v2415 = vmul.f32 %v2379, %v2401
        %v2416 = vmul.f32 %v2380, %v2401
        %v2417 = vmul.f32 %v2381, %v2401
        %v2418 = vmul.f32 %v2382, %v2401
        %v2419 = vmul.f32 %v2383, %v2401
        %v2420 = vmul.f32 %v2384, %v2401
        %v2421 = vmul.f32 %v2385, %v2401
        %v2422 = vmul.f32 %v2386, %v2401
        %v2423 = vmul.f32 %v2387, %v2401
        %v2424 = vmul.f32 %v2388, %v2401
        %v2425 = vmul.f32 %v2389, %v2401
        %v2426 = vmul.f32 %v2390, %v2401
        %v2427 = vmul.f32 %v2391, %v2401
        %v2428 = vmul.f32 %v2392, %v2401
        %v2429 = vmul.f32 %v2393, %v2401
        %v2430 = vmul.f32 %v2394, %v2401
        %v2431 = vmul.f32 %v2395, %v2401
        %v2432 = vmul.f32 %v2396, %v2401
        %v2433 = vmul.f32 %v2397, %v2401
        %v2434 = vadd.f32 %v2334, %v2402
        %v2435 = vadd.f32 %v2335, %v2403
        %v2436 = vadd.f32 %v2336, %v2404
        %v2437 = vadd.f32 %v2337, %v2405
        %v2438 = vadd.f32 %v2338, %v2406
        %v2439 = vadd.f32 %v2339, %v2407
        %v2440 = vadd.f32 %v2340, %v2408
        %v2441 = vadd.f32 %v2341, %v2409
        %v2442 = vadd.f32 %v2342, %v2410
        %v2443 = vadd.f32 %v2343, %v2411
        %v2444 = vadd.f32 %v2344, %v2412
        %v2445 = vadd.f32 %v2345, %v2413
        %v2446 = vadd.f32 %v2346, %v2414
        %v2447 = vadd.f32 %v2347, %v2415
        %v2448 = vadd.f32 %v2348, %v2416
        %v2449 = vadd.f32 %v2349, %v2417
        %v2450 = vadd.f32 %v2350, %v2418
        %v2451 = vadd.f32 %v2351, %v2419
        %v2452 = vadd.f32 %v2352, %v2420
        %v2453 = vadd.f32 %v2353, %v2421
        %v2454 = vadd.f32 %v2354, %v2422
        %v2455 = vadd.f32 %v2355, %v2423
        %v2456 = vadd.f32 %v2356, %v2424
        %v2457 = vadd.f32 %v2357, %v2425
        %v2458 = vadd.f32 %v2358, %v2426
        %v2459 = vadd.f32 %v2359, %v2427
        %v2460 = vadd.f32 %v2360, %v2428
        %v2461 = vadd.f32 %v2361, %v2429
        %v2462 = vadd.f32 %v2362, %v2430
        %v2463 = vadd.f32 %v2363, %v2431
        %v2464 = vadd.f32 %v2364, %v2432
        %v2465 = vadd.f32 %v2365, %v2433
        %v2466 = vld [vmem:[%s2063 + $0x1] sm:$0xff]
        %v2467 = vld [vmem:[%s2063 + $0x9] sm:$0xff]
        %v2468 = vld [vmem:[%s2063 + $0x19] sm:$0xff]
        %v2469 = vld [vmem:[%s2063 + $0x21] sm:$0xff]
        %v2470 = vld [vmem:[%s2063 + $0x31] sm:$0xff]
        %v2471 = vld [vmem:[%s2063 + $0x39] sm:$0xff]
        %v2472 = vld [vmem:[%s2063 + $0x49] sm:$0xff]
        %v2473 = vld [vmem:[%s2063 + $0x51] sm:$0xff]
        %v2474 = vld [vmem:[%s2063 + $0x61] sm:$0xff]
        %v2475 = vld [vmem:[%s2063 + $0x69] sm:$0xff]
        %v2476 = vld [vmem:[%s2063 + $0x79] sm:$0xff]
        %v2477 = vld [vmem:[%s2063 + $0x81] sm:$0xff]
        %v2478 = vld [vmem:[%s2063 + $0x91] sm:$0xff]
        %v2479 = vld [vmem:[%s2063 + $0x99] sm:$0xff]
        %v2480 = vld [vmem:[%s2063 + $0xa9] sm:$0xff]
        %v2481 = vld [vmem:[%s2063 + $0xb1] sm:$0xff]
        %v2482 = vld [vmem:[%s2063 + $0xc1] sm:$0xff]
        %v2483 = vld [vmem:[%s2063 + $0xc9] sm:$0xff]
        %v2484 = vld [vmem:[%s2063 + $0xd9] sm:$0xff]
        %v2485 = vld [vmem:[%s2063 + $0xe1] sm:$0xff]
        %v2486 = vld [vmem:[%s2063 + $0xf1] sm:$0xff]
        %v2487 = vld [vmem:[%s2063 + $0xf9] sm:$0xff]
        %v2488 = vld [vmem:[%s2063 + $0x109] sm:$0xff]
        %v2489 = vld [vmem:[%s2063 + $0x111] sm:$0xff]
        %v2490 = vld [vmem:[%s2063 + $0x121] sm:$0xff]
        %v2491 = vld [vmem:[%s2063 + $0x129] sm:$0xff]
        %v2492 = vld [vmem:[%s2063 + $0x139] sm:$0xff]
        %v2493 = vld [vmem:[%s2063 + $0x141] sm:$0xff]
        %v2494 = vld [vmem:[%s2063 + $0x151] sm:$0xff]
        %v2495 = vld [vmem:[%s2063 + $0x159] sm:$0xff]
        %v2496 = vld [vmem:[%s2063 + $0x169] sm:$0xff]
        %v2497 = vld [vmem:[%s2063 + $0x171] sm:$0xff]
        %v2498 = vlaneseq
        %v2499 = vshrl.u32 %v2498, 7
        %v2500 = vsub.s32 4, %v2499
        %v2501 = vrot.slane %v2096, %v2500
        %v2502 = vmul.f32 %v2466, %v2501
        %v2503 = vmul.f32 %v2467, %v2501
        %v2504 = vmul.f32 %v2468, %v2501
        %v2505 = vmul.f32 %v2469, %v2501
        %v2506 = vmul.f32 %v2470, %v2501
        %v2507 = vmul.f32 %v2471, %v2501
        %v2508 = vmul.f32 %v2472, %v2501
        %v2509 = vmul.f32 %v2473, %v2501
        %v2510 = vmul.f32 %v2474, %v2501
        %v2511 = vmul.f32 %v2475, %v2501
        %v2512 = vmul.f32 %v2476, %v2501
        %v2513 = vmul.f32 %v2477, %v2501
        %v2514 = vmul.f32 %v2478, %v2501
        %v2515 = vmul.f32 %v2479, %v2501
        %v2516 = vmul.f32 %v2480, %v2501
        %v2517 = vmul.f32 %v2481, %v2501
        %v2518 = vmul.f32 %v2482, %v2501
        %v2519 = vmul.f32 %v2483, %v2501
        %v2520 = vmul.f32 %v2484, %v2501
        %v2521 = vmul.f32 %v2485, %v2501
        %v2522 = vmul.f32 %v2486, %v2501
        %v2523 = vmul.f32 %v2487, %v2501
        %v2524 = vmul.f32 %v2488, %v2501
        %v2525 = vmul.f32 %v2489, %v2501
        %v2526 = vmul.f32 %v2490, %v2501
        %v2527 = vmul.f32 %v2491, %v2501
        %v2528 = vmul.f32 %v2492, %v2501
        %v2529 = vmul.f32 %v2493, %v2501
        %v2530 = vmul.f32 %v2494, %v2501
        %v2531 = vmul.f32 %v2495, %v2501
        %v2532 = vmul.f32 %v2496, %v2501
        %v2533 = vmul.f32 %v2497, %v2501
        %v2534 = vadd.f32 %v2434, %v2502
        %v2535 = vadd.f32 %v2435, %v2503
        %v2536 = vadd.f32 %v2436, %v2504
        %v2537 = vadd.f32 %v2437, %v2505
        %v2538 = vadd.f32 %v2438, %v2506
        %v2539 = vadd.f32 %v2439, %v2507
        %v2540 = vadd.f32 %v2440, %v2508
        %v2541 = vadd.f32 %v2441, %v2509
        %v2542 = vadd.f32 %v2442, %v2510
        %v2543 = vadd.f32 %v2443, %v2511
        %v2544 = vadd.f32 %v2444, %v2512
        %v2545 = vadd.f32 %v2445, %v2513
        %v2546 = vadd.f32 %v2446, %v2514
        %v2547 = vadd.f32 %v2447, %v2515
        %v2548 = vadd.f32 %v2448, %v2516
        %v2549 = vadd.f32 %v2449, %v2517
        %v2550 = vadd.f32 %v2450, %v2518
        %v2551 = vadd.f32 %v2451, %v2519
        %v2552 = vadd.f32 %v2452, %v2520
        %v2553 = vadd.f32 %v2453, %v2521
        %v2554 = vadd.f32 %v2454, %v2522
        %v2555 = vadd.f32 %v2455, %v2523
        %v2556 = vadd.f32 %v2456, %v2524
        %v2557 = vadd.f32 %v2457, %v2525
        %v2558 = vadd.f32 %v2458, %v2526
        %v2559 = vadd.f32 %v2459, %v2527
        %v2560 = vadd.f32 %v2460, %v2528
        %v2561 = vadd.f32 %v2461, %v2529
        %v2562 = vadd.f32 %v2462, %v2530
        %v2563 = vadd.f32 %v2463, %v2531
        %v2564 = vadd.f32 %v2464, %v2532
        %v2565 = vadd.f32 %v2465, %v2533
        %v2566 = vld [vmem:[%s2063 + $0x2] sm:$0xff]
        %v2567 = vld [vmem:[%s2063 + $0xa] sm:$0xff]
        %v2568 = vld [vmem:[%s2063 + $0x1a] sm:$0xff]
        %v2569 = vld [vmem:[%s2063 + $0x22] sm:$0xff]
        %v2570 = vld [vmem:[%s2063 + $0x32] sm:$0xff]
        %v2571 = vld [vmem:[%s2063 + $0x3a] sm:$0xff]
        %v2572 = vld [vmem:[%s2063 + $0x4a] sm:$0xff]
        %v2573 = vld [vmem:[%s2063 + $0x52] sm:$0xff]
        %v2574 = vld [vmem:[%s2063 + $0x62] sm:$0xff]
        %v2575 = vld [vmem:[%s2063 + $0x6a] sm:$0xff]
        %v2576 = vld [vmem:[%s2063 + $0x7a] sm:$0xff]
        %v2577 = vld [vmem:[%s2063 + $0x82] sm:$0xff]
        %v2578 = vld [vmem:[%s2063 + $0x92] sm:$0xff]
        %v2579 = vld [vmem:[%s2063 + $0x9a] sm:$0xff]
        %v2580 = vld [vmem:[%s2063 + $0xaa] sm:$0xff]
        %v2581 = vld [vmem:[%s2063 + $0xb2] sm:$0xff]
        %v2582 = vld [vmem:[%s2063 + $0xc2] sm:$0xff]
        %v2583 = vld [vmem:[%s2063 + $0xca] sm:$0xff]
        %v2584 = vld [vmem:[%s2063 + $0xda] sm:$0xff]
        %v2585 = vld [vmem:[%s2063 + $0xe2] sm:$0xff]
        %v2586 = vld [vmem:[%s2063 + $0xf2] sm:$0xff]
        %v2587 = vld [vmem:[%s2063 + $0xfa] sm:$0xff]
        %v2588 = vld [vmem:[%s2063 + $0x10a] sm:$0xff]
        %v2589 = vld [vmem:[%s2063 + $0x112] sm:$0xff]
        %v2590 = vld [vmem:[%s2063 + $0x122] sm:$0xff]
        %v2591 = vld [vmem:[%s2063 + $0x12a] sm:$0xff]
        %v2592 = vld [vmem:[%s2063 + $0x13a] sm:$0xff]
        %v2593 = vld [vmem:[%s2063 + $0x142] sm:$0xff]
        %v2594 = vld [vmem:[%s2063 + $0x152] sm:$0xff]
        %v2595 = vld [vmem:[%s2063 + $0x15a] sm:$0xff]
        %v2596 = vld [vmem:[%s2063 + $0x16a] sm:$0xff]
        %v2597 = vld [vmem:[%s2063 + $0x172] sm:$0xff]
        %v2598 = vlaneseq
        %v2599 = vshrl.u32 %v2598, 7
        %v2600 = vsub.s32 5, %v2599
        %v2601 = vrot.slane %v2096, %v2600
        %v2602 = vmul.f32 %v2566, %v2601
        %v2603 = vmul.f32 %v2567, %v2601
        %v2604 = vmul.f32 %v2568, %v2601
        %v2605 = vmul.f32 %v2569, %v2601
        %v2606 = vmul.f32 %v2570, %v2601
        %v2607 = vmul.f32 %v2571, %v2601
        %v2608 = vmul.f32 %v2572, %v2601
        %v2609 = vmul.f32 %v2573, %v2601
        %v2610 = vmul.f32 %v2574, %v2601
        %v2611 = vmul.f32 %v2575, %v2601
        %v2612 = vmul.f32 %v2576, %v2601
        %v2613 = vmul.f32 %v2577, %v2601
        %v2614 = vmul.f32 %v2578, %v2601
        %v2615 = vmul.f32 %v2579, %v2601
        %v2616 = vmul.f32 %v2580, %v2601
        %v2617 = vmul.f32 %v2581, %v2601
        %v2618 = vmul.f32 %v2582, %v2601
        %v2619 = vmul.f32 %v2583, %v2601
        %v2620 = vmul.f32 %v2584, %v2601
        %v2621 = vmul.f32 %v2585, %v2601
        %v2622 = vmul.f32 %v2586, %v2601
        %v2623 = vmul.f32 %v2587, %v2601
        %v2624 = vmul.f32 %v2588, %v2601
        %v2625 = vmul.f32 %v2589, %v2601
        %v2626 = vmul.f32 %v2590, %v2601
        %v2627 = vmul.f32 %v2591, %v2601
        %v2628 = vmul.f32 %v2592, %v2601
        %v2629 = vmul.f32 %v2593, %v2601
        %v2630 = vmul.f32 %v2594, %v2601
        %v2631 = vmul.f32 %v2595, %v2601
        %v2632 = vmul.f32 %v2596, %v2601
        %v2633 = vmul.f32 %v2597, %v2601
        %v2634 = vadd.f32 %v2534, %v2602
        %v2635 = vadd.f32 %v2535, %v2603
        %v2636 = vadd.f32 %v2536, %v2604
        %v2637 = vadd.f32 %v2537, %v2605
        %v2638 = vadd.f32 %v2538, %v2606
        %v2639 = vadd.f32 %v2539, %v2607
        %v2640 = vadd.f32 %v2540, %v2608
        %v2641 = vadd.f32 %v2541, %v2609
        %v2642 = vadd.f32 %v2542, %v2610
        %v2643 = vadd.f32 %v2543, %v2611
        %v2644 = vadd.f32 %v2544, %v2612
        %v2645 = vadd.f32 %v2545, %v2613
        %v2646 = vadd.f32 %v2546, %v2614
        %v2647 = vadd.f32 %v2547, %v2615
        %v2648 = vadd.f32 %v2548, %v2616
        %v2649 = vadd.f32 %v2549, %v2617
        %v2650 = vadd.f32 %v2550, %v2618
        %v2651 = vadd.f32 %v2551, %v2619
        %v2652 = vadd.f32 %v2552, %v2620
        %v2653 = vadd.f32 %v2553, %v2621
        %v2654 = vadd.f32 %v2554, %v2622
        %v2655 = vadd.f32 %v2555, %v2623
        %v2656 = vadd.f32 %v2556, %v2624
        %v2657 = vadd.f32 %v2557, %v2625
        %v2658 = vadd.f32 %v2558, %v2626
        %v2659 = vadd.f32 %v2559, %v2627
        %v2660 = vadd.f32 %v2560, %v2628
        %v2661 = vadd.f32 %v2561, %v2629
        %v2662 = vadd.f32 %v2562, %v2630
        %v2663 = vadd.f32 %v2563, %v2631
        %v2664 = vadd.f32 %v2564, %v2632
        %v2665 = vadd.f32 %v2565, %v2633
        %s2666 = scalar_lea.vmem [#allocation3], 48
        %v2667 = vld [vmem:[%s2666] sm:$0xff]
        %v2668 = vld [vmem:[%s2666 + $0x8] sm:$0xff]
        %v2669 = vld [vmem:[%s2666 + $0x18] sm:$0xff]
        %v2670 = vld [vmem:[%s2666 + $0x20] sm:$0xff]
        %v2671 = vld [vmem:[%s2666 + $0x30] sm:$0xff]
        %v2672 = vld [vmem:[%s2666 + $0x38] sm:$0xff]
        %v2673 = vld [vmem:[%s2666 + $0x48] sm:$0xff]
        %v2674 = vld [vmem:[%s2666 + $0x50] sm:$0xff]
        %v2675 = vld [vmem:[%s2666 + $0x60] sm:$0xff]
        %v2676 = vld [vmem:[%s2666 + $0x68] sm:$0xff]
        %v2677 = vld [vmem:[%s2666 + $0x78] sm:$0xff]
        %v2678 = vld [vmem:[%s2666 + $0x80] sm:$0xff]
        %v2679 = vld [vmem:[%s2666 + $0x90] sm:$0xff]
        %v2680 = vld [vmem:[%s2666 + $0x98] sm:$0xff]
        %v2681 = vld [vmem:[%s2666 + $0xa8] sm:$0xff]
        %v2682 = vld [vmem:[%s2666 + $0xb0] sm:$0xff]
        %v2683 = vld [vmem:[%s2666 + $0xc0] sm:$0xff]
        %v2684 = vld [vmem:[%s2666 + $0xc8] sm:$0xff]
        %v2685 = vld [vmem:[%s2666 + $0xd8] sm:$0xff]
        %v2686 = vld [vmem:[%s2666 + $0xe0] sm:$0xff]
        %v2687 = vld [vmem:[%s2666 + $0xf0] sm:$0xff]
        %v2688 = vld [vmem:[%s2666 + $0xf8] sm:$0xff]
        %v2689 = vld [vmem:[%s2666 + $0x108] sm:$0xff]
        %v2690 = vld [vmem:[%s2666 + $0x110] sm:$0xff]
        %v2691 = vld [vmem:[%s2666 + $0x120] sm:$0xff]
        %v2692 = vld [vmem:[%s2666 + $0x128] sm:$0xff]
        %v2693 = vld [vmem:[%s2666 + $0x138] sm:$0xff]
        %v2694 = vld [vmem:[%s2666 + $0x140] sm:$0xff]
        %v2695 = vld [vmem:[%s2666 + $0x150] sm:$0xff]
        %v2696 = vld [vmem:[%s2666 + $0x158] sm:$0xff]
        %v2697 = vld [vmem:[%s2666 + $0x168] sm:$0xff]
        %v2698 = vld [vmem:[%s2666 + $0x170] sm:$0xff]
        %v2699 = vlaneseq
        %v2700 = vshrl.u32 %v2699, 7
        %v2701 = vsub.s32 6, %v2700
        %v2702 = vrot.slane %v2096, %v2701
        %v2703 = vmul.f32 %v2667, %v2702
        %v2704 = vmul.f32 %v2668, %v2702
        %v2705 = vmul.f32 %v2669, %v2702
        %v2706 = vmul.f32 %v2670, %v2702
        %v2707 = vmul.f32 %v2671, %v2702
        %v2708 = vmul.f32 %v2672, %v2702
        %v2709 = vmul.f32 %v2673, %v2702
        %v2710 = vmul.f32 %v2674, %v2702
        %v2711 = vmul.f32 %v2675, %v2702
        %v2712 = vmul.f32 %v2676, %v2702
        %v2713 = vmul.f32 %v2677, %v2702
        %v2714 = vmul.f32 %v2678, %v2702
        %v2715 = vmul.f32 %v2679, %v2702
        %v2716 = vmul.f32 %v2680, %v2702
        %v2717 = vmul.f32 %v2681, %v2702
        %v2718 = vmul.f32 %v2682, %v2702
        %v2719 = vmul.f32 %v2683, %v2702
        %v2720 = vmul.f32 %v2684, %v2702
        %v2721 = vmul.f32 %v2685, %v2702
        %v2722 = vmul.f32 %v2686, %v2702
        %v2723 = vmul.f32 %v2687, %v2702
        %v2724 = vmul.f32 %v2688, %v2702
        %v2725 = vmul.f32 %v2689, %v2702
        %v2726 = vmul.f32 %v2690, %v2702
        %v2727 = vmul.f32 %v2691, %v2702
        %v2728 = vmul.f32 %v2692, %v2702
        %v2729 = vmul.f32 %v2693, %v2702
        %v2730 = vmul.f32 %v2694, %v2702
        %v2731 = vmul.f32 %v2695, %v2702
        %v2732 = vmul.f32 %v2696, %v2702
        %v2733 = vmul.f32 %v2697, %v2702
        %v2734 = vmul.f32 %v2698, %v2702
        %v2735 = vadd.f32 %v2634, %v2703
        %v2736 = vadd.f32 %v2635, %v2704
        %v2737 = vadd.f32 %v2636, %v2705
        %v2738 = vadd.f32 %v2637, %v2706
        %v2739 = vadd.f32 %v2638, %v2707
        %v2740 = vadd.f32 %v2639, %v2708
        %v2741 = vadd.f32 %v2640, %v2709
        %v2742 = vadd.f32 %v2641, %v2710
        %v2743 = vadd.f32 %v2642, %v2711
        %v2744 = vadd.f32 %v2643, %v2712
        %v2745 = vadd.f32 %v2644, %v2713
        %v2746 = vadd.f32 %v2645, %v2714
        %v2747 = vadd.f32 %v2646, %v2715
        %v2748 = vadd.f32 %v2647, %v2716
        %v2749 = vadd.f32 %v2648, %v2717
        %v2750 = vadd.f32 %v2649, %v2718
        %v2751 = vadd.f32 %v2650, %v2719
        %v2752 = vadd.f32 %v2651, %v2720
        %v2753 = vadd.f32 %v2652, %v2721
        %v2754 = vadd.f32 %v2653, %v2722
        %v2755 = vadd.f32 %v2654, %v2723
        %v2756 = vadd.f32 %v2655, %v2724
        %v2757 = vadd.f32 %v2656, %v2725
        %v2758 = vadd.f32 %v2657, %v2726
        %v2759 = vadd.f32 %v2658, %v2727
        %v2760 = vadd.f32 %v2659, %v2728
        %v2761 = vadd.f32 %v2660, %v2729
        %v2762 = vadd.f32 %v2661, %v2730
        %v2763 = vadd.f32 %v2662, %v2731
        %v2764 = vadd.f32 %v2663, %v2732
        %v2765 = vadd.f32 %v2664, %v2733
        %v2766 = vadd.f32 %v2665, %v2734
        %v2767 = vld [vmem:[%s2666 + $0x1] sm:$0xff]
        %v2768 = vld [vmem:[%s2666 + $0x9] sm:$0xff]
        %v2769 = vld [vmem:[%s2666 + $0x19] sm:$0xff]
        %v2770 = vld [vmem:[%s2666 + $0x21] sm:$0xff]
        %v2771 = vld [vmem:[%s2666 + $0x31] sm:$0xff]
        %v2772 = vld [vmem:[%s2666 + $0x39] sm:$0xff]
        %v2773 = vld [vmem:[%s2666 + $0x49] sm:$0xff]
        %v2774 = vld [vmem:[%s2666 + $0x51] sm:$0xff]
        %v2775 = vld [vmem:[%s2666 + $0x61] sm:$0xff]
        %v2776 = vld [vmem:[%s2666 + $0x69] sm:$0xff]
        %v2777 = vld [vmem:[%s2666 + $0x79] sm:$0xff]
        %v2778 = vld [vmem:[%s2666 + $0x81] sm:$0xff]
        %v2779 = vld [vmem:[%s2666 + $0x91] sm:$0xff]
        %v2780 = vld [vmem:[%s2666 + $0x99] sm:$0xff]
        %v2781 = vld [vmem:[%s2666 + $0xa9] sm:$0xff]
        %v2782 = vld [vmem:[%s2666 + $0xb1] sm:$0xff]
        %v2783 = vld [vmem:[%s2666 + $0xc1] sm:$0xff]
        %v2784 = vld [vmem:[%s2666 + $0xc9] sm:$0xff]
        %v2785 = vld [vmem:[%s2666 + $0xd9] sm:$0xff]
        %v2786 = vld [vmem:[%s2666 + $0xe1] sm:$0xff]
        %v2787 = vld [vmem:[%s2666 + $0xf1] sm:$0xff]
        %v2788 = vld [vmem:[%s2666 + $0xf9] sm:$0xff]
        %v2789 = vld [vmem:[%s2666 + $0x109] sm:$0xff]
        %v2790 = vld [vmem:[%s2666 + $0x111] sm:$0xff]
        %v2791 = vld [vmem:[%s2666 + $0x121] sm:$0xff]
        %v2792 = vld [vmem:[%s2666 + $0x129] sm:$0xff]
        %v2793 = vld [vmem:[%s2666 + $0x139] sm:$0xff]
        %v2794 = vld [vmem:[%s2666 + $0x141] sm:$0xff]
        %v2795 = vld [vmem:[%s2666 + $0x151] sm:$0xff]
        %v2796 = vld [vmem:[%s2666 + $0x159] sm:$0xff]
        %v2797 = vld [vmem:[%s2666 + $0x169] sm:$0xff]
        %v2798 = vld [vmem:[%s2666 + $0x171] sm:$0xff]
        %v2799 = vlaneseq
        %v2800 = vshrl.u32 %v2799, 7
        %v2801 = vsub.s32 7, %v2800
        %v2802 = vrot.slane %v2096, %v2801
        %v2803 = vmul.f32 %v2767, %v2802
        %v2804 = vmul.f32 %v2768, %v2802
        %v2805 = vmul.f32 %v2769, %v2802
        %v2806 = vmul.f32 %v2770, %v2802
        %v2807 = vmul.f32 %v2771, %v2802
        %v2808 = vmul.f32 %v2772, %v2802
        %v2809 = vmul.f32 %v2773, %v2802
        %v2810 = vmul.f32 %v2774, %v2802
        %v2811 = vmul.f32 %v2775, %v2802
        %v2812 = vmul.f32 %v2776, %v2802
        %v2813 = vmul.f32 %v2777, %v2802
        %v2814 = vmul.f32 %v2778, %v2802
        %v2815 = vmul.f32 %v2779, %v2802
        %v2816 = vmul.f32 %v2780, %v2802
        %v2817 = vmul.f32 %v2781, %v2802
        %v2818 = vmul.f32 %v2782, %v2802
        %v2819 = vmul.f32 %v2783, %v2802
        %v2820 = vmul.f32 %v2784, %v2802
        %v2821 = vmul.f32 %v2785, %v2802
        %v2822 = vmul.f32 %v2786, %v2802
        %v2823 = vmul.f32 %v2787, %v2802
        %v2824 = vmul.f32 %v2788, %v2802
        %v2825 = vmul.f32 %v2789, %v2802
        %v2826 = vmul.f32 %v2790, %v2802
        %v2827 = vmul.f32 %v2791, %v2802
        %v2828 = vmul.f32 %v2792, %v2802
        %v2829 = vmul.f32 %v2793, %v2802
        %v2830 = vmul.f32 %v2794, %v2802
        %v2831 = vmul.f32 %v2795, %v2802
        %v2832 = vmul.f32 %v2796, %v2802
        %v2833 = vmul.f32 %v2797, %v2802
        %v2834 = vmul.f32 %v2798, %v2802
        %v2835 = vadd.f32 %v2735, %v2803
        %v2836 = vadd.f32 %v2736, %v2804
        %v2837 = vadd.f32 %v2737, %v2805
        %v2838 = vadd.f32 %v2738, %v2806
        %v2839 = vadd.f32 %v2739, %v2807
        %v2840 = vadd.f32 %v2740, %v2808
        %v2841 = vadd.f32 %v2741, %v2809
        %v2842 = vadd.f32 %v2742, %v2810
        %v2843 = vadd.f32 %v2743, %v2811
        %v2844 = vadd.f32 %v2744, %v2812
        %v2845 = vadd.f32 %v2745, %v2813
        %v2846 = vadd.f32 %v2746, %v2814
        %v2847 = vadd.f32 %v2747, %v2815
        %v2848 = vadd.f32 %v2748, %v2816
        %v2849 = vadd.f32 %v2749, %v2817
        %v2850 = vadd.f32 %v2750, %v2818
        %v2851 = vadd.f32 %v2751, %v2819
        %v2852 = vadd.f32 %v2752, %v2820
        %v2853 = vadd.f32 %v2753, %v2821
        %v2854 = vadd.f32 %v2754, %v2822
        %v2855 = vadd.f32 %v2755, %v2823
        %v2856 = vadd.f32 %v2756, %v2824
        %v2857 = vadd.f32 %v2757, %v2825
        %v2858 = vadd.f32 %v2758, %v2826
        %v2859 = vadd.f32 %v2759, %v2827
        %v2860 = vadd.f32 %v2760, %v2828
        %v2861 = vadd.f32 %v2761, %v2829
        %v2862 = vadd.f32 %v2762, %v2830
        %v2863 = vadd.f32 %v2763, %v2831
        %v2864 = vadd.f32 %v2764, %v2832
        %v2865 = vadd.f32 %v2765, %v2833
        %v2866 = vadd.f32 %v2766, %v2834
        %v2867 = vld [vmem:[%s2666 + $0x2] sm:$0xff]
        %v2868 = vld [vmem:[%s2666 + $0xa] sm:$0xff]
        %v2869 = vld [vmem:[%s2666 + $0x1a] sm:$0xff]
        %v2870 = vld [vmem:[%s2666 + $0x22] sm:$0xff]
        %v2871 = vld [vmem:[%s2666 + $0x32] sm:$0xff]
        %v2872 = vld [vmem:[%s2666 + $0x3a] sm:$0xff]
        %v2873 = vld [vmem:[%s2666 + $0x4a] sm:$0xff]
        %v2874 = vld [vmem:[%s2666 + $0x52] sm:$0xff]
        %v2875 = vld [vmem:[%s2666 + $0x62] sm:$0xff]
        %v2876 = vld [vmem:[%s2666 + $0x6a] sm:$0xff]
        %v2877 = vld [vmem:[%s2666 + $0x7a] sm:$0xff]
        %v2878 = vld [vmem:[%s2666 + $0x82] sm:$0xff]
        %v2879 = vld [vmem:[%s2666 + $0x92] sm:$0xff]
        %v2880 = vld [vmem:[%s2666 + $0x9a] sm:$0xff]
        %v2881 = vld [vmem:[%s2666 + $0xaa] sm:$0xff]
        %v2882 = vld [vmem:[%s2666 + $0xb2] sm:$0xff]
        %v2883 = vld [vmem:[%s2666 + $0xc2] sm:$0xff]
        %v2884 = vld [vmem:[%s2666 + $0xca] sm:$0xff]
        %v2885 = vld [vmem:[%s2666 + $0xda] sm:$0xff]
        %v2886 = vld [vmem:[%s2666 + $0xe2] sm:$0xff]
        %v2887 = vld [vmem:[%s2666 + $0xf2] sm:$0xff]
        %v2888 = vld [vmem:[%s2666 + $0xfa] sm:$0xff]
        %v2889 = vld [vmem:[%s2666 + $0x10a] sm:$0xff]
        %v2890 = vld [vmem:[%s2666 + $0x112] sm:$0xff]
        %v2891 = vld [vmem:[%s2666 + $0x122] sm:$0xff]
        %v2892 = vld [vmem:[%s2666 + $0x12a] sm:$0xff]
        %v2893 = vld [vmem:[%s2666 + $0x13a] sm:$0xff]
        %v2894 = vld [vmem:[%s2666 + $0x142] sm:$0xff]
        %v2895 = vld [vmem:[%s2666 + $0x152] sm:$0xff]
        %v2896 = vld [vmem:[%s2666 + $0x15a] sm:$0xff]
        %v2897 = vld [vmem:[%s2666 + $0x16a] sm:$0xff]
        %v2898 = vld [vmem:[%s2666 + $0x172] sm:$0xff]
        %v2899 = vlaneseq
        %v2900 = vshrl.u32 %v2899, 7
        %v2901 = vsub.s32 0, %v2900
        %v2902 = vrot.slane %v2097, %v2901
        %v2903 = vmul.f32 %v2867, %v2902
        %v2904 = vmul.f32 %v2868, %v2902
        %v2905 = vmul.f32 %v2869, %v2902
        %v2906 = vmul.f32 %v2870, %v2902
        %v2907 = vmul.f32 %v2871, %v2902
        %v2908 = vmul.f32 %v2872, %v2902
        %v2909 = vmul.f32 %v2873, %v2902
        %v2910 = vmul.f32 %v2874, %v2902
        %v2911 = vmul.f32 %v2875, %v2902
        %v2912 = vmul.f32 %v2876, %v2902
        %v2913 = vmul.f32 %v2877, %v2902
        %v2914 = vmul.f32 %v2878, %v2902
        %v2915 = vmul.f32 %v2879, %v2902
        %v2916 = vmul.f32 %v2880, %v2902
        %v2917 = vmul.f32 %v2881, %v2902
        %v2918 = vmul.f32 %v2882, %v2902
        %v2919 = vmul.f32 %v2883, %v2902
        %v2920 = vmul.f32 %v2884, %v2902
        %v2921 = vmul.f32 %v2885, %v2902
        %v2922 = vmul.f32 %v2886, %v2902
        %v2923 = vmul.f32 %v2887, %v2902
        %v2924 = vmul.f32 %v2888, %v2902
        %v2925 = vmul.f32 %v2889, %v2902
        %v2926 = vmul.f32 %v2890, %v2902
        %v2927 = vmul.f32 %v2891, %v2902
        %v2928 = vmul.f32 %v2892, %v2902
        %v2929 = vmul.f32 %v2893, %v2902
        %v2930 = vmul.f32 %v2894, %v2902
        %v2931 = vmul.f32 %v2895, %v2902
        %v2932 = vmul.f32 %v2896, %v2902
        %v2933 = vmul.f32 %v2897, %v2902
        %v2934 = vmul.f32 %v2898, %v2902
        %v2935 = vadd.f32 %v2835, %v2903
        %v2936 = vadd.f32 %v2836, %v2904
        %v2937 = vadd.f32 %v2837, %v2905
        %v2938 = vadd.f32 %v2838, %v2906
        %v2939 = vadd.f32 %v2839, %v2907
        %v2940 = vadd.f32 %v2840, %v2908
        %v2941 = vadd.f32 %v2841, %v2909
        %v2942 = vadd.f32 %v2842, %v2910
        %v2943 = vadd.f32 %v2843, %v2911
        %v2944 = vadd.f32 %v2844, %v2912
        %v2945 = vadd.f32 %v2845, %v2913
        %v2946 = vadd.f32 %v2846, %v2914
        %v2947 = vadd.f32 %v2847, %v2915
        %v2948 = vadd.f32 %v2848, %v2916
        %v2949 = vadd.f32 %v2849, %v2917
        %v2950 = vadd.f32 %v2850, %v2918
        %v2951 = vadd.f32 %v2851, %v2919
        %v2952 = vadd.f32 %v2852, %v2920
        %v2953 = vadd.f32 %v2853, %v2921
        %v2954 = vadd.f32 %v2854, %v2922
        %v2955 = vadd.f32 %v2855, %v2923
        %v2956 = vadd.f32 %v2856, %v2924
        %v2957 = vadd.f32 %v2857, %v2925
        %v2958 = vadd.f32 %v2858, %v2926
        %v2959 = vadd.f32 %v2859, %v2927
        %v2960 = vadd.f32 %v2860, %v2928
        %v2961 = vadd.f32 %v2861, %v2929
        %v2962 = vadd.f32 %v2862, %v2930
        %v2963 = vadd.f32 %v2863, %v2931
        %v2964 = vadd.f32 %v2864, %v2932
        %v2965 = vadd.f32 %v2865, %v2933
        %v2966 = vadd.f32 %v2866, %v2934
        %v2967 = vld [vmem:[%s6] sm:$0xff]
        %v2969 = vsel %vm2007, %v2935, 0
        %v2972 = vsel %vm2007, %v2936, 0
        %v2975 = vsel %vm2007, %v2937, 0
        %v2978 = vsel %vm2007, %v2938, 0
        %v2981 = vsel %vm2007, %v2939, 0
        %v2984 = vsel %vm2007, %v2940, 0
        %v2987 = vsel %vm2007, %v2941, 0
        %v2990 = vsel %vm2007, %v2942, 0
        %v2993 = vsel %vm2007, %v2943, 0
        %v2996 = vsel %vm2007, %v2944, 0
        %v2999 = vsel %vm2007, %v2945, 0
        %v3002 = vsel %vm2007, %v2946, 0
        %v3005 = vsel %vm2007, %v2947, 0
        %v3008 = vsel %vm2007, %v2948, 0
        %v3011 = vsel %vm2007, %v2949, 0
        %v3014 = vsel %vm2007, %v2950, 0
        %v3017 = vsel %vm2007, %v2951, 0
        %v3020 = vsel %vm2007, %v2952, 0
        %v3023 = vsel %vm2007, %v2953, 0
        %v3026 = vsel %vm2007, %v2954, 0
        %v3029 = vsel %vm2007, %v2955, 0
        %v3032 = vsel %vm2007, %v2956, 0
        %v3035 = vsel %vm2007, %v2957, 0
        %v3038 = vsel %vm2007, %v2958, 0
        %v3041 = vsel %vm2007, %v2959, 0
        %v3044 = vsel %vm2007, %v2960, 0
        %v3047 = vsel %vm2007, %v2961, 0
        %v3050 = vsel %vm2007, %v2962, 0
        %v3053 = vsel %vm2007, %v2963, 0
        %v3056 = vsel %vm2007, %v2964, 0
        %v3059 = vsel %vm2007, %v2965, 0
        %v3062 = vsel %vm2007, %v2966, 0
        %3064 = vmatprep.subr.mxu0 0.0
        %3065 = vmatpush1.msra.mxu0 %v2967
        %3066 = vmatprep.subr.mxu0 0.0
        %3067 = vmatpush1.msra.mxu0 0.0
        %3068 = vmatprep.subr.mxu0 0.0
        %3069 = vmatpush1.msra.mxu0 0.0
        %3070 = vmatprep.subr.mxu0 0.0
        %3071 = vmatpush1.msra.mxu0 0.0
        %3072 = vmatprep.subr.mxu0 0.0
        %3073 = vmatpush1.msra.mxu0 0.0
        %3074 = vmatprep.subr.mxu0 0.0
        %3075 = vmatpush1.msra.mxu0 0.0
        %3076 = vmatprep.subr.mxu0 0.0
        %3077 = vmatpush1.msra.mxu0 0.0
        %3078 = vmatprep.subr.mxu0 0.0
        %3079 = vmatpush1.msra.mxu0 0.0
        %3080 = vmatprep.subr.mxu0 0.0
        %3081 = vmatpush1.msra.mxu0 0.0
        %3082 = vmatprep.subr.mxu0 0.0
        %3083 = vmatpush1.msra.mxu0 0.0
        %3084 = vmatprep.subr.mxu0 0.0
        %3085 = vmatpush1.msra.mxu0 0.0
        %3086 = vmatprep.subr.mxu0 0.0
        %3087 = vmatpush1.msra.mxu0 0.0
        %3088 = vmatprep.subr.mxu0 0.0
        %3089 = vmatpush1.msra.mxu0 0.0
        %3090 = vmatprep.subr.mxu0 0.0
        %3091 = vmatpush1.msra.mxu0 0.0
        %3092 = vmatprep.subr.mxu0 0.0
        %3093 = vmatpush1.msra.mxu0 0.0
        %3094 = vmatprep.subr.mxu0 0.0
        %3095 = vmatpush1.msra.mxu0 0.0
        %3096 = vmatprep.subr.mxu0 0.0
        %3097 = vmatpush1.msra.mxu0 0.0
        %3098 = vmatprep.subr.mxu0 0.0
        %3099 = vmatpush1.msra.mxu0 0.0
        %3100 = vmatprep.subr.mxu0 0.0
        %3101 = vmatpush1.msra.mxu0 0.0
        %3102 = vmatprep.subr.mxu0 0.0
        %3103 = vmatpush1.msra.mxu0 0.0
        %3104 = vmatprep.subr.mxu0 0.0
        %3105 = vmatpush1.msra.mxu0 0.0
        %3106 = vmatprep.subr.mxu0 0.0
        %3107 = vmatpush1.msra.mxu0 0.0
        %3108 = vmatprep.subr.mxu0 0.0
        %3109 = vmatpush1.msra.mxu0 0.0
        %3110 = vmatprep.subr.mxu0 0.0
        %3111 = vmatpush1.msra.mxu0 0.0
        %3112 = vmatprep.subr.mxu0 0.0
        %3113 = vmatpush1.msra.mxu0 0.0
        %3114 = vmatprep.subr.mxu0 0.0
        %3115 = vmatpush1.msra.mxu0 0.0
        %3116 = vmatprep.subr.mxu0 0.0
        %3117 = vmatpush1.msra.mxu0 0.0
        %3118 = vmatprep.subr.mxu0 0.0
        %3119 = vmatpush1.msra.mxu0 0.0
        %3120 = vmatprep.subr.mxu0 0.0
        %3121 = vmatpush1.msra.mxu0 0.0
        %3122 = vmatprep.subr.mxu0 0.0
        %3123 = vmatpush1.msra.mxu0 0.0
        %3124 = vmatprep.subr.mxu0 0.0
        %3125 = vmatpush1.msra.mxu0 0.0
        %3126 = vmatprep.subr.mxu0 0.0
        %3127 = vmatpush1.msra.mxu0 0.0
        %3128 = vmatprep.mubr.f32.mxu0 0.0
        %3129 = vmatmul.mubr.f32.gmra.mrb[0].mxu0 %v2969
        %v3130 = vpop.f32.mrb[0].mxu0
        %v3131 = vadd.f32 0.0, %v3130
        %v3132 = vpop.f32.mrb[0].mxu0
        %3133 = vmatprep.mubr.f32.mxu0 0.0
        %3134 = vmatmul.mubr.f32.gmra.mrb[0].mxu0 %v2972
        %v3135 = vpop.f32.mrb[0].mxu0
        %v3136 = vadd.f32 0.0, %v3135
        %v3137 = vpop.f32.mrb[0].mxu0
        %3138 = vmatprep.mubr.f32.mxu0 0.0
        %3139 = vmatmul.mubr.f32.gmra.mrb[0].mxu0 %v2975
        %v3140 = vpop.f32.mrb[0].mxu0
        %v3141 = vadd.f32 0.0, %v3140
        %v3142 = vpop.f32.mrb[0].mxu0
        %3143 = vmatprep.mubr.f32.mxu0 0.0
        %3144 = vmatmul.mubr.f32.gmra.mrb[0].mxu0 %v2978
        %v3145 = vpop.f32.mrb[0].mxu0
        %v3146 = vadd.f32 0.0, %v3145
        %v3147 = vpop.f32.mrb[0].mxu0
        %3148 = vmatprep.mubr.f32.mxu0 0.0
        %3149 = vmatmul.mubr.f32.gmra.mrb[0].mxu0 %v2981
        %v3150 = vpop.f32.mrb[0].mxu0
        %v3151 = vadd.f32 0.0, %v3150
        %v3152 = vpop.f32.mrb[0].mxu0
        %3153 = vmatprep.mubr.f32.mxu0 0.0
        %3154 = vmatmul.mubr.f32.gmra.mrb[0].mxu0 %v2984
        %v3155 = vpop.f32.mrb[0].mxu0
        %v3156 = vadd.f32 0.0, %v3155
        %v3157 = vpop.f32.mrb[0].mxu0
        %3158 = vmatprep.mubr.f32.mxu0 0.0
        %3159 = vmatmul.mubr.f32.gmra.mrb[0].mxu0 %v2987
        %v3160 = vpop.f32.mrb[0].mxu0
        %v3161 = vadd.f32 0.0, %v3160
        %v3162 = vpop.f32.mrb[0].mxu0
        %3163 = vmatprep.mubr.f32.mxu0 0.0
        %3164 = vmatmul.mubr.f32.gmra.mrb[0].mxu0 %v2990
        %v3165 = vpop.f32.mrb[0].mxu0
        %v3166 = vadd.f32 0.0, %v3165
        %v3167 = vpop.f32.mrb[0].mxu0
        %3168 = vmatprep.mubr.f32.mxu0 0.0
        %3169 = vmatmul.mubr.f32.gmra.mrb[0].mxu0 %v2993
        %v3170 = vpop.f32.mrb[0].mxu0
        %v3171 = vadd.f32 0.0, %v3170
        %v3172 = vpop.f32.mrb[0].mxu0
        %3173 = vmatprep.mubr.f32.mxu0 0.0
        %3174 = vmatmul.mubr.f32.gmra.mrb[0].mxu0 %v2996
        %v3175 = vpop.f32.mrb[0].mxu0
        %v3176 = vadd.f32 0.0, %v3175
        %v3177 = vpop.f32.mrb[0].mxu0
        %3178 = vmatprep.mubr.f32.mxu0 0.0
        %3179 = vmatmul.mubr.f32.gmra.mrb[0].mxu0 %v2999
        %v3180 = vpop.f32.mrb[0].mxu0
        %v3181 = vadd.f32 0.0, %v3180
        %v3182 = vpop.f32.mrb[0].mxu0
        %3183 = vmatprep.mubr.f32.mxu0 0.0
        %3184 = vmatmul.mubr.f32.gmra.mrb[0].mxu0 %v3002
        %v3185 = vpop.f32.mrb[0].mxu0
        %v3186 = vadd.f32 0.0, %v3185
        %v3187 = vpop.f32.mrb[0].mxu0
        %3188 = vmatprep.mubr.f32.mxu0 0.0
        %3189 = vmatmul.mubr.f32.gmra.mrb[0].mxu0 %v3005
        %v3190 = vpop.f32.mrb[0].mxu0
        %v3191 = vadd.f32 0.0, %v3190
        %v3192 = vpop.f32.mrb[0].mxu0
        %3193 = vmatprep.mubr.f32.mxu0 0.0
        %3194 = vmatmul.mubr.f32.gmra.mrb[0].mxu0 %v3008
        %v3195 = vpop.f32.mrb[0].mxu0
        %v3196 = vadd.f32 0.0, %v3195
        %v3197 = vpop.f32.mrb[0].mxu0
        %3198 = vmatprep.mubr.f32.mxu0 0.0
        %3199 = vmatmul.mubr.f32.gmra.mrb[0].mxu0 %v3011
        %v3200 = vpop.f32.mrb[0].mxu0
        %v3201 = vadd.f32 0.0, %v3200
        %v3202 = vpop.f32.mrb[0].mxu0
        %3203 = vmatprep.mubr.f32.mxu0 0.0
        %3204 = vmatmul.mubr.f32.gmra.mrb[0].mxu0 %v3014
        %v3205 = vpop.f32.mrb[0].mxu0
        %v3206 = vadd.f32 0.0, %v3205
        %v3207 = vpop.f32.mrb[0].mxu0
        %3208 = vmatprep.mubr.f32.mxu0 0.0
        %3209 = vmatmul.mubr.f32.gmra.mrb[0].mxu0 %v3017
        %v3210 = vpop.f32.mrb[0].mxu0
        %v3211 = vadd.f32 0.0, %v3210
        %v3212 = vpop.f32.mrb[0].mxu0
        %3213 = vmatprep.mubr.f32.mxu0 0.0
        %3214 = vmatmul.mubr.f32.gmra.mrb[0].mxu0 %v3020
        %v3215 = vpop.f32.mrb[0].mxu0
        %v3216 = vadd.f32 0.0, %v3215
        %v3217 = vpop.f32.mrb[0].mxu0
        %3218 = vmatprep.mubr.f32.mxu0 0.0
        %3219 = vmatmul.mubr.f32.gmra.mrb[0].mxu0 %v3023
        %v3220 = vpop.f32.mrb[0].mxu0
        %v3221 = vadd.f32 0.0, %v3220
        %v3222 = vpop.f32.mrb[0].mxu0
        %3223 = vmatprep.mubr.f32.mxu0 0.0
        %3224 = vmatmul.mubr.f32.gmra.mrb[0].mxu0 %v3026
        %v3225 = vpop.f32.mrb[0].mxu0
        %v3226 = vadd.f32 0.0, %v3225
        %v3227 = vpop.f32.mrb[0].mxu0
        %3228 = vmatprep.mubr.f32.mxu0 0.0
        %3229 = vmatmul.mubr.f32.gmra.mrb[0].mxu0 %v3029
        %v3230 = vpop.f32.mrb[0].mxu0
        %v3231 = vadd.f32 0.0, %v3230
        %v3232 = vpop.f32.mrb[0].mxu0
        %3233 = vmatprep.mubr.f32.mxu0 0.0
        %3234 = vmatmul.mubr.f32.gmra.mrb[0].mxu0 %v3032
        %v3235 = vpop.f32.mrb[0].mxu0
        %v3236 = vadd.f32 0.0, %v3235
        %v3237 = vpop.f32.mrb[0].mxu0
        %3238 = vmatprep.mubr.f32.mxu0 0.0
        %3239 = vmatmul.mubr.f32.gmra.mrb[0].mxu0 %v3035
        %v3240 = vpop.f32.mrb[0].mxu0
        %v3241 = vadd.f32 0.0, %v3240
        %v3242 = vpop.f32.mrb[0].mxu0
        %3243 = vmatprep.mubr.f32.mxu0 0.0
        %3244 = vmatmul.mubr.f32.gmra.mrb[0].mxu0 %v3038
        %v3245 = vpop.f32.mrb[0].mxu0
        %v3246 = vadd.f32 0.0, %v3245
        %v3247 = vpop.f32.mrb[0].mxu0
        %3248 = vmatprep.mubr.f32.mxu0 0.0
        %3249 = vmatmul.mubr.f32.gmra.mrb[0].mxu0 %v3041
        %v3250 = vpop.f32.mrb[0].mxu0
        %v3251 = vadd.f32 0.0, %v3250
        %v3252 = vpop.f32.mrb[0].mxu0
        %3253 = vmatprep.mubr.f32.mxu0 0.0
        %3254 = vmatmul.mubr.f32.gmra.mrb[0].mxu0 %v3044
        %v3255 = vpop.f32.mrb[0].mxu0
        %v3256 = vadd.f32 0.0, %v3255
        %v3257 = vpop.f32.mrb[0].mxu0
        %3258 = vmatprep.mubr.f32.mxu0 0.0
        %3259 = vmatmul.mubr.f32.gmra.mrb[0].mxu0 %v3047
        %v3260 = vpop.f32.mrb[0].mxu0
        %v3261 = vadd.f32 0.0, %v3260
        %v3262 = vpop.f32.mrb[0].mxu0
        %3263 = vmatprep.mubr.f32.mxu0 0.0
        %3264 = vmatmul.mubr.f32.gmra.mrb[0].mxu0 %v3050
        %v3265 = vpop.f32.mrb[0].mxu0
        %v3266 = vadd.f32 0.0, %v3265
        %v3267 = vpop.f32.mrb[0].mxu0
        %3268 = vmatprep.mubr.f32.mxu0 0.0
        %3269 = vmatmul.mubr.f32.gmra.mrb[0].mxu0 %v3053
        %v3270 = vpop.f32.mrb[0].mxu0
        %v3271 = vadd.f32 0.0, %v3270
        %v3272 = vpop.f32.mrb[0].mxu0
        %3273 = vmatprep.mubr.f32.mxu0 0.0
        %3274 = vmatmul.mubr.f32.gmra.mrb[0].mxu0 %v3056
        %v3275 = vpop.f32.mrb[0].mxu0
        %v3276 = vadd.f32 0.0, %v3275
        %v3277 = vpop.f32.mrb[0].mxu0
        %3278 = vmatprep.mubr.f32.mxu0 0.0
        %3279 = vmatmul.mubr.f32.gmra.mrb[0].mxu0 %v3059
        %v3280 = vpop.f32.mrb[0].mxu0
        %v3281 = vadd.f32 0.0, %v3280
        %v3282 = vpop.f32.mrb[0].mxu0
        %3283 = vmatprep.mubr.f32.mxu0 0.0
        %3284 = vmatmul.mubr.f32.gmra.mrb[0].mxu0 %v3062
        %v3285 = vpop.f32.mrb[0].mxu0
        %v3286 = vadd.f32 0.0, %v3285
        %v3287 = vpop.f32.mrb[0].mxu0
        %3288 = vdwg.mxu0
        %v3289 = vld [vmem:[%s7] sm:$0x1]
        %v3291 = vlaneseq
        %v3292 = vshrl.u32 %v3291, 7
        %v3293 = vsub.s32 0, %v3292
        %v3294 = vrot.slane %v3289, %v3293
        %v3296 = vmul.f32 %v3131, %v3294
        %v3297 = vmul.f32 %v3136, %v3294
        %v3298 = vmul.f32 %v3141, %v3294
        %v3299 = vmul.f32 %v3146, %v3294
        %v3300 = vmul.f32 %v3151, %v3294
        %v3301 = vmul.f32 %v3156, %v3294
        %v3302 = vmul.f32 %v3161, %v3294
        %v3303 = vmul.f32 %v3166, %v3294
        %v3304 = vmul.f32 %v3171, %v3294
        %v3305 = vmul.f32 %v3176, %v3294
        %v3306 = vmul.f32 %v3181, %v3294
        %v3307 = vmul.f32 %v3186, %v3294
        %v3308 = vmul.f32 %v3191, %v3294
        %v3309 = vmul.f32 %v3196, %v3294
        %v3310 = vmul.f32 %v3201, %v3294
        %v3311 = vmul.f32 %v3206, %v3294
        %v3312 = vmul.f32 %v3211, %v3294
        %v3313 = vmul.f32 %v3216, %v3294
        %v3314 = vmul.f32 %v3221, %v3294
        %v3315 = vmul.f32 %v3226, %v3294
        %v3316 = vmul.f32 %v3231, %v3294
        %v3317 = vmul.f32 %v3236, %v3294
        %v3318 = vmul.f32 %v3241, %v3294
        %v3319 = vmul.f32 %v3246, %v3294
        %v3320 = vmul.f32 %v3251, %v3294
        %v3321 = vmul.f32 %v3256, %v3294
        %v3322 = vmul.f32 %v3261, %v3294
        %v3323 = vmul.f32 %v3266, %v3294
        %v3324 = vmul.f32 %v3271, %v3294
        %v3325 = vmul.f32 %v3276, %v3294
        %v3326 = vmul.f32 %v3281, %v3294
        %v3327 = vmul.f32 %v3286, %v3294
        %v3328 = vld [vmem:[%s8] sm:$0x1]
        %v3330 = vlaneseq
        %v3331 = vshrl.u32 %v3330, 7
        %v3332 = vsub.s32 0, %v3331
        %v3333 = vrot.slane %v3328, %v3332
        %v3335 = vadd.f32 %v3296, %v3333
        %v3336 = vadd.f32 %v3297, %v3333
        %v3337 = vadd.f32 %v3298, %v3333
        %v3338 = vadd.f32 %v3299, %v3333
        %v3339 = vadd.f32 %v3300, %v3333
        %v3340 = vadd.f32 %v3301, %v3333
        %v3341 = vadd.f32 %v3302, %v3333
        %v3342 = vadd.f32 %v3303, %v3333
        %v3343 = vadd.f32 %v3304, %v3333
        %v3344 = vadd.f32 %v3305, %v3333
        %v3345 = vadd.f32 %v3306, %v3333
        %v3346 = vadd.f32 %v3307, %v3333
        %v3347 = vadd.f32 %v3308, %v3333
        %v3348 = vadd.f32 %v3309, %v3333
        %v3349 = vadd.f32 %v3310, %v3333
        %v3350 = vadd.f32 %v3311, %v3333
        %v3351 = vadd.f32 %v3312, %v3333
        %v3352 = vadd.f32 %v3313, %v3333
        %v3353 = vadd.f32 %v3314, %v3333
        %v3354 = vadd.f32 %v3315, %v3333
        %v3355 = vadd.f32 %v3316, %v3333
        %v3356 = vadd.f32 %v3317, %v3333
        %v3357 = vadd.f32 %v3318, %v3333
        %v3358 = vadd.f32 %v3319, %v3333
        %v3359 = vadd.f32 %v3320, %v3333
        %v3360 = vadd.f32 %v3321, %v3333
        %v3361 = vadd.f32 %v3322, %v3333
        %v3362 = vadd.f32 %v3323, %v3333
        %v3363 = vadd.f32 %v3324, %v3333
        %v3364 = vadd.f32 %v3325, %v3333
        %v3365 = vadd.f32 %v3326, %v3333
        %v3366 = vadd.f32 %v3327, %v3333
        %3367 = vst.msk [vmem:[#allocation4] sm:$0xff] %vm2007, 0.0
        %3368 = vst.msk [vmem:[#allocation4 + $0x8] sm:$0xff] %vm2007, 0.0
        %3369 = vst.msk [vmem:[#allocation4 + $0x10] sm:$0x3] %vm2010, 0.0
        %3370 = vst.msk [vmem:[#allocation4 + $0x18] sm:$0xff] %vm2007, 0.0
        %3371 = vst.msk [vmem:[#allocation4 + $0x20] sm:$0xff] %vm2007, 0.0
        %3372 = vst.msk [vmem:[#allocation4 + $0x28] sm:$0x3] %vm2010, 0.0
        %3373 = vst.msk [vmem:[#allocation4 + $0x30] sm:$0xff] %vm2007, 0.0
        %3374 = vst.msk [vmem:[#allocation4 + $0x38] sm:$0xff] %vm2007, 0.0
        %3375 = vst.msk [vmem:[#allocation4 + $0x40] sm:$0x3] %vm2010, 0.0
        %3376 = vst.msk [vmem:[#allocation4 + $0x48] sm:$0xff] %vm2007, 0.0
        %3377 = vst.msk [vmem:[#allocation4 + $0x50] sm:$0xff] %vm2007, 0.0
        %3378 = vst.msk [vmem:[#allocation4 + $0x58] sm:$0x3] %vm2010, 0.0
        %3379 = vst.msk [vmem:[#allocation4 + $0x60] sm:$0xff] %vm2007, 0.0
        %3380 = vst.msk [vmem:[#allocation4 + $0x68] sm:$0xff] %vm2007, 0.0
        %3381 = vst.msk [vmem:[#allocation4 + $0x70] sm:$0x3] %vm2010, 0.0
        %3382 = vst.msk [vmem:[#allocation4 + $0x78] sm:$0xff] %vm2007, 0.0
        %3383 = vst.msk [vmem:[#allocation4 + $0x80] sm:$0xff] %vm2007, 0.0
        %3384 = vst.msk [vmem:[#allocation4 + $0x88] sm:$0x3] %vm2010, 0.0
        %3385 = vst.msk [vmem:[#allocation4 + $0x90] sm:$0xff] %vm2007, 0.0
        %3386 = vst.msk [vmem:[#allocation4 + $0x98] sm:$0xff] %vm2007, 0.0
        %3387 = vst.msk [vmem:[#allocation4 + $0xa0] sm:$0x3] %vm2010, 0.0
        %3388 = vst.msk [vmem:[#allocation4 + $0xa8] sm:$0xff] %vm2007, 0.0
        %3389 = vst.msk [vmem:[#allocation4 + $0xb0] sm:$0xff] %vm2007, 0.0
        %3390 = vst.msk [vmem:[#allocation4 + $0xb8] sm:$0x3] %vm2010, 0.0
        %3391 = vst.msk [vmem:[#allocation4 + $0xc0] sm:$0xff] %vm2007, 0.0
        %3392 = vst.msk [vmem:[#allocation4 + $0xc8] sm:$0xff] %vm2007, 0.0
        %3393 = vst.msk [vmem:[#allocation4 + $0xd0] sm:$0x3] %vm2010, 0.0
        %3394 = vst.msk [vmem:[#allocation4 + $0xd8] sm:$0xff] %vm2007, 0.0
        %3395 = vst.msk [vmem:[#allocation4 + $0xe0] sm:$0xff] %vm2007, 0.0
        %3396 = vst.msk [vmem:[#allocation4 + $0xe8] sm:$0x3] %vm2010, 0.0
        %3397 = vst.msk [vmem:[#allocation4 + $0xf0] sm:$0xff] %vm2007, 0.0
        %3398 = vst.msk [vmem:[#allocation4 + $0xf8] sm:$0xff] %vm2007, 0.0
        %3399 = vst.msk [vmem:[#allocation4 + $0x100] sm:$0x3] %vm2010, 0.0
        %3400 = vst.msk [vmem:[#allocation4 + $0x108] sm:$0xff] %vm2007, 0.0
        %3401 = vst.msk [vmem:[#allocation4 + $0x110] sm:$0xff] %vm2007, 0.0
        %3402 = vst.msk [vmem:[#allocation4 + $0x118] sm:$0x3] %vm2010, 0.0
        %3403 = vst.msk [vmem:[#allocation4 + $0x120] sm:$0xff] %vm2007, 0.0
        %3404 = vst.msk [vmem:[#allocation4 + $0x128] sm:$0xff] %vm2007, 0.0
        %3405 = vst.msk [vmem:[#allocation4 + $0x130] sm:$0x3] %vm2010, 0.0
        %3406 = vst.msk [vmem:[#allocation4 + $0x138] sm:$0xff] %vm2007, 0.0
        %3407 = vst.msk [vmem:[#allocation4 + $0x140] sm:$0xff] %vm2007, 0.0
        %3408 = vst.msk [vmem:[#allocation4 + $0x148] sm:$0x3] %vm2010, 0.0
        %3409 = vst.msk [vmem:[#allocation4 + $0x150] sm:$0xff] %vm2007, 0.0
        %3410 = vst.msk [vmem:[#allocation4 + $0x158] sm:$0xff] %vm2007, 0.0
        %3411 = vst.msk [vmem:[#allocation4 + $0x160] sm:$0x3] %vm2010, 0.0
        %3412 = vst.msk [vmem:[#allocation4 + $0x168] sm:$0xff] %vm2007, 0.0
        %3413 = vst.msk [vmem:[#allocation4 + $0x170] sm:$0xff] %vm2007, 0.0
        %3414 = vst.msk [vmem:[#allocation4 + $0x178] sm:$0x3] %vm2010, 0.0
        %3415 = vst.msk [vmem:[#allocation4 + $0x180] sm:$0xff] %vm2007, 0.0
        %3416 = vst.msk [vmem:[#allocation4 + $0x188] sm:$0xff] %vm2007, 0.0
        %3417 = vst.msk [vmem:[#allocation4 + $0x190] sm:$0x3] %vm2010, 0.0
        %3418 = vst.msk [vmem:[#allocation4 + $0x198] sm:$0xff] %vm2007, 0.0
        %3419 = vst.msk [vmem:[#allocation4 + $0x1a0] sm:$0xff] %vm2007, 0.0
        %3420 = vst.msk [vmem:[#allocation4 + $0x1a8] sm:$0x3] %vm2010, 0.0
        %s3421 = scalar_lea.vmem [#allocation4], 24
        %3422 = vst.msk [vmem:[%s3421 + $0x1] sm:$0xff] %vm2007, %v3335
        %3423 = vst.msk [vmem:[%s3421 + $0x9] sm:$0xff] %vm2007, %v3336
        %3424 = vst.msk [vmem:[%s3421 + $0x19] sm:$0xff] %vm2007, %v3337
        %3425 = vst.msk [vmem:[%s3421 + $0x21] sm:$0xff] %vm2007, %v3338
        %3426 = vst.msk [vmem:[%s3421 + $0x31] sm:$0xff] %vm2007, %v3339
        %3427 = vst.msk [vmem:[%s3421 + $0x39] sm:$0xff] %vm2007, %v3340
        %3428 = vst.msk [vmem:[%s3421 + $0x49] sm:$0xff] %vm2007, %v3341
        %3429 = vst.msk [vmem:[%s3421 + $0x51] sm:$0xff] %vm2007, %v3342
        %3430 = vst.msk [vmem:[%s3421 + $0x61] sm:$0xff] %vm2007, %v3343
        %3431 = vst.msk [vmem:[%s3421 + $0x69] sm:$0xff] %vm2007, %v3344
        %3432 = vst.msk [vmem:[%s3421 + $0x79] sm:$0xff] %vm2007, %v3345
        %3433 = vst.msk [vmem:[%s3421 + $0x81] sm:$0xff] %vm2007, %v3346
        %3434 = vst.msk [vmem:[%s3421 + $0x91] sm:$0xff] %vm2007, %v3347
        %3435 = vst.msk [vmem:[%s3421 + $0x99] sm:$0xff] %vm2007, %v3348
        %3436 = vst.msk [vmem:[%s3421 + $0xa9] sm:$0xff] %vm2007, %v3349
        %3437 = vst.msk [vmem:[%s3421 + $0xb1] sm:$0xff] %vm2007, %v3350
        %3438 = vst.msk [vmem:[%s3421 + $0xc1] sm:$0xff] %vm2007, %v3351
        %3439 = vst.msk [vmem:[%s3421 + $0xc9] sm:$0xff] %vm2007, %v3352
        %3440 = vst.msk [vmem:[%s3421 + $0xd9] sm:$0xff] %vm2007, %v3353
        %3441 = vst.msk [vmem:[%s3421 + $0xe1] sm:$0xff] %vm2007, %v3354
        %3442 = vst.msk [vmem:[%s3421 + $0xf1] sm:$0xff] %vm2007, %v3355
        %3443 = vst.msk [vmem:[%s3421 + $0xf9] sm:$0xff] %vm2007, %v3356
        %3444 = vst.msk [vmem:[%s3421 + $0x109] sm:$0xff] %vm2007, %v3357
        %3445 = vst.msk [vmem:[%s3421 + $0x111] sm:$0xff] %vm2007, %v3358
        %3446 = vst.msk [vmem:[%s3421 + $0x121] sm:$0xff] %vm2007, %v3359
        %3447 = vst.msk [vmem:[%s3421 + $0x129] sm:$0xff] %vm2007, %v3360
        %3448 = vst.msk [vmem:[%s3421 + $0x139] sm:$0xff] %vm2007, %v3361
        %3449 = vst.msk [vmem:[%s3421 + $0x141] sm:$0xff] %vm2007, %v3362
        %3450 = vst.msk [vmem:[%s3421 + $0x151] sm:$0xff] %vm2007, %v3363
        %3451 = vst.msk [vmem:[%s3421 + $0x159] sm:$0xff] %vm2007, %v3364
        %3452 = vst.msk [vmem:[%s3421 + $0x169] sm:$0xff] %vm2007, %v3365
        %3453 = vst.msk [vmem:[%s3421 + $0x171] sm:$0xff] %vm2007, %v3366
        %v3454 = vld [vmem:[%s9] sm:$0xff]
        %v3455 = vld [vmem:[%s9 + $0x8] sm:$0x1]
        %v3456 = vld [vmem:[#allocation4] sm:$0xff]
        %v3457 = vld [vmem:[#allocation4 + $0x8] sm:$0xff]
        %v3458 = vld [vmem:[#allocation4 + $0x18] sm:$0xff]
        %v3459 = vld [vmem:[#allocation4 + $0x20] sm:$0xff]
        %v3460 = vld [vmem:[#allocation4 + $0x30] sm:$0xff]
        %v3461 = vld [vmem:[#allocation4 + $0x38] sm:$0xff]
        %v3462 = vld [vmem:[#allocation4 + $0x48] sm:$0xff]
        %v3463 = vld [vmem:[#allocation4 + $0x50] sm:$0xff]
        %v3464 = vld [vmem:[#allocation4 + $0x60] sm:$0xff]
        %v3465 = vld [vmem:[#allocation4 + $0x68] sm:$0xff]
        %v3466 = vld [vmem:[#allocation4 + $0x78] sm:$0xff]
        %v3467 = vld [vmem:[#allocation4 + $0x80] sm:$0xff]
        %v3468 = vld [vmem:[#allocation4 + $0x90] sm:$0xff]
        %v3469 = vld [vmem:[#allocation4 + $0x98] sm:$0xff]
        %v3470 = vld [vmem:[#allocation4 + $0xa8] sm:$0xff]
        %v3471 = vld [vmem:[#allocation4 + $0xb0] sm:$0xff]
        %v3472 = vld [vmem:[#allocation4 + $0xc0] sm:$0xff]
        %v3473 = vld [vmem:[#allocation4 + $0xc8] sm:$0xff]
        %v3474 = vld [vmem:[#allocation4 + $0xd8] sm:$0xff]
        %v3475 = vld [vmem:[#allocation4 + $0xe0] sm:$0xff]
        %v3476 = vld [vmem:[#allocation4 + $0xf0] sm:$0xff]
        %v3477 = vld [vmem:[#allocation4 + $0xf8] sm:$0xff]
        %v3478 = vld [vmem:[#allocation4 + $0x108] sm:$0xff]
        %v3479 = vld [vmem:[#allocation4 + $0x110] sm:$0xff]
        %v3480 = vld [vmem:[#allocation4 + $0x120] sm:$0xff]
        %v3481 = vld [vmem:[#allocation4 + $0x128] sm:$0xff]
        %v3482 = vld [vmem:[#allocation4 + $0x138] sm:$0xff]
        %v3483 = vld [vmem:[#allocation4 + $0x140] sm:$0xff]
        %v3484 = vld [vmem:[#allocation4 + $0x150] sm:$0xff]
        %v3485 = vld [vmem:[#allocation4 + $0x158] sm:$0xff]
        %v3486 = vld [vmem:[#allocation4 + $0x168] sm:$0xff]
        %v3487 = vld [vmem:[#allocation4 + $0x170] sm:$0xff]
        %v3488 = vlaneseq
        %v3489 = vshrl.u32 %v3488, 7
        %v3490 = vsub.s32 0, %v3489
        %v3491 = vrot.slane %v3454, %v3490
        %v3492 = vmul.f32 %v3456, %v3491
        %v3493 = vmul.f32 %v3457, %v3491
        %v3494 = vmul.f32 %v3458, %v3491
        %v3495 = vmul.f32 %v3459, %v3491
        %v3496 = vmul.f32 %v3460, %v3491
        %v3497 = vmul.f32 %v3461, %v3491
        %v3498 = vmul.f32 %v3462, %v3491
        %v3499 = vmul.f32 %v3463, %v3491
        %v3500 = vmul.f32 %v3464, %v3491
        %v3501 = vmul.f32 %v3465, %v3491
        %v3502 = vmul.f32 %v3466, %v3491
        %v3503 = vmul.f32 %v3467, %v3491
        %v3504 = vmul.f32 %v3468, %v3491
        %v3505 = vmul.f32 %v3469, %v3491
        %v3506 = vmul.f32 %v3470, %v3491
        %v3507 = vmul.f32 %v3471, %v3491
        %v3508 = vmul.f32 %v3472, %v3491
        %v3509 = vmul.f32 %v3473, %v3491
        %v3510 = vmul.f32 %v3474, %v3491
        %v3511 = vmul.f32 %v3475, %v3491
        %v3512 = vmul.f32 %v3476, %v3491
        %v3513 = vmul.f32 %v3477, %v3491
        %v3514 = vmul.f32 %v3478, %v3491
        %v3515 = vmul.f32 %v3479, %v3491
        %v3516 = vmul.f32 %v3480, %v3491
        %v3517 = vmul.f32 %v3481, %v3491
        %v3518 = vmul.f32 %v3482, %v3491
        %v3519 = vmul.f32 %v3483, %v3491
        %v3520 = vmul.f32 %v3484, %v3491
        %v3521 = vmul.f32 %v3485, %v3491
        %v3522 = vmul.f32 %v3486, %v3491
        %v3523 = vmul.f32 %v3487, %v3491
        %v3524 = vld [vmem:[#allocation4 + $0x1] sm:$0xff]
        %v3525 = vld [vmem:[#allocation4 + $0x9] sm:$0xff]
        %v3526 = vld [vmem:[#allocation4 + $0x19] sm:$0xff]
        %v3527 = vld [vmem:[#allocation4 + $0x21] sm:$0xff]
        %v3528 = vld [vmem:[#allocation4 + $0x31] sm:$0xff]
        %v3529 = vld [vmem:[#allocation4 + $0x39] sm:$0xff]
        %v3530 = vld [vmem:[#allocation4 + $0x49] sm:$0xff]
        %v3531 = vld [vmem:[#allocation4 + $0x51] sm:$0xff]
        %v3532 = vld [vmem:[#allocation4 + $0x61] sm:$0xff]
        %v3533 = vld [vmem:[#allocation4 + $0x69] sm:$0xff]
        %v3534 = vld [vmem:[#allocation4 + $0x79] sm:$0xff]
        %v3535 = vld [vmem:[#allocation4 + $0x81] sm:$0xff]
        %v3536 = vld [vmem:[#allocation4 + $0x91] sm:$0xff]
        %v3537 = vld [vmem:[#allocation4 + $0x99] sm:$0xff]
        %v3538 = vld [vmem:[#allocation4 + $0xa9] sm:$0xff]
        %v3539 = vld [vmem:[#allocation4 + $0xb1] sm:$0xff]
        %v3540 = vld [vmem:[#allocation4 + $0xc1] sm:$0xff]
        %v3541 = vld [vmem:[#allocation4 + $0xc9] sm:$0xff]
        %v3542 = vld [vmem:[#allocation4 + $0xd9] sm:$0xff]
        %v3543 = vld [vmem:[#allocation4 + $0xe1] sm:$0xff]
        %v3544 = vld [vmem:[#allocation4 + $0xf1] sm:$0xff]
        %v3545 = vld [vmem:[#allocation4 + $0xf9] sm:$0xff]
        %v3546 = vld [vmem:[#allocation4 + $0x109] sm:$0xff]
        %v3547 = vld [vmem:[#allocation4 + $0x111] sm:$0xff]
        %v3548 = vld [vmem:[#allocation4 + $0x121] sm:$0xff]
        %v3549 = vld [vmem:[#allocation4 + $0x129] sm:$0xff]
        %v3550 = vld [vmem:[#allocation4 + $0x139] sm:$0xff]
        %v3551 = vld [vmem:[#allocation4 + $0x141] sm:$0xff]
        %v3552 = vld [vmem:[#allocation4 + $0x151] sm:$0xff]
        %v3553 = vld [vmem:[#allocation4 + $0x159] sm:$0xff]
        %v3554 = vld [vmem:[#allocation4 + $0x169] sm:$0xff]
        %v3555 = vld [vmem:[#allocation4 + $0x171] sm:$0xff]
        %v3556 = vlaneseq
        %v3557 = vshrl.u32 %v3556, 7
        %v3558 = vsub.s32 1, %v3557
        %v3559 = vrot.slane %v3454, %v3558
        %v3560 = vmul.f32 %v3524, %v3559
        %v3561 = vmul.f32 %v3525, %v3559
        %v3562 = vmul.f32 %v3526, %v3559
        %v3563 = vmul.f32 %v3527, %v3559
        %v3564 = vmul.f32 %v3528, %v3559
        %v3565 = vmul.f32 %v3529, %v3559
        %v3566 = vmul.f32 %v3530, %v3559
        %v3567 = vmul.f32 %v3531, %v3559
        %v3568 = vmul.f32 %v3532, %v3559
        %v3569 = vmul.f32 %v3533, %v3559
        %v3570 = vmul.f32 %v3534, %v3559
        %v3571 = vmul.f32 %v3535, %v3559
        %v3572 = vmul.f32 %v3536, %v3559
        %v3573 = vmul.f32 %v3537, %v3559
        %v3574 = vmul.f32 %v3538, %v3559
        %v3575 = vmul.f32 %v3539, %v3559
        %v3576 = vmul.f32 %v3540, %v3559
        %v3577 = vmul.f32 %v3541, %v3559
        %v3578 = vmul.f32 %v3542, %v3559
        %v3579 = vmul.f32 %v3543, %v3559
        %v3580 = vmul.f32 %v3544, %v3559
        %v3581 = vmul.f32 %v3545, %v3559
        %v3582 = vmul.f32 %v3546, %v3559
        %v3583 = vmul.f32 %v3547, %v3559
        %v3584 = vmul.f32 %v3548, %v3559
        %v3585 = vmul.f32 %v3549, %v3559
        %v3586 = vmul.f32 %v3550, %v3559
        %v3587 = vmul.f32 %v3551, %v3559
        %v3588 = vmul.f32 %v3552, %v3559
        %v3589 = vmul.f32 %v3553, %v3559
        %v3590 = vmul.f32 %v3554, %v3559
        %v3591 = vmul.f32 %v3555, %v3559
        %v3592 = vadd.f32 %v3492, %v3560
        %v3593 = vadd.f32 %v3493, %v3561
        %v3594 = vadd.f32 %v3494, %v3562
        %v3595 = vadd.f32 %v3495, %v3563
        %v3596 = vadd.f32 %v3496, %v3564
        %v3597 = vadd.f32 %v3497, %v3565
        %v3598 = vadd.f32 %v3498, %v3566
        %v3599 = vadd.f32 %v3499, %v3567
        %v3600 = vadd.f32 %v3500, %v3568
        %v3601 = vadd.f32 %v3501, %v3569
        %v3602 = vadd.f32 %v3502, %v3570
        %v3603 = vadd.f32 %v3503, %v3571
        %v3604 = vadd.f32 %v3504, %v3572
        %v3605 = vadd.f32 %v3505, %v3573
        %v3606 = vadd.f32 %v3506, %v3574
        %v3607 = vadd.f32 %v3507, %v3575
        %v3608 = vadd.f32 %v3508, %v3576
        %v3609 = vadd.f32 %v3509, %v3577
        %v3610 = vadd.f32 %v3510, %v3578
        %v3611 = vadd.f32 %v3511, %v3579
        %v3612 = vadd.f32 %v3512, %v3580
        %v3613 = vadd.f32 %v3513, %v3581
        %v3614 = vadd.f32 %v3514, %v3582
        %v3615 = vadd.f32 %v3515, %v3583
        %v3616 = vadd.f32 %v3516, %v3584
        %v3617 = vadd.f32 %v3517, %v3585
        %v3618 = vadd.f32 %v3518, %v3586
        %v3619 = vadd.f32 %v3519, %v3587
        %v3620 = vadd.f32 %v3520, %v3588
        %v3621 = vadd.f32 %v3521, %v3589
        %v3622 = vadd.f32 %v3522, %v3590
        %v3623 = vadd.f32 %v3523, %v3591
        %v3624 = vld [vmem:[#allocation4 + $0x2] sm:$0xff]
        %v3625 = vld [vmem:[#allocation4 + $0xa] sm:$0xff]
        %v3626 = vld [vmem:[#allocation4 + $0x1a] sm:$0xff]
        %v3627 = vld [vmem:[#allocation4 + $0x22] sm:$0xff]
        %v3628 = vld [vmem:[#allocation4 + $0x32] sm:$0xff]
        %v3629 = vld [vmem:[#allocation4 + $0x3a] sm:$0xff]
        %v3630 = vld [vmem:[#allocation4 + $0x4a] sm:$0xff]
        %v3631 = vld [vmem:[#allocation4 + $0x52] sm:$0xff]
        %v3632 = vld [vmem:[#allocation4 + $0x62] sm:$0xff]
        %v3633 = vld [vmem:[#allocation4 + $0x6a] sm:$0xff]
        %v3634 = vld [vmem:[#allocation4 + $0x7a] sm:$0xff]
        %v3635 = vld [vmem:[#allocation4 + $0x82] sm:$0xff]
        %v3636 = vld [vmem:[#allocation4 + $0x92] sm:$0xff]
        %v3637 = vld [vmem:[#allocation4 + $0x9a] sm:$0xff]
        %v3638 = vld [vmem:[#allocation4 + $0xaa] sm:$0xff]
        %v3639 = vld [vmem:[#allocation4 + $0xb2] sm:$0xff]
        %v3640 = vld [vmem:[#allocation4 + $0xc2] sm:$0xff]
        %v3641 = vld [vmem:[#allocation4 + $0xca] sm:$0xff]
        %v3642 = vld [vmem:[#allocation4 + $0xda] sm:$0xff]
        %v3643 = vld [vmem:[#allocation4 + $0xe2] sm:$0xff]
        %v3644 = vld [vmem:[#allocation4 + $0xf2] sm:$0xff]
        %v3645 = vld [vmem:[#allocation4 + $0xfa] sm:$0xff]
        %v3646 = vld [vmem:[#allocation4 + $0x10a] sm:$0xff]
        %v3647 = vld [vmem:[#allocation4 + $0x112] sm:$0xff]
        %v3648 = vld [vmem:[#allocation4 + $0x122] sm:$0xff]
        %v3649 = vld [vmem:[#allocation4 + $0x12a] sm:$0xff]
        %v3650 = vld [vmem:[#allocation4 + $0x13a] sm:$0xff]
        %v3651 = vld [vmem:[#allocation4 + $0x142] sm:$0xff]
        %v3652 = vld [vmem:[#allocation4 + $0x152] sm:$0xff]
        %v3653 = vld [vmem:[#allocation4 + $0x15a] sm:$0xff]
        %v3654 = vld [vmem:[#allocation4 + $0x16a] sm:$0xff]
        %v3655 = vld [vmem:[#allocation4 + $0x172] sm:$0xff]
        %v3656 = vlaneseq
        %v3657 = vshrl.u32 %v3656, 7
        %v3658 = vsub.s32 2, %v3657
        %v3659 = vrot.slane %v3454, %v3658
        %v3660 = vmul.f32 %v3624, %v3659
        %v3661 = vmul.f32 %v3625, %v3659
        %v3662 = vmul.f32 %v3626, %v3659
        %v3663 = vmul.f32 %v3627, %v3659
        %v3664 = vmul.f32 %v3628, %v3659
        %v3665 = vmul.f32 %v3629, %v3659
        %v3666 = vmul.f32 %v3630, %v3659
        %v3667 = vmul.f32 %v3631, %v3659
        %v3668 = vmul.f32 %v3632, %v3659
        %v3669 = vmul.f32 %v3633, %v3659
        %v3670 = vmul.f32 %v3634, %v3659
        %v3671 = vmul.f32 %v3635, %v3659
        %v3672 = vmul.f32 %v3636, %v3659
        %v3673 = vmul.f32 %v3637, %v3659
        %v3674 = vmul.f32 %v3638, %v3659
        %v3675 = vmul.f32 %v3639, %v3659
        %v3676 = vmul.f32 %v3640, %v3659
        %v3677 = vmul.f32 %v3641, %v3659
        %v3678 = vmul.f32 %v3642, %v3659
        %v3679 = vmul.f32 %v3643, %v3659
        %v3680 = vmul.f32 %v3644, %v3659
        %v3681 = vmul.f32 %v3645, %v3659
        %v3682 = vmul.f32 %v3646, %v3659
        %v3683 = vmul.f32 %v3647, %v3659
        %v3684 = vmul.f32 %v3648, %v3659
        %v3685 = vmul.f32 %v3649, %v3659
        %v3686 = vmul.f32 %v3650, %v3659
        %v3687 = vmul.f32 %v3651, %v3659
        %v3688 = vmul.f32 %v3652, %v3659
        %v3689 = vmul.f32 %v3653, %v3659
        %v3690 = vmul.f32 %v3654, %v3659
        %v3691 = vmul.f32 %v3655, %v3659
        %v3692 = vadd.f32 %v3592, %v3660
        %v3693 = vadd.f32 %v3593, %v3661
        %v3694 = vadd.f32 %v3594, %v3662
        %v3695 = vadd.f32 %v3595, %v3663
        %v3696 = vadd.f32 %v3596, %v3664
        %v3697 = vadd.f32 %v3597, %v3665
        %v3698 = vadd.f32 %v3598, %v3666
        %v3699 = vadd.f32 %v3599, %v3667
        %v3700 = vadd.f32 %v3600, %v3668
        %v3701 = vadd.f32 %v3601, %v3669
        %v3702 = vadd.f32 %v3602, %v3670
        %v3703 = vadd.f32 %v3603, %v3671
        %v3704 = vadd.f32 %v3604, %v3672
        %v3705 = vadd.f32 %v3605, %v3673
        %v3706 = vadd.f32 %v3606, %v3674
        %v3707 = vadd.f32 %v3607, %v3675
        %v3708 = vadd.f32 %v3608, %v3676
        %v3709 = vadd.f32 %v3609, %v3677
        %v3710 = vadd.f32 %v3610, %v3678
        %v3711 = vadd.f32 %v3611, %v3679
        %v3712 = vadd.f32 %v3612, %v3680
        %v3713 = vadd.f32 %v3613, %v3681
        %v3714 = vadd.f32 %v3614, %v3682
        %v3715 = vadd.f32 %v3615, %v3683
        %v3716 = vadd.f32 %v3616, %v3684
        %v3717 = vadd.f32 %v3617, %v3685
        %v3718 = vadd.f32 %v3618, %v3686
        %v3719 = vadd.f32 %v3619, %v3687
        %v3720 = vadd.f32 %v3620, %v3688
        %v3721 = vadd.f32 %v3621, %v3689
        %v3722 = vadd.f32 %v3622, %v3690
        %v3723 = vadd.f32 %v3623, %v3691
        %v3724 = vld [vmem:[%s3421] sm:$0xff]
        %v3725 = vld [vmem:[%s3421 + $0x8] sm:$0xff]
        %v3726 = vld [vmem:[%s3421 + $0x18] sm:$0xff]
        %v3727 = vld [vmem:[%s3421 + $0x20] sm:$0xff]
        %v3728 = vld [vmem:[%s3421 + $0x30] sm:$0xff]
        %v3729 = vld [vmem:[%s3421 + $0x38] sm:$0xff]
        %v3730 = vld [vmem:[%s3421 + $0x48] sm:$0xff]
        %v3731 = vld [vmem:[%s3421 + $0x50] sm:$0xff]
        %v3732 = vld [vmem:[%s3421 + $0x60] sm:$0xff]
        %v3733 = vld [vmem:[%s3421 + $0x68] sm:$0xff]
        %v3734 = vld [vmem:[%s3421 + $0x78] sm:$0xff]
        %v3735 = vld [vmem:[%s3421 + $0x80] sm:$0xff]
        %v3736 = vld [vmem:[%s3421 + $0x90] sm:$0xff]
        %v3737 = vld [vmem:[%s3421 + $0x98] sm:$0xff]
        %v3738 = vld [vmem:[%s3421 + $0xa8] sm:$0xff]
        %v3739 = vld [vmem:[%s3421 + $0xb0] sm:$0xff]
        %v3740 = vld [vmem:[%s3421 + $0xc0] sm:$0xff]
        %v3741 = vld [vmem:[%s3421 + $0xc8] sm:$0xff]
        %v3742 = vld [vmem:[%s3421 + $0xd8] sm:$0xff]
        %v3743 = vld [vmem:[%s3421 + $0xe0] sm:$0xff]
        %v3744 = vld [vmem:[%s3421 + $0xf0] sm:$0xff]
        %v3745 = vld [vmem:[%s3421 + $0xf8] sm:$0xff]
        %v3746 = vld [vmem:[%s3421 + $0x108] sm:$0xff]
        %v3747 = vld [vmem:[%s3421 + $0x110] sm:$0xff]
        %v3748 = vld [vmem:[%s3421 + $0x120] sm:$0xff]
        %v3749 = vld [vmem:[%s3421 + $0x128] sm:$0xff]
        %v3750 = vld [vmem:[%s3421 + $0x138] sm:$0xff]
        %v3751 = vld [vmem:[%s3421 + $0x140] sm:$0xff]
        %v3752 = vld [vmem:[%s3421 + $0x150] sm:$0xff]
        %v3753 = vld [vmem:[%s3421 + $0x158] sm:$0xff]
        %v3754 = vld [vmem:[%s3421 + $0x168] sm:$0xff]
        %v3755 = vld [vmem:[%s3421 + $0x170] sm:$0xff]
        %v3756 = vlaneseq
        %v3757 = vshrl.u32 %v3756, 7
        %v3758 = vsub.s32 3, %v3757
        %v3759 = vrot.slane %v3454, %v3758
        %v3760 = vmul.f32 %v3724, %v3759
        %v3761 = vmul.f32 %v3725, %v3759
        %v3762 = vmul.f32 %v3726, %v3759
        %v3763 = vmul.f32 %v3727, %v3759
        %v3764 = vmul.f32 %v3728, %v3759
        %v3765 = vmul.f32 %v3729, %v3759
        %v3766 = vmul.f32 %v3730, %v3759
        %v3767 = vmul.f32 %v3731, %v3759
        %v3768 = vmul.f32 %v3732, %v3759
        %v3769 = vmul.f32 %v3733, %v3759
        %v3770 = vmul.f32 %v3734, %v3759
        %v3771 = vmul.f32 %v3735, %v3759
        %v3772 = vmul.f32 %v3736, %v3759
        %v3773 = vmul.f32 %v3737, %v3759
        %v3774 = vmul.f32 %v3738, %v3759
        %v3775 = vmul.f32 %v3739, %v3759
        %v3776 = vmul.f32 %v3740, %v3759
        %v3777 = vmul.f32 %v3741, %v3759
        %v3778 = vmul.f32 %v3742, %v3759
        %v3779 = vmul.f32 %v3743, %v3759
        %v3780 = vmul.f32 %v3744, %v3759
        %v3781 = vmul.f32 %v3745, %v3759
        %v3782 = vmul.f32 %v3746, %v3759
        %v3783 = vmul.f32 %v3747, %v3759
        %v3784 = vmul.f32 %v3748, %v3759
        %v3785 = vmul.f32 %v3749, %v3759
        %v3786 = vmul.f32 %v3750, %v3759
        %v3787 = vmul.f32 %v3751, %v3759
        %v3788 = vmul.f32 %v3752, %v3759
        %v3789 = vmul.f32 %v3753, %v3759
        %v3790 = vmul.f32 %v3754, %v3759
        %v3791 = vmul.f32 %v3755, %v3759
        %v3792 = vadd.f32 %v3692, %v3760
        %v3793 = vadd.f32 %v3693, %v3761
        %v3794 = vadd.f32 %v3694, %v3762
        %v3795 = vadd.f32 %v3695, %v3763
        %v3796 = vadd.f32 %v3696, %v3764
        %v3797 = vadd.f32 %v3697, %v3765
        %v3798 = vadd.f32 %v3698, %v3766
        %v3799 = vadd.f32 %v3699, %v3767
        %v3800 = vadd.f32 %v3700, %v3768
        %v3801 = vadd.f32 %v3701, %v3769
        %v3802 = vadd.f32 %v3702, %v3770
        %v3803 = vadd.f32 %v3703, %v3771
        %v3804 = vadd.f32 %v3704, %v3772
        %v3805 = vadd.f32 %v3705, %v3773
        %v3806 = vadd.f32 %v3706, %v3774
        %v3807 = vadd.f32 %v3707, %v3775
        %v3808 = vadd.f32 %v3708, %v3776
        %v3809 = vadd.f32 %v3709, %v3777
        %v3810 = vadd.f32 %v3710, %v3778
        %v3811 = vadd.f32 %v3711, %v3779
        %v3812 = vadd.f32 %v3712, %v3780
        %v3813 = vadd.f32 %v3713, %v3781
        %v3814 = vadd.f32 %v3714, %v3782
        %v3815 = vadd.f32 %v3715, %v3783
        %v3816 = vadd.f32 %v3716, %v3784
        %v3817 = vadd.f32 %v3717, %v3785
        %v3818 = vadd.f32 %v3718, %v3786
        %v3819 = vadd.f32 %v3719, %v3787
        %v3820 = vadd.f32 %v3720, %v3788
        %v3821 = vadd.f32 %v3721, %v3789
        %v3822 = vadd.f32 %v3722, %v3790
        %v3823 = vadd.f32 %v3723, %v3791
        %v3824 = vld [vmem:[%s3421 + $0x1] sm:$0xff]
        %v3825 = vld [vmem:[%s3421 + $0x9] sm:$0xff]
        %v3826 = vld [vmem:[%s3421 + $0x19] sm:$0xff]
        %v3827 = vld [vmem:[%s3421 + $0x21] sm:$0xff]
        %v3828 = vld [vmem:[%s3421 + $0x31] sm:$0xff]
        %v3829 = vld [vmem:[%s3421 + $0x39] sm:$0xff]
        %v3830 = vld [vmem:[%s3421 + $0x49] sm:$0xff]
        %v3831 = vld [vmem:[%s3421 + $0x51] sm:$0xff]
        %v3832 = vld [vmem:[%s3421 + $0x61] sm:$0xff]
        %v3833 = vld [vmem:[%s3421 + $0x69] sm:$0xff]
        %v3834 = vld [vmem:[%s3421 + $0x79] sm:$0xff]
        %v3835 = vld [vmem:[%s3421 + $0x81] sm:$0xff]
        %v3836 = vld [vmem:[%s3421 + $0x91] sm:$0xff]
        %v3837 = vld [vmem:[%s3421 + $0x99] sm:$0xff]
        %v3838 = vld [vmem:[%s3421 + $0xa9] sm:$0xff]
        %v3839 = vld [vmem:[%s3421 + $0xb1] sm:$0xff]
        %v3840 = vld [vmem:[%s3421 + $0xc1] sm:$0xff]
        %v3841 = vld [vmem:[%s3421 + $0xc9] sm:$0xff]
        %v3842 = vld [vmem:[%s3421 + $0xd9] sm:$0xff]
        %v3843 = vld [vmem:[%s3421 + $0xe1] sm:$0xff]
        %v3844 = vld [vmem:[%s3421 + $0xf1] sm:$0xff]
        %v3845 = vld [vmem:[%s3421 + $0xf9] sm:$0xff]
        %v3846 = vld [vmem:[%s3421 + $0x109] sm:$0xff]
        %v3847 = vld [vmem:[%s3421 + $0x111] sm:$0xff]
        %v3848 = vld [vmem:[%s3421 + $0x121] sm:$0xff]
        %v3849 = vld [vmem:[%s3421 + $0x129] sm:$0xff]
        %v3850 = vld [vmem:[%s3421 + $0x139] sm:$0xff]
        %v3851 = vld [vmem:[%s3421 + $0x141] sm:$0xff]
        %v3852 = vld [vmem:[%s3421 + $0x151] sm:$0xff]
        %v3853 = vld [vmem:[%s3421 + $0x159] sm:$0xff]
        %v3854 = vld [vmem:[%s3421 + $0x169] sm:$0xff]
        %v3855 = vld [vmem:[%s3421 + $0x171] sm:$0xff]
        %v3856 = vlaneseq
        %v3857 = vshrl.u32 %v3856, 7
        %v3858 = vsub.s32 4, %v3857
        %v3859 = vrot.slane %v3454, %v3858
        %v3860 = vmul.f32 %v3824, %v3859
        %v3861 = vmul.f32 %v3825, %v3859
        %v3862 = vmul.f32 %v3826, %v3859
        %v3863 = vmul.f32 %v3827, %v3859
        %v3864 = vmul.f32 %v3828, %v3859
        %v3865 = vmul.f32 %v3829, %v3859
        %v3866 = vmul.f32 %v3830, %v3859
        %v3867 = vmul.f32 %v3831, %v3859
        %v3868 = vmul.f32 %v3832, %v3859
        %v3869 = vmul.f32 %v3833, %v3859
        %v3870 = vmul.f32 %v3834, %v3859
        %v3871 = vmul.f32 %v3835, %v3859
        %v3872 = vmul.f32 %v3836, %v3859
        %v3873 = vmul.f32 %v3837, %v3859
        %v3874 = vmul.f32 %v3838, %v3859
        %v3875 = vmul.f32 %v3839, %v3859
        %v3876 = vmul.f32 %v3840, %v3859
        %v3877 = vmul.f32 %v3841, %v3859
        %v3878 = vmul.f32 %v3842, %v3859
        %v3879 = vmul.f32 %v3843, %v3859
        %v3880 = vmul.f32 %v3844, %v3859
        %v3881 = vmul.f32 %v3845, %v3859
        %v3882 = vmul.f32 %v3846, %v3859
        %v3883 = vmul.f32 %v3847, %v3859
        %v3884 = vmul.f32 %v3848, %v3859
        %v3885 = vmul.f32 %v3849, %v3859
        %v3886 = vmul.f32 %v3850, %v3859
        %v3887 = vmul.f32 %v3851, %v3859
        %v3888 = vmul.f32 %v3852, %v3859
        %v3889 = vmul.f32 %v3853, %v3859
        %v3890 = vmul.f32 %v3854, %v3859
        %v3891 = vmul.f32 %v3855, %v3859
        %v3892 = vadd.f32 %v3792, %v3860
        %v3893 = vadd.f32 %v3793, %v3861
        %v3894 = vadd.f32 %v3794, %v3862
        %v3895 = vadd.f32 %v3795, %v3863
        %v3896 = vadd.f32 %v3796, %v3864
        %v3897 = vadd.f32 %v3797, %v3865
        %v3898 = vadd.f32 %v3798, %v3866
        %v3899 = vadd.f32 %v3799, %v3867
        %v3900 = vadd.f32 %v3800, %v3868
        %v3901 = vadd.f32 %v3801, %v3869
        %v3902 = vadd.f32 %v3802, %v3870
        %v3903 = vadd.f32 %v3803, %v3871
        %v3904 = vadd.f32 %v3804, %v3872
        %v3905 = vadd.f32 %v3805, %v3873
        %v3906 = vadd.f32 %v3806, %v3874
        %v3907 = vadd.f32 %v3807, %v3875
        %v3908 = vadd.f32 %v3808, %v3876
        %v3909 = vadd.f32 %v3809, %v3877
        %v3910 = vadd.f32 %v3810, %v3878
        %v3911 = vadd.f32 %v3811, %v3879
        %v3912 = vadd.f32 %v3812, %v3880
        %v3913 = vadd.f32 %v3813, %v3881
        %v3914 = vadd.f32 %v3814, %v3882
        %v3915 = vadd.f32 %v3815, %v3883
        %v3916 = vadd.f32 %v3816, %v3884
        %v3917 = vadd.f32 %v3817, %v3885
        %v3918 = vadd.f32 %v3818, %v3886
        %v3919 = vadd.f32 %v3819, %v3887
        %v3920 = vadd.f32 %v3820, %v3888
        %v3921 = vadd.f32 %v3821, %v3889
        %v3922 = vadd.f32 %v3822, %v3890
        %v3923 = vadd.f32 %v3823, %v3891
        %v3924 = vld [vmem:[%s3421 + $0x2] sm:$0xff]
        %v3925 = vld [vmem:[%s3421 + $0xa] sm:$0xff]
        %v3926 = vld [vmem:[%s3421 + $0x1a] sm:$0xff]
        %v3927 = vld [vmem:[%s3421 + $0x22] sm:$0xff]
        %v3928 = vld [vmem:[%s3421 + $0x32] sm:$0xff]
        %v3929 = vld [vmem:[%s3421 + $0x3a] sm:$0xff]
        %v3930 = vld [vmem:[%s3421 + $0x4a] sm:$0xff]
        %v3931 = vld [vmem:[%s3421 + $0x52] sm:$0xff]
        %v3932 = vld [vmem:[%s3421 + $0x62] sm:$0xff]
        %v3933 = vld [vmem:[%s3421 + $0x6a] sm:$0xff]
        %v3934 = vld [vmem:[%s3421 + $0x7a] sm:$0xff]
        %v3935 = vld [vmem:[%s3421 + $0x82] sm:$0xff]
        %v3936 = vld [vmem:[%s3421 + $0x92] sm:$0xff]
        %v3937 = vld [vmem:[%s3421 + $0x9a] sm:$0xff]
        %v3938 = vld [vmem:[%s3421 + $0xaa] sm:$0xff]
        %v3939 = vld [vmem:[%s3421 + $0xb2] sm:$0xff]
        %v3940 = vld [vmem:[%s3421 + $0xc2] sm:$0xff]
        %v3941 = vld [vmem:[%s3421 + $0xca] sm:$0xff]
        %v3942 = vld [vmem:[%s3421 + $0xda] sm:$0xff]
        %v3943 = vld [vmem:[%s3421 + $0xe2] sm:$0xff]
        %v3944 = vld [vmem:[%s3421 + $0xf2] sm:$0xff]
        %v3945 = vld [vmem:[%s3421 + $0xfa] sm:$0xff]
        %v3946 = vld [vmem:[%s3421 + $0x10a] sm:$0xff]
        %v3947 = vld [vmem:[%s3421 + $0x112] sm:$0xff]
        %v3948 = vld [vmem:[%s3421 + $0x122] sm:$0xff]
        %v3949 = vld [vmem:[%s3421 + $0x12a] sm:$0xff]
        %v3950 = vld [vmem:[%s3421 + $0x13a] sm:$0xff]
        %v3951 = vld [vmem:[%s3421 + $0x142] sm:$0xff]
        %v3952 = vld [vmem:[%s3421 + $0x152] sm:$0xff]
        %v3953 = vld [vmem:[%s3421 + $0x15a] sm:$0xff]
        %v3954 = vld [vmem:[%s3421 + $0x16a] sm:$0xff]
        %v3955 = vld [vmem:[%s3421 + $0x172] sm:$0xff]
        %v3956 = vlaneseq
        %v3957 = vshrl.u32 %v3956, 7
        %v3958 = vsub.s32 5, %v3957
        %v3959 = vrot.slane %v3454, %v3958
        %v3960 = vmul.f32 %v3924, %v3959
        %v3961 = vmul.f32 %v3925, %v3959
        %v3962 = vmul.f32 %v3926, %v3959
        %v3963 = vmul.f32 %v3927, %v3959
        %v3964 = vmul.f32 %v3928, %v3959
        %v3965 = vmul.f32 %v3929, %v3959
        %v3966 = vmul.f32 %v3930, %v3959
        %v3967 = vmul.f32 %v3931, %v3959
        %v3968 = vmul.f32 %v3932, %v3959
        %v3969 = vmul.f32 %v3933, %v3959
        %v3970 = vmul.f32 %v3934, %v3959
        %v3971 = vmul.f32 %v3935, %v3959
        %v3972 = vmul.f32 %v3936, %v3959
        %v3973 = vmul.f32 %v3937, %v3959
        %v3974 = vmul.f32 %v3938, %v3959
        %v3975 = vmul.f32 %v3939, %v3959
        %v3976 = vmul.f32 %v3940, %v3959
        %v3977 = vmul.f32 %v3941, %v3959
        %v3978 = vmul.f32 %v3942, %v3959
        %v3979 = vmul.f32 %v3943, %v3959
        %v3980 = vmul.f32 %v3944, %v3959
        %v3981 = vmul.f32 %v3945, %v3959
        %v3982 = vmul.f32 %v3946, %v3959
        %v3983 = vmul.f32 %v3947, %v3959
        %v3984 = vmul.f32 %v3948, %v3959
        %v3985 = vmul.f32 %v3949, %v3959
        %v3986 = vmul.f32 %v3950, %v3959
        %v3987 = vmul.f32 %v3951, %v3959
        %v3988 = vmul.f32 %v3952, %v3959
        %v3989 = vmul.f32 %v3953, %v3959
        %v3990 = vmul.f32 %v3954, %v3959
        %v3991 = vmul.f32 %v3955, %v3959
        %v3992 = vadd.f32 %v3892, %v3960
        %v3993 = vadd.f32 %v3893, %v3961
        %v3994 = vadd.f32 %v3894, %v3962
        %v3995 = vadd.f32 %v3895, %v3963
        %v3996 = vadd.f32 %v3896, %v3964
        %v3997 = vadd.f32 %v3897, %v3965
        %v3998 = vadd.f32 %v3898, %v3966
        %v3999 = vadd.f32 %v3899, %v3967
        %v4000 = vadd.f32 %v3900, %v3968
        %v4001 = vadd.f32 %v3901, %v3969
        %v4002 = vadd.f32 %v3902, %v3970
        %v4003 = vadd.f32 %v3903, %v3971
        %v4004 = vadd.f32 %v3904, %v3972
        %v4005 = vadd.f32 %v3905, %v3973
        %v4006 = vadd.f32 %v3906, %v3974
        %v4007 = vadd.f32 %v3907, %v3975
        %v4008 = vadd.f32 %v3908, %v3976
        %v4009 = vadd.f32 %v3909, %v3977
        %v4010 = vadd.f32 %v3910, %v3978
        %v4011 = vadd.f32 %v3911, %v3979
        %v4012 = vadd.f32 %v3912, %v3980
        %v4013 = vadd.f32 %v3913, %v3981
        %v4014 = vadd.f32 %v3914, %v3982
        %v4015 = vadd.f32 %v3915, %v3983
        %v4016 = vadd.f32 %v3916, %v3984
        %v4017 = vadd.f32 %v3917, %v3985
        %v4018 = vadd.f32 %v3918, %v3986
        %v4019 = vadd.f32 %v3919, %v3987
        %v4020 = vadd.f32 %v3920, %v3988
        %v4021 = vadd.f32 %v3921, %v3989
        %v4022 = vadd.f32 %v3922, %v3990
        %v4023 = vadd.f32 %v3923, %v3991
        %s4024 = scalar_lea.vmem [#allocation4], 48
        %v4025 = vld [vmem:[%s4024] sm:$0xff]
        %v4026 = vld [vmem:[%s4024 + $0x8] sm:$0xff]
        %v4027 = vld [vmem:[%s4024 + $0x18] sm:$0xff]
        %v4028 = vld [vmem:[%s4024 + $0x20] sm:$0xff]
        %v4029 = vld [vmem:[%s4024 + $0x30] sm:$0xff]
        %v4030 = vld [vmem:[%s4024 + $0x38] sm:$0xff]
        %v4031 = vld [vmem:[%s4024 + $0x48] sm:$0xff]
        %v4032 = vld [vmem:[%s4024 + $0x50] sm:$0xff]
        %v4033 = vld [vmem:[%s4024 + $0x60] sm:$0xff]
        %v4034 = vld [vmem:[%s4024 + $0x68] sm:$0xff]
        %v4035 = vld [vmem:[%s4024 + $0x78] sm:$0xff]
        %v4036 = vld [vmem:[%s4024 + $0x80] sm:$0xff]
        %v4037 = vld [vmem:[%s4024 + $0x90] sm:$0xff]
        %v4038 = vld [vmem:[%s4024 + $0x98] sm:$0xff]
        %v4039 = vld [vmem:[%s4024 + $0xa8] sm:$0xff]
        %v4040 = vld [vmem:[%s4024 + $0xb0] sm:$0xff]
        %v4041 = vld [vmem:[%s4024 + $0xc0] sm:$0xff]
        %v4042 = vld [vmem:[%s4024 + $0xc8] sm:$0xff]
        %v4043 = vld [vmem:[%s4024 + $0xd8] sm:$0xff]
        %v4044 = vld [vmem:[%s4024 + $0xe0] sm:$0xff]
        %v4045 = vld [vmem:[%s4024 + $0xf0] sm:$0xff]
        %v4046 = vld [vmem:[%s4024 + $0xf8] sm:$0xff]
        %v4047 = vld [vmem:[%s4024 + $0x108] sm:$0xff]
        %v4048 = vld [vmem:[%s4024 + $0x110] sm:$0xff]
        %v4049 = vld [vmem:[%s4024 + $0x120] sm:$0xff]
        %v4050 = vld [vmem:[%s4024 + $0x128] sm:$0xff]
        %v4051 = vld [vmem:[%s4024 + $0x138] sm:$0xff]
        %v4052 = vld [vmem:[%s4024 + $0x140] sm:$0xff]
        %v4053 = vld [vmem:[%s4024 + $0x150] sm:$0xff]
        %v4054 = vld [vmem:[%s4024 + $0x158] sm:$0xff]
        %v4055 = vld [vmem:[%s4024 + $0x168] sm:$0xff]
        %v4056 = vld [vmem:[%s4024 + $0x170] sm:$0xff]
        %v4057 = vlaneseq
        %v4058 = vshrl.u32 %v4057, 7
        %v4059 = vsub.s32 6, %v4058
        %v4060 = vrot.slane %v3454, %v4059
        %v4061 = vmul.f32 %v4025, %v4060
        %v4062 = vmul.f32 %v4026, %v4060
        %v4063 = vmul.f32 %v4027, %v4060
        %v4064 = vmul.f32 %v4028, %v4060
        %v4065 = vmul.f32 %v4029, %v4060
        %v4066 = vmul.f32 %v4030, %v4060
        %v4067 = vmul.f32 %v4031, %v4060
        %v4068 = vmul.f32 %v4032, %v4060
        %v4069 = vmul.f32 %v4033, %v4060
        %v4070 = vmul.f32 %v4034, %v4060
        %v4071 = vmul.f32 %v4035, %v4060
        %v4072 = vmul.f32 %v4036, %v4060
        %v4073 = vmul.f32 %v4037, %v4060
        %v4074 = vmul.f32 %v4038, %v4060
        %v4075 = vmul.f32 %v4039, %v4060
        %v4076 = vmul.f32 %v4040, %v4060
        %v4077 = vmul.f32 %v4041, %v4060
        %v4078 = vmul.f32 %v4042, %v4060
        %v4079 = vmul.f32 %v4043, %v4060
        %v4080 = vmul.f32 %v4044, %v4060
        %v4081 = vmul.f32 %v4045, %v4060
        %v4082 = vmul.f32 %v4046, %v4060
        %v4083 = vmul.f32 %v4047, %v4060
        %v4084 = vmul.f32 %v4048, %v4060
        %v4085 = vmul.f32 %v4049, %v4060
        %v4086 = vmul.f32 %v4050, %v4060
        %v4087 = vmul.f32 %v4051, %v4060
        %v4088 = vmul.f32 %v4052, %v4060
        %v4089 = vmul.f32 %v4053, %v4060
        %v4090 = vmul.f32 %v4054, %v4060
        %v4091 = vmul.f32 %v4055, %v4060
        %v4092 = vmul.f32 %v4056, %v4060
        %v4093 = vadd.f32 %v3992, %v4061
        %v4094 = vadd.f32 %v3993, %v4062
        %v4095 = vadd.f32 %v3994, %v4063
        %v4096 = vadd.f32 %v3995, %v4064
        %v4097 = vadd.f32 %v3996, %v4065
        %v4098 = vadd.f32 %v3997, %v4066
        %v4099 = vadd.f32 %v3998, %v4067
        %v4100 = vadd.f32 %v3999, %v4068
        %v4101 = vadd.f32 %v4000, %v4069
        %v4102 = vadd.f32 %v4001, %v4070
        %v4103 = vadd.f32 %v4002, %v4071
        %v4104 = vadd.f32 %v4003, %v4072
        %v4105 = vadd.f32 %v4004, %v4073
        %v4106 = vadd.f32 %v4005, %v4074
        %v4107 = vadd.f32 %v4006, %v4075
        %v4108 = vadd.f32 %v4007, %v4076
        %v4109 = vadd.f32 %v4008, %v4077
        %v4110 = vadd.f32 %v4009, %v4078
        %v4111 = vadd.f32 %v4010, %v4079
        %v4112 = vadd.f32 %v4011, %v4080
        %v4113 = vadd.f32 %v4012, %v4081
        %v4114 = vadd.f32 %v4013, %v4082
        %v4115 = vadd.f32 %v4014, %v4083
        %v4116 = vadd.f32 %v4015, %v4084
        %v4117 = vadd.f32 %v4016, %v4085
        %v4118 = vadd.f32 %v4017, %v4086
        %v4119 = vadd.f32 %v4018, %v4087
        %v4120 = vadd.f32 %v4019, %v4088
        %v4121 = vadd.f32 %v4020, %v4089
        %v4122 = vadd.f32 %v4021, %v4090
        %v4123 = vadd.f32 %v4022, %v4091
        %v4124 = vadd.f32 %v4023, %v4092
        %v4125 = vld [vmem:[%s4024 + $0x1] sm:$0xff]
        %v4126 = vld [vmem:[%s4024 + $0x9] sm:$0xff]
        %v4127 = vld [vmem:[%s4024 + $0x19] sm:$0xff]
        %v4128 = vld [vmem:[%s4024 + $0x21] sm:$0xff]
        %v4129 = vld [vmem:[%s4024 + $0x31] sm:$0xff]
        %v4130 = vld [vmem:[%s4024 + $0x39] sm:$0xff]
        %v4131 = vld [vmem:[%s4024 + $0x49] sm:$0xff]
        %v4132 = vld [vmem:[%s4024 + $0x51] sm:$0xff]
        %v4133 = vld [vmem:[%s4024 + $0x61] sm:$0xff]
        %v4134 = vld [vmem:[%s4024 + $0x69] sm:$0xff]
        %v4135 = vld [vmem:[%s4024 + $0x79] sm:$0xff]
        %v4136 = vld [vmem:[%s4024 + $0x81] sm:$0xff]
        %v4137 = vld [vmem:[%s4024 + $0x91] sm:$0xff]
        %v4138 = vld [vmem:[%s4024 + $0x99] sm:$0xff]
        %v4139 = vld [vmem:[%s4024 + $0xa9] sm:$0xff]
        %v4140 = vld [vmem:[%s4024 + $0xb1] sm:$0xff]
        %v4141 = vld [vmem:[%s4024 + $0xc1] sm:$0xff]
        %v4142 = vld [vmem:[%s4024 + $0xc9] sm:$0xff]
        %v4143 = vld [vmem:[%s4024 + $0xd9] sm:$0xff]
        %v4144 = vld [vmem:[%s4024 + $0xe1] sm:$0xff]
        %v4145 = vld [vmem:[%s4024 + $0xf1] sm:$0xff]
        %v4146 = vld [vmem:[%s4024 + $0xf9] sm:$0xff]
        %v4147 = vld [vmem:[%s4024 + $0x109] sm:$0xff]
        %v4148 = vld [vmem:[%s4024 + $0x111] sm:$0xff]
        %v4149 = vld [vmem:[%s4024 + $0x121] sm:$0xff]
        %v4150 = vld [vmem:[%s4024 + $0x129] sm:$0xff]
        %v4151 = vld [vmem:[%s4024 + $0x139] sm:$0xff]
        %v4152 = vld [vmem:[%s4024 + $0x141] sm:$0xff]
        %v4153 = vld [vmem:[%s4024 + $0x151] sm:$0xff]
        %v4154 = vld [vmem:[%s4024 + $0x159] sm:$0xff]
        %v4155 = vld [vmem:[%s4024 + $0x169] sm:$0xff]
        %v4156 = vld [vmem:[%s4024 + $0x171] sm:$0xff]
        %v4157 = vlaneseq
        %v4158 = vshrl.u32 %v4157, 7
        %v4159 = vsub.s32 7, %v4158
        %v4160 = vrot.slane %v3454, %v4159
        %v4161 = vmul.f32 %v4125, %v4160
        %v4162 = vmul.f32 %v4126, %v4160
        %v4163 = vmul.f32 %v4127, %v4160
        %v4164 = vmul.f32 %v4128, %v4160
        %v4165 = vmul.f32 %v4129, %v4160
        %v4166 = vmul.f32 %v4130, %v4160
        %v4167 = vmul.f32 %v4131, %v4160
        %v4168 = vmul.f32 %v4132, %v4160
        %v4169 = vmul.f32 %v4133, %v4160
        %v4170 = vmul.f32 %v4134, %v4160
        %v4171 = vmul.f32 %v4135, %v4160
        %v4172 = vmul.f32 %v4136, %v4160
        %v4173 = vmul.f32 %v4137, %v4160
        %v4174 = vmul.f32 %v4138, %v4160
        %v4175 = vmul.f32 %v4139, %v4160
        %v4176 = vmul.f32 %v4140, %v4160
        %v4177 = vmul.f32 %v4141, %v4160
        %v4178 = vmul.f32 %v4142, %v4160
        %v4179 = vmul.f32 %v4143, %v4160
        %v4180 = vmul.f32 %v4144, %v4160
        %v4181 = vmul.f32 %v4145, %v4160
        %v4182 = vmul.f32 %v4146, %v4160
        %v4183 = vmul.f32 %v4147, %v4160
        %v4184 = vmul.f32 %v4148, %v4160
        %v4185 = vmul.f32 %v4149, %v4160
        %v4186 = vmul.f32 %v4150, %v4160
        %v4187 = vmul.f32 %v4151, %v4160
        %v4188 = vmul.f32 %v4152, %v4160
        %v4189 = vmul.f32 %v4153, %v4160
        %v4190 = vmul.f32 %v4154, %v4160
        %v4191 = vmul.f32 %v4155, %v4160
        %v4192 = vmul.f32 %v4156, %v4160
        %v4193 = vadd.f32 %v4093, %v4161
        %v4194 = vadd.f32 %v4094, %v4162
        %v4195 = vadd.f32 %v4095, %v4163
        %v4196 = vadd.f32 %v4096, %v4164
        %v4197 = vadd.f32 %v4097, %v4165
        %v4198 = vadd.f32 %v4098, %v4166
        %v4199 = vadd.f32 %v4099, %v4167
        %v4200 = vadd.f32 %v4100, %v4168
        %v4201 = vadd.f32 %v4101, %v4169
        %v4202 = vadd.f32 %v4102, %v4170
        %v4203 = vadd.f32 %v4103, %v4171
        %v4204 = vadd.f32 %v4104, %v4172
        %v4205 = vadd.f32 %v4105, %v4173
        %v4206 = vadd.f32 %v4106, %v4174
        %v4207 = vadd.f32 %v4107, %v4175
        %v4208 = vadd.f32 %v4108, %v4176
        %v4209 = vadd.f32 %v4109, %v4177
        %v4210 = vadd.f32 %v4110, %v4178
        %v4211 = vadd.f32 %v4111, %v4179
        %v4212 = vadd.f32 %v4112, %v4180
        %v4213 = vadd.f32 %v4113, %v4181
        %v4214 = vadd.f32 %v4114, %v4182
        %v4215 = vadd.f32 %v4115, %v4183
        %v4216 = vadd.f32 %v4116, %v4184
        %v4217 = vadd.f32 %v4117, %v4185
        %v4218 = vadd.f32 %v4118, %v4186
        %v4219 = vadd.f32 %v4119, %v4187
        %v4220 = vadd.f32 %v4120, %v4188
        %v4221 = vadd.f32 %v4121, %v4189
        %v4222 = vadd.f32 %v4122, %v4190
        %v4223 = vadd.f32 %v4123, %v4191
        %v4224 = vadd.f32 %v4124, %v4192
        %v4225 = vld [vmem:[%s4024 + $0x2] sm:$0xff]
        %v4226 = vld [vmem:[%s4024 + $0xa] sm:$0xff]
        %v4227 = vld [vmem:[%s4024 + $0x1a] sm:$0xff]
        %v4228 = vld [vmem:[%s4024 + $0x22] sm:$0xff]
        %v4229 = vld [vmem:[%s4024 + $0x32] sm:$0xff]
        %v4230 = vld [vmem:[%s4024 + $0x3a] sm:$0xff]
        %v4231 = vld [vmem:[%s4024 + $0x4a] sm:$0xff]
        %v4232 = vld [vmem:[%s4024 + $0x52] sm:$0xff]
        %v4233 = vld [vmem:[%s4024 + $0x62] sm:$0xff]
        %v4234 = vld [vmem:[%s4024 + $0x6a] sm:$0xff]
        %v4235 = vld [vmem:[%s4024 + $0x7a] sm:$0xff]
        %v4236 = vld [vmem:[%s4024 + $0x82] sm:$0xff]
        %v4237 = vld [vmem:[%s4024 + $0x92] sm:$0xff]
        %v4238 = vld [vmem:[%s4024 + $0x9a] sm:$0xff]
        %v4239 = vld [vmem:[%s4024 + $0xaa] sm:$0xff]
        %v4240 = vld [vmem:[%s4024 + $0xb2] sm:$0xff]
        %v4241 = vld [vmem:[%s4024 + $0xc2] sm:$0xff]
        %v4242 = vld [vmem:[%s4024 + $0xca] sm:$0xff]
        %v4243 = vld [vmem:[%s4024 + $0xda] sm:$0xff]
        %v4244 = vld [vmem:[%s4024 + $0xe2] sm:$0xff]
        %v4245 = vld [vmem:[%s4024 + $0xf2] sm:$0xff]
        %v4246 = vld [vmem:[%s4024 + $0xfa] sm:$0xff]
        %v4247 = vld [vmem:[%s4024 + $0x10a] sm:$0xff]
        %v4248 = vld [vmem:[%s4024 + $0x112] sm:$0xff]
        %v4249 = vld [vmem:[%s4024 + $0x122] sm:$0xff]
        %v4250 = vld [vmem:[%s4024 + $0x12a] sm:$0xff]
        %v4251 = vld [vmem:[%s4024 + $0x13a] sm:$0xff]
        %v4252 = vld [vmem:[%s4024 + $0x142] sm:$0xff]
        %v4253 = vld [vmem:[%s4024 + $0x152] sm:$0xff]
        %v4254 = vld [vmem:[%s4024 + $0x15a] sm:$0xff]
        %v4255 = vld [vmem:[%s4024 + $0x16a] sm:$0xff]
        %v4256 = vld [vmem:[%s4024 + $0x172] sm:$0xff]
        %v4257 = vlaneseq
        %v4258 = vshrl.u32 %v4257, 7
        %v4259 = vsub.s32 0, %v4258
        %v4260 = vrot.slane %v3455, %v4259
        %v4261 = vmul.f32 %v4225, %v4260
        %v4262 = vmul.f32 %v4226, %v4260
        %v4263 = vmul.f32 %v4227, %v4260
        %v4264 = vmul.f32 %v4228, %v4260
        %v4265 = vmul.f32 %v4229, %v4260
        %v4266 = vmul.f32 %v4230, %v4260
        %v4267 = vmul.f32 %v4231, %v4260
        %v4268 = vmul.f32 %v4232, %v4260
        %v4269 = vmul.f32 %v4233, %v4260
        %v4270 = vmul.f32 %v4234, %v4260
        %v4271 = vmul.f32 %v4235, %v4260
        %v4272 = vmul.f32 %v4236, %v4260
        %v4273 = vmul.f32 %v4237, %v4260
        %v4274 = vmul.f32 %v4238, %v4260
        %v4275 = vmul.f32 %v4239, %v4260
        %v4276 = vmul.f32 %v4240, %v4260
        %v4277 = vmul.f32 %v4241, %v4260
        %v4278 = vmul.f32 %v4242, %v4260
        %v4279 = vmul.f32 %v4243, %v4260
        %v4280 = vmul.f32 %v4244, %v4260
        %v4281 = vmul.f32 %v4245, %v4260
        %v4282 = vmul.f32 %v4246, %v4260
        %v4283 = vmul.f32 %v4247, %v4260
        %v4284 = vmul.f32 %v4248, %v4260
        %v4285 = vmul.f32 %v4249, %v4260
        %v4286 = vmul.f32 %v4250, %v4260
        %v4287 = vmul.f32 %v4251, %v4260
        %v4288 = vmul.f32 %v4252, %v4260
        %v4289 = vmul.f32 %v4253, %v4260
        %v4290 = vmul.f32 %v4254, %v4260
        %v4291 = vmul.f32 %v4255, %v4260
        %v4292 = vmul.f32 %v4256, %v4260
        %v4293 = vadd.f32 %v4193, %v4261
        %v4294 = vadd.f32 %v4194, %v4262
        %v4295 = vadd.f32 %v4195, %v4263
        %v4296 = vadd.f32 %v4196, %v4264
        %v4297 = vadd.f32 %v4197, %v4265
        %v4298 = vadd.f32 %v4198, %v4266
        %v4299 = vadd.f32 %v4199, %v4267
        %v4300 = vadd.f32 %v4200, %v4268
        %v4301 = vadd.f32 %v4201, %v4269
        %v4302 = vadd.f32 %v4202, %v4270
        %v4303 = vadd.f32 %v4203, %v4271
        %v4304 = vadd.f32 %v4204, %v4272
        %v4305 = vadd.f32 %v4205, %v4273
        %v4306 = vadd.f32 %v4206, %v4274
        %v4307 = vadd.f32 %v4207, %v4275
        %v4308 = vadd.f32 %v4208, %v4276
        %v4309 = vadd.f32 %v4209, %v4277
        %v4310 = vadd.f32 %v4210, %v4278
        %v4311 = vadd.f32 %v4211, %v4279
        %v4312 = vadd.f32 %v4212, %v4280
        %v4313 = vadd.f32 %v4213, %v4281
        %v4314 = vadd.f32 %v4214, %v4282
        %v4315 = vadd.f32 %v4215, %v4283
        %v4316 = vadd.f32 %v4216, %v4284
        %v4317 = vadd.f32 %v4217, %v4285
        %v4318 = vadd.f32 %v4218, %v4286
        %v4319 = vadd.f32 %v4219, %v4287
        %v4320 = vadd.f32 %v4220, %v4288
        %v4321 = vadd.f32 %v4221, %v4289
        %v4322 = vadd.f32 %v4222, %v4290
        %v4323 = vadd.f32 %v4223, %v4291
        %v4324 = vadd.f32 %v4224, %v4292
        %v4325 = vld [vmem:[%s16] sm:$0xff]
        %v4326 = vld [vmem:[%s16 + $0x8] sm:$0xff]
        %v4327 = vld [vmem:[%s16 + $0x10] sm:$0xff]
        %v4328 = vld [vmem:[%s16 + $0x18] sm:$0xff]
        %v4329 = vld [vmem:[%s16 + $0x20] sm:$0xff]
        %v4330 = vld [vmem:[%s16 + $0x28] sm:$0xff]
        %v4331 = vld [vmem:[%s16 + $0x30] sm:$0xff]
        %v4332 = vld [vmem:[%s16 + $0x38] sm:$0xff]
        %v4333 = vld [vmem:[%s16 + $0x40] sm:$0xff]
        %v4334 = vld [vmem:[%s16 + $0x48] sm:$0xff]
        %v4335 = vld [vmem:[%s16 + $0x50] sm:$0xff]
        %v4336 = vld [vmem:[%s16 + $0x58] sm:$0xff]
        %v4337 = vld [vmem:[%s16 + $0x60] sm:$0xff]
        %v4338 = vld [vmem:[%s16 + $0x68] sm:$0xff]
        %v4339 = vld [vmem:[%s16 + $0x70] sm:$0xff]
        %v4340 = vld [vmem:[%s16 + $0x78] sm:$0xff]
        %4341 = vmatprep.subr.mxu0 0.0
        %4342 = vmatpush1.msra.mxu0 %v4293
        %4343 = vmatprep.subr.mxu0 0.0
        %4344 = vmatpush1.msra.mxu0 %v4294
        %4345 = vmatprep.subr.mxu0 0.0
        %4346 = vmatpush1.msra.mxu0 %v4295
        %4347 = vmatprep.subr.mxu0 0.0
        %4348 = vmatpush1.msra.mxu0 %v4296
        %4349 = vmatprep.subr.mxu0 0.0
        %4350 = vmatpush1.msra.mxu0 %v4297
        %4351 = vmatprep.subr.mxu0 0.0
        %4352 = vmatpush1.msra.mxu0 %v4298
        %4353 = vmatprep.subr.mxu0 0.0
        %4354 = vmatpush1.msra.mxu0 %v4299
        %4355 = vmatprep.subr.mxu0 0.0
        %4356 = vmatpush1.msra.mxu0 %v4300
        %4357 = vmatprep.subr.mxu0 0.0
        %4358 = vmatpush1.msra.mxu0 %v4301
        %4359 = vmatprep.subr.mxu0 0.0
        %4360 = vmatpush1.msra.mxu0 %v4302
        %4361 = vmatprep.subr.mxu0 0.0
        %4362 = vmatpush1.msra.mxu0 %v4303
        %4363 = vmatprep.subr.mxu0 0.0
        %4364 = vmatpush1.msra.mxu0 %v4304
        %4365 = vmatprep.subr.mxu0 0.0
        %4366 = vmatpush1.msra.mxu0 %v4305
        %4367 = vmatprep.subr.mxu0 0.0
        %4368 = vmatpush1.msra.mxu0 %v4306
        %4369 = vmatprep.subr.mxu0 0.0
        %4370 = vmatpush1.msra.mxu0 %v4307
        %4371 = vmatprep.subr.mxu0 0.0
        %4372 = vmatpush1.msra.mxu0 %v4308
        %4373 = vmatprep.subr.mxu0 0.0
        %4374 = vmatpush1.msra.mxu0 %v4309
        %4375 = vmatprep.subr.mxu0 0.0
        %4376 = vmatpush1.msra.mxu0 %v4310
        %4377 = vmatprep.subr.mxu0 0.0
        %4378 = vmatpush1.msra.mxu0 %v4311
        %4379 = vmatprep.subr.mxu0 0.0
        %4380 = vmatpush1.msra.mxu0 %v4312
        %4381 = vmatprep.subr.mxu0 0.0
        %4382 = vmatpush1.msra.mxu0 %v4313
        %4383 = vmatprep.subr.mxu0 0.0
        %4384 = vmatpush1.msra.mxu0 %v4314
        %4385 = vmatprep.subr.mxu0 0.0
        %4386 = vmatpush1.msra.mxu0 %v4315
        %4387 = vmatprep.subr.mxu0 0.0
        %4388 = vmatpush1.msra.mxu0 %v4316
        %4389 = vmatprep.subr.mxu0 0.0
        %4390 = vmatpush1.msra.mxu0 %v4317
        %4391 = vmatprep.subr.mxu0 0.0
        %4392 = vmatpush1.msra.mxu0 %v4318
        %4393 = vmatprep.subr.mxu0 0.0
        %4394 = vmatpush1.msra.mxu0 %v4319
        %4395 = vmatprep.subr.mxu0 0.0
        %4396 = vmatpush1.msra.mxu0 %v4320
        %4397 = vmatprep.subr.mxu0 0.0
        %4398 = vmatpush1.msra.mxu0 %v4321
        %4399 = vmatprep.subr.mxu0 0.0
        %4400 = vmatpush1.msra.mxu0 %v4322
        %4401 = vmatprep.subr.mxu0 0.0
        %4402 = vmatpush1.msra.mxu0 %v4323
        %4403 = vmatprep.subr.mxu0 0.0
        %4404 = vmatpush1.msra.mxu0 %v4324
        %4405 = vmatprep.mubr.f32.mxu0 %v4326
        %4406 = vmatmul.mubr.f32.gmra.mrb[0].mxu0 %v4325
        %v4407 = vpop.f32.mrb[0].mxu0
        %v4408 = vadd.f32 0.0, %v4407
        %v4409 = vpop.f32.mrb[0].mxu0
        %4410 = vmatprep.mubr.f32.mxu0 %v4328
        %4411 = vmatmul.mubr.f32.gmra.mrb[0].mxu0 %v4327
        %v4412 = vpop.f32.mrb[0].mxu0
        %v4413 = vadd.f32 0.0, %v4412
        %v4414 = vpop.f32.mrb[0].mxu0
        %4415 = vmatprep.mubr.f32.mxu0 %v4330
        %4416 = vmatmul.mubr.f32.gmra.mrb[0].mxu0 %v4329
        %v4417 = vpop.f32.mrb[0].mxu0
        %v4418 = vadd.f32 0.0, %v4417
        %v4419 = vpop.f32.mrb[0].mxu0
        %4420 = vmatprep.mubr.f32.mxu0 %v4332
        %4421 = vmatmul.mubr.f32.gmra.mrb[0].mxu0 %v4331
        %v4422 = vpop.f32.mrb[0].mxu0
        %v4423 = vadd.f32 0.0, %v4422
        %v4424 = vpop.f32.mrb[0].mxu0
        %4425 = vmatprep.mubr.f32.mxu0 %v4334
        %4426 = vmatmul.mubr.f32.gmra.mrb[0].mxu0 %v4333
        %v4427 = vpop.f32.mrb[0].mxu0
        %v4428 = vadd.f32 0.0, %v4427
        %v4429 = vpop.f32.mrb[0].mxu0
        %4430 = vmatprep.mubr.f32.mxu0 %v4336
        %4431 = vmatmul.mubr.f32.gmra.mrb[0].mxu0 %v4335
        %v4432 = vpop.f32.mrb[0].mxu0
        %v4433 = vadd.f32 0.0, %v4432
        %v4434 = vpop.f32.mrb[0].mxu0
        %4435 = vmatprep.mubr.f32.mxu0 %v4338
        %4436 = vmatmul.mubr.f32.gmra.mrb[0].mxu0 %v4337
        %v4437 = vpop.f32.mrb[0].mxu0
        %v4438 = vadd.f32 0.0, %v4437
        %v4439 = vpop.f32.mrb[0].mxu0
        %4440 = vmatprep.mubr.f32.mxu0 %v4340
        %4441 = vmatmul.mubr.f32.gmra.mrb[0].mxu0 %v4339
        %v4442 = vpop.f32.mrb[0].mxu0
        %v4443 = vadd.f32 0.0, %v4442
        %v4444 = vpop.f32.mrb[0].mxu0
        %4445 = vdwg.mxu0
        %v4446 = vld [vmem:[%s10] sm:$0xff]
        %v4448 = vsel %vm2007, %v4408, 0
        %v4451 = vsel %vm2007, %v4413, 0
        %v4454 = vsel %vm2007, %v4418, 0
        %v4457 = vsel %vm2007, %v4423, 0
        %v4460 = vsel %vm2007, %v4428, 0
        %v4463 = vsel %vm2007, %v4433, 0
        %v4466 = vsel %vm2007, %v4438, 0
        %v4469 = vsel %vm2007, %v4443, 0
        %4471 = vmatprep.subr.mxu0 0.0
        %4472 = vmatpush1.msra.mxu0 %v4446
        %4473 = vmatprep.subr.mxu0 0.0
        %4474 = vmatpush1.msra.mxu0 0.0
        %4475 = vmatprep.subr.mxu0 0.0
        %4476 = vmatpush1.msra.mxu0 0.0
        %4477 = vmatprep.subr.mxu0 0.0
        %4478 = vmatpush1.msra.mxu0 0.0
        %4479 = vmatprep.subr.mxu0 0.0
        %4480 = vmatpush1.msra.mxu0 0.0
        %4481 = vmatprep.subr.mxu0 0.0
        %4482 = vmatpush1.msra.mxu0 0.0
        %4483 = vmatprep.subr.mxu0 0.0
        %4484 = vmatpush1.msra.mxu0 0.0
        %4485 = vmatprep.subr.mxu0 0.0
        %4486 = vmatpush1.msra.mxu0 0.0
        %4487 = vmatprep.subr.mxu0 0.0
        %4488 = vmatpush1.msra.mxu0 0.0
        %4489 = vmatprep.subr.mxu0 0.0
        %4490 = vmatpush1.msra.mxu0 0.0
        %4491 = vmatprep.subr.mxu0 0.0
        %4492 = vmatpush1.msra.mxu0 0.0
        %4493 = vmatprep.subr.mxu0 0.0
        %4494 = vmatpush1.msra.mxu0 0.0
        %4495 = vmatprep.subr.mxu0 0.0
        %4496 = vmatpush1.msra.mxu0 0.0
        %4497 = vmatprep.subr.mxu0 0.0
        %4498 = vmatpush1.msra.mxu0 0.0
        %4499 = vmatprep.subr.mxu0 0.0
        %4500 = vmatpush1.msra.mxu0 0.0
        %4501 = vmatprep.subr.mxu0 0.0
        %4502 = vmatpush1.msra.mxu0 0.0
        %4503 = vmatprep.subr.mxu0 0.0
        %4504 = vmatpush1.msra.mxu0 0.0
        %4505 = vmatprep.subr.mxu0 0.0
        %4506 = vmatpush1.msra.mxu0 0.0
        %4507 = vmatprep.subr.mxu0 0.0
        %4508 = vmatpush1.msra.mxu0 0.0
        %4509 = vmatprep.subr.mxu0 0.0
        %4510 = vmatpush1.msra.mxu0 0.0
        %4511 = vmatprep.subr.mxu0 0.0
        %4512 = vmatpush1.msra.mxu0 0.0
        %4513 = vmatprep.subr.mxu0 0.0
        %4514 = vmatpush1.msra.mxu0 0.0
        %4515 = vmatprep.subr.mxu0 0.0
        %4516 = vmatpush1.msra.mxu0 0.0
        %4517 = vmatprep.subr.mxu0 0.0
        %4518 = vmatpush1.msra.mxu0 0.0
        %4519 = vmatprep.subr.mxu0 0.0
        %4520 = vmatpush1.msra.mxu0 0.0
        %4521 = vmatprep.subr.mxu0 0.0
        %4522 = vmatpush1.msra.mxu0 0.0
        %4523 = vmatprep.subr.mxu0 0.0
        %4524 = vmatpush1.msra.mxu0 0.0
        %4525 = vmatprep.subr.mxu0 0.0
        %4526 = vmatpush1.msra.mxu0 0.0
        %4527 = vmatprep.subr.mxu0 0.0
        %4528 = vmatpush1.msra.mxu0 0.0
        %4529 = vmatprep.subr.mxu0 0.0
        %4530 = vmatpush1.msra.mxu0 0.0
        %4531 = vmatprep.subr.mxu0 0.0
        %4532 = vmatpush1.msra.mxu0 0.0
        %4533 = vmatprep.subr.mxu0 0.0
        %4534 = vmatpush1.msra.mxu0 0.0
        %4535 = vmatprep.mubr.f32.mxu0 0.0
        %4536 = vmatmul.mubr.f32.gmra.mrb[0].mxu0 %v4448
        %v4537 = vpop.f32.mrb[0].mxu0
        %v4538 = vadd.f32 0.0, %v4537
        %v4539 = vpop.f32.mrb[0].mxu0
        %4540 = vmatprep.mubr.f32.mxu0 0.0
        %4541 = vmatmul.mubr.f32.gmra.mrb[0].mxu0 %v4451
        %v4542 = vpop.f32.mrb[0].mxu0
        %v4543 = vadd.f32 0.0, %v4542
        %v4544 = vpop.f32.mrb[0].mxu0
        %4545 = vmatprep.mubr.f32.mxu0 0.0
        %4546 = vmatmul.mubr.f32.gmra.mrb[0].mxu0 %v4454
        %v4547 = vpop.f32.mrb[0].mxu0
        %v4548 = vadd.f32 0.0, %v4547
        %v4549 = vpop.f32.mrb[0].mxu0
        %4550 = vmatprep.mubr.f32.mxu0 0.0
        %4551 = vmatmul.mubr.f32.gmra.mrb[0].mxu0 %v4457
        %v4552 = vpop.f32.mrb[0].mxu0
        %v4553 = vadd.f32 0.0, %v4552
        %v4554 = vpop.f32.mrb[0].mxu0
        %4555 = vmatprep.mubr.f32.mxu0 0.0
        %4556 = vmatmul.mubr.f32.gmra.mrb[0].mxu0 %v4460
        %v4557 = vpop.f32.mrb[0].mxu0
        %v4558 = vadd.f32 0.0, %v4557
        %v4559 = vpop.f32.mrb[0].mxu0
        %4560 = vmatprep.mubr.f32.mxu0 0.0
        %4561 = vmatmul.mubr.f32.gmra.mrb[0].mxu0 %v4463
        %v4562 = vpop.f32.mrb[0].mxu0
        %v4563 = vadd.f32 0.0, %v4562
        %v4564 = vpop.f32.mrb[0].mxu0
        %4565 = vmatprep.mubr.f32.mxu0 0.0
        %4566 = vmatmul.mubr.f32.gmra.mrb[0].mxu0 %v4466
        %v4567 = vpop.f32.mrb[0].mxu0
        %v4568 = vadd.f32 0.0, %v4567
        %v4569 = vpop.f32.mrb[0].mxu0
        %4570 = vmatprep.mubr.f32.mxu0 0.0
        %4571 = vmatmul.mubr.f32.gmra.mrb[0].mxu0 %v4469
        %v4572 = vpop.f32.mrb[0].mxu0
        %v4573 = vadd.f32 0.0, %v4572
        %v4574 = vpop.f32.mrb[0].mxu0
        %4575 = vdwg.mxu0
        %4576 = vmatprep.subr.mxu0 0.0
        %4577 = vmatpush1.msra.mxu0 %v547
        %4578 = vmatprep.subr.mxu0 0.0
        %4579 = vmatpush1.msra.mxu0 %v548
        %4580 = vmatprep.subr.mxu0 0.0
        %4581 = vmatpush1.msra.mxu0 %v549
        %4582 = vmatprep.subr.mxu0 0.0
        %4583 = vmatpush1.msra.mxu0 %v550
        %4584 = vmatprep.subr.mxu0 0.0
        %4585 = vmatpush1.msra.mxu0 %v551
        %4586 = vmatprep.subr.mxu0 0.0
        %4587 = vmatpush1.msra.mxu0 %v552
        %4588 = vmatprep.subr.mxu0 0.0
        %4589 = vmatpush1.msra.mxu0 %v553
        %4590 = vmatprep.subr.mxu0 0.0
        %4591 = vmatpush1.msra.mxu0 %v554
        %4592 = vmatprep.subr.mxu0 0.0
        %4593 = vmatpush1.msra.mxu0 %v555
        %4594 = vmatprep.subr.mxu0 0.0
        %4595 = vmatpush1.msra.mxu0 %v556
        %4596 = vmatprep.subr.mxu0 0.0
        %4597 = vmatpush1.msra.mxu0 %v557
        %4598 = vmatprep.subr.mxu0 0.0
        %4599 = vmatpush1.msra.mxu0 %v558
        %4600 = vmatprep.subr.mxu0 0.0
        %4601 = vmatpush1.msra.mxu0 %v559
        %4602 = vmatprep.subr.mxu0 0.0
        %4603 = vmatpush1.msra.mxu0 %v560
        %4604 = vmatprep.subr.mxu0 0.0
        %4605 = vmatpush1.msra.mxu0 %v561
        %4606 = vmatprep.subr.mxu0 0.0
        %4607 = vmatpush1.msra.mxu0 %v562
        %4608 = vmatprep.subr.mxu0 0.0
        %4609 = vmatpush1.msra.mxu0 %v563
        %4610 = vmatprep.subr.mxu0 0.0
        %4611 = vmatpush1.msra.mxu0 %v564
        %4612 = vmatprep.subr.mxu0 0.0
        %4613 = vmatpush1.msra.mxu0 %v565
        %4614 = vmatprep.subr.mxu0 0.0
        %4615 = vmatpush1.msra.mxu0 %v566
        %4616 = vmatprep.subr.mxu0 0.0
        %4617 = vmatpush1.msra.mxu0 %v567
        %4618 = vmatprep.subr.mxu0 0.0
        %4619 = vmatpush1.msra.mxu0 %v568
        %4620 = vmatprep.subr.mxu0 0.0
        %4621 = vmatpush1.msra.mxu0 %v569
        %4622 = vmatprep.subr.mxu0 0.0
        %4623 = vmatpush1.msra.mxu0 %v570
        %4624 = vmatprep.subr.mxu0 0.0
        %4625 = vmatpush1.msra.mxu0 %v571
        %4626 = vmatprep.subr.mxu0 0.0
        %4627 = vmatpush1.msra.mxu0 %v572
        %4628 = vmatprep.subr.mxu0 0.0
        %4629 = vmatpush1.msra.mxu0 %v573
        %4630 = vmatprep.subr.mxu0 0.0
        %4631 = vmatpush1.msra.mxu0 %v574
        %4632 = vmatprep.subr.mxu0 0.0
        %4633 = vmatpush1.msra.mxu0 %v575
        %4634 = vmatprep.subr.mxu0 0.0
        %4635 = vmatpush1.msra.mxu0 %v576
        %4636 = vmatprep.subr.mxu0 0.0
        %4637 = vmatpush1.msra.mxu0 %v577
        %4638 = vmatprep.subr.mxu0 0.0
        %4639 = vmatpush1.msra.mxu0 %v578
        %4640 = vmatprep.mubr.f32.mxu0 %v4326
        %4641 = vmatmul.mubr.f32.gmra.mrb[0].mxu0 %v4325
        %v4642 = vpop.f32.mrb[0].mxu0
        %v4643 = vadd.f32 0.0, %v4642
        %v4644 = vpop.f32.mrb[0].mxu0
        %4645 = vmatprep.mubr.f32.mxu0 %v4328
        %4646 = vmatmul.mubr.f32.gmra.mrb[0].mxu0 %v4327
        %v4647 = vpop.f32.mrb[0].mxu0
        %v4648 = vadd.f32 0.0, %v4647
        %v4649 = vpop.f32.mrb[0].mxu0
        %4650 = vmatprep.mubr.f32.mxu0 %v4330
        %4651 = vmatmul.mubr.f32.gmra.mrb[0].mxu0 %v4329
        %v4652 = vpop.f32.mrb[0].mxu0
        %v4653 = vadd.f32 0.0, %v4652
        %v4654 = vpop.f32.mrb[0].mxu0
        %4655 = vmatprep.mubr.f32.mxu0 %v4332
        %4656 = vmatmul.mubr.f32.gmra.mrb[0].mxu0 %v4331
        %v4657 = vpop.f32.mrb[0].mxu0
        %v4658 = vadd.f32 0.0, %v4657
        %v4659 = vpop.f32.mrb[0].mxu0
        %4660 = vmatprep.mubr.f32.mxu0 %v4334
        %4661 = vmatmul.mubr.f32.gmra.mrb[0].mxu0 %v4333
        %v4662 = vpop.f32.mrb[0].mxu0
        %v4663 = vadd.f32 0.0, %v4662
        %v4664 = vpop.f32.mrb[0].mxu0
        %4665 = vmatprep.mubr.f32.mxu0 %v4336
        %4666 = vmatmul.mubr.f32.gmra.mrb[0].mxu0 %v4335
        %v4667 = vpop.f32.mrb[0].mxu0
        %v4668 = vadd.f32 0.0, %v4667
        %v4669 = vpop.f32.mrb[0].mxu0
        %4670 = vmatprep.mubr.f32.mxu0 %v4338
        %4671 = vmatmul.mubr.f32.gmra.mrb[0].mxu0 %v4337
        %v4672 = vpop.f32.mrb[0].mxu0
        %v4673 = vadd.f32 0.0, %v4672
        %v4674 = vpop.f32.mrb[0].mxu0
        %4675 = vmatprep.mubr.f32.mxu0 %v4340
        %4676 = vmatmul.mubr.f32.gmra.mrb[0].mxu0 %v4339
        %v4677 = vpop.f32.mrb[0].mxu0
        %v4678 = vadd.f32 0.0, %v4677
        %v4679 = vpop.f32.mrb[0].mxu0
        %4680 = vdwg.mxu0
        %v4681 = vld [vmem:[%s13] sm:$0xf]
        %v4683 = vsel %vm611, %v4643, 0
        %v4686 = vsel %vm611, %v4648, 0
        %v4689 = vsel %vm611, %v4653, 0
        %v4692 = vsel %vm611, %v4658, 0
        %v4695 = vsel %vm611, %v4663, 0
        %v4698 = vsel %vm611, %v4668, 0
        %v4701 = vsel %vm611, %v4673, 0
        %v4704 = vsel %vm611, %v4678, 0
        %v4707 = vsel %vm1668, %v4681, 0
        %4709 = vmatprep.subr.mxu0 0.0
        %4710 = vmatpush1.msra.mxu0 %v4707
        %4711 = vmatprep.subr.mxu0 0.0
        %4712 = vmatpush1.msra.mxu0 0.0
        %4713 = vmatprep.subr.mxu0 0.0
        %4714 = vmatpush1.msra.mxu0 0.0
        %4715 = vmatprep.subr.mxu0 0.0
        %4716 = vmatpush1.msra.mxu0 0.0
        %4717 = vmatprep.subr.mxu0 0.0
        %4718 = vmatpush1.msra.mxu0 0.0
        %4719 = vmatprep.subr.mxu0 0.0
        %4720 = vmatpush1.msra.mxu0 0.0
        %4721 = vmatprep.subr.mxu0 0.0
        %4722 = vmatpush1.msra.mxu0 0.0
        %4723 = vmatprep.subr.mxu0 0.0
        %4724 = vmatpush1.msra.mxu0 0.0
        %4725 = vmatprep.subr.mxu0 0.0
        %4726 = vmatpush1.msra.mxu0 0.0
        %4727 = vmatprep.subr.mxu0 0.0
        %4728 = vmatpush1.msra.mxu0 0.0
        %4729 = vmatprep.subr.mxu0 0.0
        %4730 = vmatpush1.msra.mxu0 0.0
        %4731 = vmatprep.subr.mxu0 0.0
        %4732 = vmatpush1.msra.mxu0 0.0
        %4733 = vmatprep.subr.mxu0 0.0
        %4734 = vmatpush1.msra.mxu0 0.0
        %4735 = vmatprep.subr.mxu0 0.0
        %4736 = vmatpush1.msra.mxu0 0.0
        %4737 = vmatprep.subr.mxu0 0.0
        %4738 = vmatpush1.msra.mxu0 0.0
        %4739 = vmatprep.subr.mxu0 0.0
        %4740 = vmatpush1.msra.mxu0 0.0
        %4741 = vmatprep.subr.mxu0 0.0
        %4742 = vmatpush1.msra.mxu0 0.0
        %4743 = vmatprep.subr.mxu0 0.0
        %4744 = vmatpush1.msra.mxu0 0.0
        %4745 = vmatprep.subr.mxu0 0.0
        %4746 = vmatpush1.msra.mxu0 0.0
        %4747 = vmatprep.subr.mxu0 0.0
        %4748 = vmatpush1.msra.mxu0 0.0
        %4749 = vmatprep.subr.mxu0 0.0
        %4750 = vmatpush1.msra.mxu0 0.0
        %4751 = vmatprep.subr.mxu0 0.0
        %4752 = vmatpush1.msra.mxu0 0.0
        %4753 = vmatprep.subr.mxu0 0.0
        %4754 = vmatpush1.msra.mxu0 0.0
        %4755 = vmatprep.subr.mxu0 0.0
        %4756 = vmatpush1.msra.mxu0 0.0
        %4757 = vmatprep.subr.mxu0 0.0
        %4758 = vmatpush1.msra.mxu0 0.0
        %4759 = vmatprep.subr.mxu0 0.0
        %4760 = vmatpush1.msra.mxu0 0.0
        %4761 = vmatprep.subr.mxu0 0.0
        %4762 = vmatpush1.msra.mxu0 0.0
        %4763 = vmatprep.subr.mxu0 0.0
        %4764 = vmatpush1.msra.mxu0 0.0
        %4765 = vmatprep.subr.mxu0 0.0
        %4766 = vmatpush1.msra.mxu0 0.0
        %4767 = vmatprep.subr.mxu0 0.0
        %4768 = vmatpush1.msra.mxu0 0.0
        %4769 = vmatprep.subr.mxu0 0.0
        %4770 = vmatpush1.msra.mxu0 0.0
        %4771 = vmatprep.subr.mxu0 0.0
        %4772 = vmatpush1.msra.mxu0 0.0
        %4773 = vmatprep.mubr.f32.mxu0 0.0
        %4774 = vmatmul.mubr.f32.gmra.mrb[0].mxu0 %v4683
        %v4775 = vpop.f32.mrb[0].mxu0
        %v4776 = vadd.f32 0.0, %v4775
        %v4777 = vpop.f32.mrb[0].mxu0
        %4778 = vmatprep.mubr.f32.mxu0 0.0
        %4779 = vmatmul.mubr.f32.gmra.mrb[0].mxu0 %v4686
        %v4780 = vpop.f32.mrb[0].mxu0
        %v4781 = vadd.f32 0.0, %v4780
        %v4782 = vpop.f32.mrb[0].mxu0
        %4783 = vmatprep.mubr.f32.mxu0 0.0
        %4784 = vmatmul.mubr.f32.gmra.mrb[0].mxu0 %v4689
        %v4785 = vpop.f32.mrb[0].mxu0
        %v4786 = vadd.f32 0.0, %v4785
        %v4787 = vpop.f32.mrb[0].mxu0
        %4788 = vmatprep.mubr.f32.mxu0 0.0
        %4789 = vmatmul.mubr.f32.gmra.mrb[0].mxu0 %v4692
        %v4790 = vpop.f32.mrb[0].mxu0
        %v4791 = vadd.f32 0.0, %v4790
        %v4792 = vpop.f32.mrb[0].mxu0
        %4793 = vmatprep.mubr.f32.mxu0 0.0
        %4794 = vmatmul.mubr.f32.gmra.mrb[0].mxu0 %v4695
        %v4795 = vpop.f32.mrb[0].mxu0
        %v4796 = vadd.f32 0.0, %v4795
        %v4797 = vpop.f32.mrb[0].mxu0
        %4798 = vmatprep.mubr.f32.mxu0 0.0
        %4799 = vmatmul.mubr.f32.gmra.mrb[0].mxu0 %v4698
        %v4800 = vpop.f32.mrb[0].mxu0
        %v4801 = vadd.f32 0.0, %v4800
        %v4802 = vpop.f32.mrb[0].mxu0
        %4803 = vmatprep.mubr.f32.mxu0 0.0
        %4804 = vmatmul.mubr.f32.gmra.mrb[0].mxu0 %v4701
        %v4805 = vpop.f32.mrb[0].mxu0
        %v4806 = vadd.f32 0.0, %v4805
        %v4807 = vpop.f32.mrb[0].mxu0
        %4808 = vmatprep.mubr.f32.mxu0 0.0
        %4809 = vmatmul.mubr.f32.gmra.mrb[0].mxu0 %v4704
        %v4810 = vpop.f32.mrb[0].mxu0
        %v4811 = vadd.f32 0.0, %v4810
        %v4812 = vpop.f32.mrb[0].mxu0
        %4813 = vdwg.mxu0
        %v4814 = vld [vmem:[%s14] sm:$0x1]
        %v4816 = vlaneseq
        %v4817 = vshrl.u32 %v4816, 7
        %v4818 = vsub.s32 0, %v4817
        %v4819 = vrot.slane %v4814, %v4818
        %v4821 = vmul.f32 %v4776, %v4819
        %v4822 = vmul.f32 %v4781, %v4819
        %v4823 = vmul.f32 %v4786, %v4819
        %v4824 = vmul.f32 %v4791, %v4819
        %v4825 = vmul.f32 %v4796, %v4819
        %v4826 = vmul.f32 %v4801, %v4819
        %v4827 = vmul.f32 %v4806, %v4819
        %v4828 = vmul.f32 %v4811, %v4819
        %v4829 = vld [vmem:[%s15] sm:$0x1]
        %v4831 = vlaneseq
        %v4832 = vshrl.u32 %v4831, 7
        %v4833 = vsub.s32 0, %v4832
        %v4834 = vrot.slane %v4829, %v4833
        %v4836 = vadd.f32 %v4821, %v4834
        %v4837 = vadd.f32 %v4822, %v4834
        %v4838 = vadd.f32 %v4823, %v4834
        %v4839 = vadd.f32 %v4824, %v4834
        %v4840 = vadd.f32 %v4825, %v4834
        %v4841 = vadd.f32 %v4826, %v4834
        %v4842 = vadd.f32 %v4827, %v4834
        %v4843 = vadd.f32 %v4828, %v4834
        %v4844 = vadd.f32 %v4538, %v4836
        %v4845 = vadd.f32 %v4543, %v4837
        %v4846 = vadd.f32 %v4548, %v4838
        %v4847 = vadd.f32 %v4553, %v4839
        %v4848 = vadd.f32 %v4558, %v4840
        %v4849 = vadd.f32 %v4563, %v4841
        %v4850 = vadd.f32 %v4568, %v4842
        %v4851 = vadd.f32 %v4573, %v4843
        %4852 = vst.msk [vmem:[%s541] sm:$0xff] %vm2007, %v4844
        %4853 = vst.msk [vmem:[%s541 + $0x8] sm:$0xff] %vm2007, %v4845
        %4854 = vst.msk [vmem:[%s541 + $0x10] sm:$0xff] %vm2007, %v4846
        %4855 = vst.msk [vmem:[%s541 + $0x18] sm:$0xff] %vm2007, %v4847
        %4856 = vst.msk [vmem:[%s541 + $0x20] sm:$0xff] %vm2007, %v4848
        %4857 = vst.msk [vmem:[%s541 + $0x28] sm:$0xff] %vm2007, %v4849
        %4858 = vst.msk [vmem:[%s541 + $0x30] sm:$0xff] %vm2007, %v4850
        %4859 = vst.msk [vmem:[%s541 + $0x38] sm:$0xff] %vm2007, %v4851
        %s4860 = sand.u32 %s401, 1
        %s4861 = scalar_lea.sflag [#allocation6], %s4860
        %s4862 = sand.u32 %s401, 1
        %s4863 = smul.addr %s4862, 64
        %s4864 = scalar_lea.vmem [#allocation5], %s4863
        // Predicated region
        $region89: #{tpu_custom_call.1} parent=87 // pred_check
          %p4865 = pneg %p411
        $region90: #{tpu_custom_call.1} parent=87 // pred_check_branch
          %4867 = sbr.rel (%p4865) target = $region92
        $region91: #{tpu_custom_call.1} parent=87 // pred_region
          %s4869 = ssub.s32 1024, 1024
          %4870 = vsyncadd %s4861, %s4869
          %s4871 = smul.addr %s31, 8
          %s4872 = smul.addr %s4871, 128
          %s4873 = scalar_lea.hbm %s17, %s4872
          %s4874 = sshll.u32 %s4864, 4
          %s4875 = int_to_ptr.vmem [resolvable:$true] %s4874
          %4880 = dma.vmem_to_hbm [thread:$0]  %s4875, 1024, %s4873, %s4861, 128, 128, 8
        $region92: #{tpu_custom_call.1} parent=87 // pred_fallthru
          _
      $region88: #{tpu_custom_call.1} parent=5 // pred_fallthru
        _
      %p4881 = scmp.le.s32.totalorder 2, %s26
      // Predicated region
      $region93: #{tpu_custom_call.1} parent=5 // pred_check
        %p4882 = pneg %p4881
      $region94: #{tpu_custom_call.1} parent=5 // pred_check_branch
        %4884 = sbr.rel (%p4882) target = $region96
      $region95: #{tpu_custom_call.1} parent=5 // pred_region
        %s4885 = ssub.s32 %s26, 2
        // Predicated region
        $region97: #{tpu_custom_call.1} parent=95 // pred_check
          %p4886 = pneg %p417
        $region98: #{tpu_custom_call.1} parent=95 // pred_check_branch
          %4888 = sbr.rel (%p4886) target = $region100
        $region99: #{tpu_custom_call.1} parent=95 // pred_region
          %s4889 = sand.u32 %s402, 1
          %s4890 = scalar_lea.sflag [#allocation6], %s4889
          %s4891 = sand.u32 %s402, 1
          %s4892 = smul.addr %s4891, 64
          %s4893 = scalar_lea.vmem [#allocation5], %s4892
          %4894 = dma.done %s4890, 1024
        $region100: #{tpu_custom_call.1} parent=95 // pred_fallthru
          _
      $region96: #{tpu_custom_call.1} parent=5 // pred_fallthru
        _
    $region6: #{tpu_custom_call.1} parent=1 // loop_footer
      %s30 = sadd.s32 1, %s26
    $region7: #{tpu_custom_call.1} parent=1 // loop_footer_branch
      %25 = sbr.rel target = $region3
    $region8: #{tpu_custom_call.1} parent=1 // loop_exit
      _
    %4895 = vsyncpa [#allocation6], 1
    %s4896 = scalar_lea.sflag [#allocation6], 1
    %4897 = vsyncpa %s4896, 1

</llo_original>
